<compile_context>
chip_gen: v7x
topology: tpu7x:2x2x1
jax: 0.10.0
libtpu: 0.0.40
codegen_flags: <defaults>
</compile_context>

<pallas_src>
import functools
import math

import jax
import jax.numpy as jnp
from jax import lax
from jax.experimental import pallas as pl
from jax.experimental.pallas import tpu as pltpu

HIDDEN = 64   # fixed by the module (nn.LSTM hidden_size=64)
GP = 128      # padded per-gate lane width (vreg boundary)
HP = 128      # padded hidden width (matches GP so h/c tiles are lane-aligned)


def _lstm_kernel(x_ref, wih_ref, whh_ref, b_ref, wout_ref, bout_ref,
                 o_ref, pg_sc, hall_sc, *, T, BP, mm_dtype, unroll):
    # ---- Phase 1: batched input projection for all timesteps (no serial dep) ----
    pg_sc[...] = (
        jnp.dot(x_ref[...], wih_ref[...], preferred_element_type=jnp.float32)
        + b_ref[...]).astype(pg_sc.dtype)

    # ---- Phase 2: time recurrence ----
    # h_t / c_t live in the fori_loop carry (vregs), NOT in VMEM scratch:
    # only the (BP,HP)@(HP,4*GP) matmul + gate math sit on the serial chain.
    def step(t, carry):
        h_prev, c_prev = carry
        row = pl.multiple_of(t * BP, BP)
        pre = pg_sc[pl.ds(row, BP), :].astype(jnp.float32)       # (BP, 4*GP)

        gates = pre + jnp.dot(h_prev.astype(mm_dtype), whh_ref[...],
                              preferred_element_type=jnp.float32)

        # 128-lane (vreg-aligned) gate slices; PyTorch gate order [i, f, g, o].
        i_g = jax.nn.sigmoid(gates[:, 0 * GP:1 * GP])
        f_g = jax.nn.sigmoid(gates[:, 1 * GP:2 * GP])
        g_g = jnp.tanh(gates[:, 2 * GP:3 * GP])
        o_g = jax.nn.sigmoid(gates[:, 3 * GP:4 * GP])

        # Padded lanes stay exactly 0: gates[pad]=0 -> c[pad]=0.5*0+0.5*0=0,
        # h[pad]=0.5*tanh(0)=0, and padded W_hh / W_out rows are 0.
        c_new = f_g * c_prev + i_g * g_g
        h_new = o_g * jnp.tanh(c_new)

        hall_sc[pl.ds(row, BP), :] = h_new.astype(hall_sc.dtype)
        return (h_new, c_new)

    h0 = jnp.zeros((BP, HP), jnp.float32)
    c0 = jnp.zeros((BP, HP), jnp.float32)
    lax.fori_loop(0, T, step, (h0, c0), unroll=unroll)

    # ---- Phase 3: batched, lane-dense (128-wide) output projection ----
    o_ref[...] = (
        jnp.dot(hall_sc[...], wout_ref[...], preferred_element_type=jnp.float32)
        + bout_ref[...]).astype(o_ref.dtype)


def _nbytes(shape, dtype):
    return math.prod(shape) * jnp.dtype(dtype).itemsize


def lstm_forward(x, w_ih, w_hh, b_ih, b_hh, w_out, b_out, *, use_bf16=False):
    """x: (T, B, D) float32.
    w_ih: (4H, D), w_hh: (4H, H), b_ih/b_hh: (4H,)  -- PyTorch layout.
    w_out: (O, H), b_out: (O,).
    use_bf16: feed bf16 to the MXU and store scratch in bf16 (f32 accumulation
    and f32 gate/state math)."""
    T, B, D = x.shape
    O = w_out.shape[0]
    H = HIDDEN
    BP = max(8, ((B + 7) // 8) * 8)          # pad batch to f32 sublane multiple
    OP = ((O + 127) // 128) * 128            # lane-dense output columns
    mm_dtype = jnp.bfloat16 if use_bf16 else jnp.float32

    # --- weight prep: transpose + pad each 64-wide gate block to 128 lanes ---
    def pad_gate_cols(w_t):                  # (K, 4H) -> (K, 4*GP)
        K = w_t.shape[0]
        return jnp.pad(w_t.reshape(K, 4, H),
                       ((0, 0), (0, 0), (0, GP - H))).reshape(K, 4 * GP)

    wih_p = pad_gate_cols(jnp.asarray(w_ih.T, jnp.float32)).astype(mm_dtype)   # (D, 512)
    whh_p = jnp.pad(pad_gate_cols(jnp.asarray(w_hh.T, jnp.float32)),
                    ((0, HP - H), (0, 0))).astype(mm_dtype)                    # (128, 512)
    bias_p = jnp.pad(jnp.asarray(b_ih + b_hh, jnp.float32).reshape(4, H),
                     ((0, 0), (0, GP - H))).reshape(1, 4 * GP)                 # (1, 512)
    wout_p = jnp.pad(jnp.asarray(w_out.T, jnp.float32),
                     ((0, HP - H), (0, OP - O))).astype(mm_dtype)              # (128, OP)
    bout_p = jnp.pad(jnp.asarray(b_out, jnp.float32), (0, OP - O)).reshape(1, OP)

    # --- input: pad batch, flatten (time, batch) so x@W_ih is ONE matmul ---
    x_p = jnp.pad(jnp.asarray(x, jnp.float32), ((0, 0), (0, BP - B), (0, 0)))
    x_p = x_p.reshape(T * BP, D).astype(mm_dtype)

    # --- VMEM budget: residents + scratch, asserted against physical VMEM ---
    needed = (
        _nbytes((T * BP, D), mm_dtype)          # x
        + _nbytes((D, 4 * GP), mm_dtype)        # w_ih
        + _nbytes((HP, 4 * GP), mm_dtype)       # w_hh
        + _nbytes((8, 4 * GP), jnp.float32)     # bias (sublane-padded)
        + _nbytes((HP, OP), mm_dtype)           # w_out
        + _nbytes((8, OP), jnp.float32)         # b_out (sublane-padded)
        + _nbytes((T * BP, OP), jnp.float32)    # output
        + _nbytes((T * BP, 4 * GP), mm_dtype)   # pg scratch
        + _nbytes((T * BP, HP), mm_dtype)       # h-history scratch
    )
    try:
        vmem_cap = int(pltpu.get_tpu_info().vmem_capacity_bytes)
    except Exception:
        vmem_cap = 64 << 20   # conservative (v7x per-TC VMEM)
    headroom = 8 << 20
    assert needed + headroom <= vmem_cap, (
        f"VMEM budget exceeded ({needed/2**20:.1f} MiB + headroom > "
        f"{vmem_cap/2**20:.0f} MiB); chunk the recurrence over time")
    vmem_limit = int(min(vmem_cap, max(32 << 20, needed + headroom)))

    kernel = functools.partial(_lstm_kernel, T=T, BP=BP, mm_dtype=mm_dtype,
                               unroll=min(T, 8))
    vmem_spec = pl.BlockSpec(memory_space=pltpu.MemorySpace.VMEM)

    out = pl.pallas_call(
        kernel,
        out_shape=jax.ShapeDtypeStruct((T * BP, OP), jnp.float32),
        in_specs=[vmem_spec] * 6,
        out_specs=vmem_spec,
        scratch_shapes=[
            pltpu.VMEM((T * BP, 4 * GP), mm_dtype),   # pre-gates, all timesteps
            pltpu.VMEM((T * BP, HP), mm_dtype),       # h history, all timesteps
        ],
        compiler_params=pltpu.CompilerParams(vmem_limit_bytes=vmem_limit),
    )(x_p, wih_p, whh_p, bias_p, wout_p, bout_p)

    return out.reshape(T, BP, OP)[:, :B, :O]


def lstm_reference(x, w_ih, w_hh, b_ih, b_hh, w_out, b_out):
    """Pure-JAX reference matching PyTorch nn.LSTM + nn.Linear semantics."""
    T, B, D = x.shape
    H = HIDDEN

    def step(carry, x_t):
        h, c = carry
        gates = x_t @ w_ih.T + b_ih + h @ w_hh.T + b_hh
        i = jax.nn.sigmoid(gates[:, 0 * H:1 * H])
        f = jax.nn.sigmoid(gates[:, 1 * H:2 * H])
        g = jnp.tanh(gates[:, 2 * H:3 * H])
        o = jax.nn.sigmoid(gates[:, 3 * H:4 * H])
        c_new = f * c + i * g
        h_new = o * jnp.tanh(c_new)
        return (h_new, c_new), h_new

    h0 = jnp.zeros((B, H), jnp.float32)
    c0 = jnp.zeros((B, H), jnp.float32)
    _, hs = jax.lax.scan(step, (h0, c0), x)
    return hs @ w_out.T + b_out


if __name__ == "__main__":
    T, B, D, O = 8, 4, 16, 8   # seq, batch, inputDim, outputDim
    H = HIDDEN

    key = jax.random.PRNGKey(0)
    keys = jax.random.split(key, 7)
    scale = 1.0 / jnp.sqrt(H)   # PyTorch LSTM/Linear default init scale

    x = jax.random.normal(keys[0], (T, B, D), jnp.float32)
    w_ih = jax.random.uniform(keys[1], (4 * H, D), jnp.float32, -scale, scale)
    w_hh = jax.random.uniform(keys[2], (4 * H, H), jnp.float32, -scale, scale)
    b_ih = jax.random.uniform(keys[3], (4 * H,), jnp.float32, -scale, scale)
    b_hh = jax.random.uniform(keys[4], (4 * H,), jnp.float32, -scale, scale)
    w_out = jax.random.uniform(keys[5], (O, H), jnp.float32, -scale, scale)
    b_out = jax.random.uniform(keys[6], (O,), jnp.float32, -scale, scale)

    ref = lstm_reference(x, w_ih, w_hh, b_ih, b_hh, w_out, b_out)

    # f32 matmul path (exact match to reference)
    out = lstm_forward(x, w_ih, w_hh, b_ih, b_hh, w_out, b_out)
    out = jax.block_until_ready(out)
    assert out.shape == (T, B, O)
    assert jnp.allclose(out, ref, atol=1e-5, rtol=1e-5), \
        f"f32 max err {jnp.max(jnp.abs(out - ref))}"

    # bf16 MXU path (looser tolerance)
    out_bf = lstm_forward(x, w_ih, w_hh, b_ih, b_hh, w_out, b_out, use_bf16=True)
    out_bf = jax.block_until_ready(out_bf)
    assert out_bf.shape == (T, B, O)
    assert jnp.allclose(out_bf, ref, atol=5e-2, rtol=0), \
        f"bf16 max err {jnp.max(jnp.abs(out_bf - ref))}"

    print("KERNEL_OK")
</pallas_src>

<mosaic_0001>
module attributes {stable_mosaic.version = 11 : i64} {
  func.func @_lstm_kernel(%arg0: memref<64x16xf32, #tpu.memory_space<vmem>>, %arg1: memref<16x512xf32, #tpu.memory_space<vmem>>, %arg2: memref<128x512xf32, #tpu.memory_space<vmem>>, %arg3: memref<1x512xf32, #tpu.memory_space<vmem>>, %arg4: memref<128x128xf32, #tpu.memory_space<vmem>>, %arg5: memref<1x128xf32, #tpu.memory_space<vmem>>, %arg6: memref<64x128xf32, #tpu.memory_space<vmem>>, %arg7: memref<64x512xf32, #tpu.memory_space<vmem>>, %arg8: memref<64x128xf32, #tpu.memory_space<vmem>>) attributes {dimension_semantics = [], scalar_prefetch = 0 : i64, scratch_operands = 2 : i64, tpu.core_type = #tpu.core_type<tc>} {
    %c0 = arith.constant 0 : index
    %c0_0 = arith.constant 0 : index
    %0 = vector.load %arg0[%c0, %c0_0] : memref<64x16xf32, #tpu.memory_space<vmem>>, vector<64x16xf32>
    %c0_1 = arith.constant 0 : index
    %c0_2 = arith.constant 0 : index
    %1 = vector.load %arg1[%c0_1, %c0_2] : memref<16x512xf32, #tpu.memory_space<vmem>>, vector<16x512xf32>
    %cst = arith.constant dense<0.000000e+00> : vector<64x512xf32>
    %2 = tpu.matmul %0, %1, %cst {dimension_numbers = #tpu.dot_dimension_numbers<[1], [0], [0], [1], [0, 0, 1, 1], [], []>} : vector<64x16xf32>, vector<16x512xf32>, vector<64x512xf32> -> vector<64x512xf32>
    %c0_3 = arith.constant 0 : index
    %c0_4 = arith.constant 0 : index
    %3 = vector.load %arg3[%c0_3, %c0_4] : memref<1x512xf32, #tpu.memory_space<vmem>>, vector<1x512xf32>
    %4 = vector.broadcast %3 : vector<1x512xf32> to vector<64x512xf32>
    %5 = arith.addf %2, %4 : vector<64x512xf32>
    %c0_5 = arith.constant 0 : index
    %c0_6 = arith.constant 0 : index
    %6 = vector.load %arg7[%c0_5, %c0_6] : memref<64x512xf32, #tpu.memory_space<vmem>>, vector<64x512xf32>
    tpu.vector_store %arg7[%c0_5, %c0_6], %5 {strides = array<i32>} : memref<64x512xf32, #tpu.memory_space<vmem>>, vector<64x512xf32>,
    %cst_7 = arith.constant 0.000000e+00 : f32
    %7 = vector.broadcast %cst_7 : f32 to vector<8x128xf32>
    %cst_8 = arith.constant 0.000000e+00 : f32
    %8 = vector.broadcast %cst_8 : f32 to vector<8x128xf32>
    %c0_i32 = arith.constant 0 : i32
    %c8_i32 = arith.constant 8 : i32
    %9 = arith.muli %c0_i32, %c8_i32 : i32
    %10 = tpu.assume_multiple %9, 8 : i32
    %11 = arith.index_cast %10 : i32 to index
    %c0_9 = arith.constant 0 : index
    %12 = vector.load %arg7[%11, %c0_9] : memref<64x512xf32, #tpu.memory_space<vmem>>, vector<8x512xf32>
    %c0_10 = arith.constant 0 : index
    %c0_11 = arith.constant 0 : index
    %13 = vector.load %arg2[%c0_10, %c0_11] : memref<128x512xf32, #tpu.memory_space<vmem>>, vector<128x512xf32>
    %cst_12 = arith.constant dense<0.000000e+00> : vector<8x512xf32>
    %14 = tpu.matmul %7, %13, %cst_12 {dimension_numbers = #tpu.dot_dimension_numbers<[1], [0], [0], [1], [0, 0, 1, 1], [], []>} : vector<8x128xf32>, vector<128x512xf32>, vector<8x512xf32> -> vector<8x512xf32>
    %15 = arith.addf %12, %14 : vector<8x512xf32>
    %16 = vector.extract_strided_slice %15 {offsets = [0, 0], sizes = [8, 128], strides = [1, 1]} : vector<8x512xf32> to vector<8x128xf32>
    %17 = arith.negf %16 : vector<8x128xf32>
    %18 = math.exp %17 : vector<8x128xf32>
    %cst_13 = arith.constant 1.000000e+00 : f32
    %19 = vector.broadcast %cst_13 : f32 to vector<8x128xf32>
    %20 = arith.addf %19, %18 : vector<8x128xf32>
    %21 = arith.divf %19, %20 : vector<8x128xf32>
    %22 = vector.extract_strided_slice %15 {offsets = [0, 128], sizes = [8, 128], strides = [1, 1]} : vector<8x512xf32> to vector<8x128xf32>
    %23 = arith.negf %22 : vector<8x128xf32>
    %24 = math.exp %23 : vector<8x128xf32>
    %cst_14 = arith.constant 1.000000e+00 : f32
    %25 = vector.broadcast %cst_14 : f32 to vector<8x128xf32>
    %26 = arith.addf %25, %24 : vector<8x128xf32>
    %27 = arith.divf %25, %26 : vector<8x128xf32>
    %28 = vector.extract_strided_slice %15 {offsets = [0, 256], sizes = [8, 128], strides = [1, 1]} : vector<8x512xf32> to vector<8x128xf32>
    %29 = math.tanh %28 : vector<8x128xf32>
    %30 = vector.extract_strided_slice %15 {offsets = [0, 384], sizes = [8, 128], strides = [1, 1]} : vector<8x512xf32> to vector<8x128xf32>
    %31 = arith.negf %30 : vector<8x128xf32>
    %32 = math.exp %31 : vector<8x128xf32>
    %cst_15 = arith.constant 1.000000e+00 : f32
    %33 = vector.broadcast %cst_15 : f32 to vector<8x128xf32>
    %34 = arith.addf %33, %32 : vector<8x128xf32>
    %35 = arith.divf %33, %34 : vector<8x128xf32>
    %36 = arith.mulf %27, %8 : vector<8x128xf32>
    %37 = arith.mulf %21, %29 : vector<8x128xf32>
    %38 = arith.addf %36, %37 : vector<8x128xf32>
    %39 = math.tanh %38 : vector<8x128xf32>
    %40 = arith.mulf %35, %39 : vector<8x128xf32>
    %41 = arith.index_cast %10 : i32 to index
    %c0_16 = arith.constant 0 : index
    %42 = vector.load %arg8[%41, %c0_16] : memref<64x128xf32, #tpu.memory_space<vmem>>, vector<8x128xf32>
    tpu.vector_store %arg8[%41, %c0_16], %40 {strides = array<i32>} : memref<64x128xf32, #tpu.memory_space<vmem>>, vector<8x128xf32>,
    %c1_i32 = arith.constant 1 : i32
    %c8_i32_17 = arith.constant 8 : i32
    %43 = arith.muli %c1_i32, %c8_i32_17 : i32
    %44 = tpu.assume_multiple %43, 8 : i32
    %45 = arith.index_cast %44 : i32 to index
    %c0_18 = arith.constant 0 : index
    %46 = vector.load %arg7[%45, %c0_18] : memref<64x512xf32, #tpu.memory_space<vmem>>, vector<8x512xf32>
    %c0_19 = arith.constant 0 : index
    %c0_20 = arith.constant 0 : index
    %47 = vector.load %arg2[%c0_19, %c0_20] : memref<128x512xf32, #tpu.memory_space<vmem>>, vector<128x512xf32>
    %cst_21 = arith.constant dense<0.000000e+00> : vector<8x512xf32>
    %48 = tpu.matmul %40, %47, %cst_21 {dimension_numbers = #tpu.dot_dimension_numbers<[1], [0], [0], [1], [0, 0, 1, 1], [], []>} : vector<8x128xf32>, vector<128x512xf32>, vector<8x512xf32> -> vector<8x512xf32>
    %49 = arith.addf %46, %48 : vector<8x512xf32>
    %50 = vector.extract_strided_slice %49 {offsets = [0, 0], sizes = [8, 128], strides = [1, 1]} : vector<8x512xf32> to vector<8x128xf32>
    %51 = arith.negf %50 : vector<8x128xf32>
    %52 = math.exp %51 : vector<8x128xf32>
    %cst_22 = arith.constant 1.000000e+00 : f32
    %53 = vector.broadcast %cst_22 : f32 to vector<8x128xf32>
    %54 = arith.addf %53, %52 : vector<8x128xf32>
    %55 = arith.divf %53, %54 : vector<8x128xf32>
    %56 = vector.extract_strided_slice %49 {offsets = [0, 128], sizes = [8, 128], strides = [1, 1]} : vector<8x512xf32> to vector<8x128xf32>
    %57 = arith.negf %56 : vector<8x128xf32>
    %58 = math.exp %57 : vector<8x128xf32>
    %cst_23 = arith.constant 1.000000e+00 : f32
    %59 = vector.broadcast %cst_23 : f32 to vector<8x128xf32>
    %60 = arith.addf %59, %58 : vector<8x128xf32>
    %61 = arith.divf %59, %60 : vector<8x128xf32>
    %62 = vector.extract_strided_slice %49 {offsets = [0, 256], sizes = [8, 128], strides = [1, 1]} : vector<8x512xf32> to vector<8x128xf32>
    %63 = math.tanh %62 : vector<8x128xf32>
    %64 = vector.extract_strided_slice %49 {offsets = [0, 384], sizes = [8, 128], strides = [1, 1]} : vector<8x512xf32> to vector<8x128xf32>
    %65 = arith.negf %64 : vector<8x128xf32>
    %66 = math.exp %65 : vector<8x128xf32>
    %cst_24 = arith.constant 1.000000e+00 : f32
    %67 = vector.broadcast %cst_24 : f32 to vector<8x128xf32>
    %68 = arith.addf %67, %66 : vector<8x128xf32>
    %69 = arith.divf %67, %68 : vector<8x128xf32>
    %70 = arith.mulf %61, %38 : vector<8x128xf32>
    %71 = arith.mulf %55, %63 : vector<8x128xf32>
    %72 = arith.addf %70, %71 : vector<8x128xf32>
    %73 = math.tanh %72 : vector<8x128xf32>
    %74 = arith.mulf %69, %73 : vector<8x128xf32>
    %75 = arith.index_cast %44 : i32 to index
    %c0_25 = arith.constant 0 : index
    %76 = vector.load %arg8[%75, %c0_25] : memref<64x128xf32, #tpu.memory_space<vmem>>, vector<8x128xf32>
    tpu.vector_store %arg8[%75, %c0_25], %74 {strides = array<i32>} : memref<64x128xf32, #tpu.memory_space<vmem>>, vector<8x128xf32>,
    %c2_i32 = arith.constant 2 : i32
    %c8_i32_26 = arith.constant 8 : i32
    %77 = arith.muli %c2_i32, %c8_i32_26 : i32
    %78 = tpu.assume_multiple %77, 8 : i32
    %79 = arith.index_cast %78 : i32 to index
    %c0_27 = arith.constant 0 : index
    %80 = vector.load %arg7[%79, %c0_27] : memref<64x512xf32, #tpu.memory_space<vmem>>, vector<8x512xf32>
    %c0_28 = arith.constant 0 : index
    %c0_29 = arith.constant 0 : index
    %81 = vector.load %arg2[%c0_28, %c0_29] : memref<128x512xf32, #tpu.memory_space<vmem>>, vector<128x512xf32>
    %cst_30 = arith.constant dense<0.000000e+00> : vector<8x512xf32>
    %82 = tpu.matmul %74, %81, %cst_30 {dimension_numbers = #tpu.dot_dimension_numbers<[1], [0], [0], [1], [0, 0, 1, 1], [], []>} : vector<8x128xf32>, vector<128x512xf32>, vector<8x512xf32> -> vector<8x512xf32>
    %83 = arith.addf %80, %82 : vector<8x512xf32>
    %84 = vector.extract_strided_slice %83 {offsets = [0, 0], sizes = [8, 128], strides = [1, 1]} : vector<8x512xf32> to vector<8x128xf32>
    %85 = arith.negf %84 : vector<8x128xf32>
    %86 = math.exp %85 : vector<8x128xf32>
    %cst_31 = arith.constant 1.000000e+00 : f32
    %87 = vector.broadcast %cst_31 : f32 to vector<8x128xf32>
    %88 = arith.addf %87, %86 : vector<8x128xf32>
    %89 = arith.divf %87, %88 : vector<8x128xf32>
    %90 = vector.extract_strided_slice %83 {offsets = [0, 128], sizes = [8, 128], strides = [1, 1]} : vector<8x512xf32> to vector<8x128xf32>
    %91 = arith.negf %90 : vector<8x128xf32>
    %92 = math.exp %91 : vector<8x128xf32>
    %cst_32 = arith.constant 1.000000e+00 : f32
    %93 = vector.broadcast %cst_32 : f32 to vector<8x128xf32>
    %94 = arith.addf %93, %92 : vector<8x128xf32>
    %95 = arith.divf %93, %94 : vector<8x128xf32>
    %96 = vector.extract_strided_slice %83 {offsets = [0, 256], sizes = [8, 128], strides = [1, 1]} : vector<8x512xf32> to vector<8x128xf32>
    %97 = math.tanh %96 : vector<8x128xf32>
    %98 = vector.extract_strided_slice %83 {offsets = [0, 384], sizes = [8, 128], strides = [1, 1]} : vector<8x512xf32> to vector<8x128xf32>
    %99 = arith.negf %98 : vector<8x128xf32>
    %100 = math.exp %99 : vector<8x128xf32>
    %cst_33 = arith.constant 1.000000e+00 : f32
    %101 = vector.broadcast %cst_33 : f32 to vector<8x128xf32>
    %102 = arith.addf %101, %100 : vector<8x128xf32>
    %103 = arith.divf %101, %102 : vector<8x128xf32>
    %104 = arith.mulf %95, %72 : vector<8x128xf32>
    %105 = arith.mulf %89, %97 : vector<8x128xf32>
    %106 = arith.addf %104, %105 : vector<8x128xf32>
    %107 = math.tanh %106 : vector<8x128xf32>
    %108 = arith.mulf %103, %107 : vector<8x128xf32>
    %109 = arith.index_cast %78 : i32 to index
    %c0_34 = arith.constant 0 : index
    %110 = vector.load %arg8[%109, %c0_34] : memref<64x128xf32, #tpu.memory_space<vmem>>, vector<8x128xf32>
    tpu.vector_store %arg8[%109, %c0_34], %108 {strides = array<i32>} : memref<64x128xf32, #tpu.memory_space<vmem>>, vector<8x128xf32>,
    %c3_i32 = arith.constant 3 : i32
    %c8_i32_35 = arith.constant 8 : i32
    %111 = arith.muli %c3_i32, %c8_i32_35 : i32
    %112 = tpu.assume_multiple %111, 8 : i32
    %113 = arith.index_cast %112 : i32 to index
    %c0_36 = arith.constant 0 : index
    %114 = vector.load %arg7[%113, %c0_36] : memref<64x512xf32, #tpu.memory_space<vmem>>, vector<8x512xf32>
    %c0_37 = arith.constant 0 : index
    %c0_38 = arith.constant 0 : index
    %115 = vector.load %arg2[%c0_37, %c0_38] : memref<128x512xf32, #tpu.memory_space<vmem>>, vector<128x512xf32>
    %cst_39 = arith.constant dense<0.000000e+00> : vector<8x512xf32>
    %116 = tpu.matmul %108, %115, %cst_39 {dimension_numbers = #tpu.dot_dimension_numbers<[1], [0], [0], [1], [0, 0, 1, 1], [], []>} : vector<8x128xf32>, vector<128x512xf32>, vector<8x512xf32> -> vector<8x512xf32>
    %117 = arith.addf %114, %116 : vector<8x512xf32>
    %118 = vector.extract_strided_slice %117 {offsets = [0, 0], sizes = [8, 128], strides = [1, 1]} : vector<8x512xf32> to vector<8x128xf32>
    %119 = arith.negf %118 : vector<8x128xf32>
    %120 = math.exp %119 : vector<8x128xf32>
    %cst_40 = arith.constant 1.000000e+00 : f32
    %121 = vector.broadcast %cst_40 : f32 to vector<8x128xf32>
    %122 = arith.addf %121, %120 : vector<8x128xf32>
    %123 = arith.divf %121, %122 : vector<8x128xf32>
    %124 = vector.extract_strided_slice %117 {offsets = [0, 128], sizes = [8, 128], strides = [1, 1]} : vector<8x512xf32> to vector<8x128xf32>
    %125 = arith.negf %124 : vector<8x128xf32>
    %126 = math.exp %125 : vector<8x128xf32>
    %cst_41 = arith.constant 1.000000e+00 : f32
    %127 = vector.broadcast %cst_41 : f32 to vector<8x128xf32>
    %128 = arith.addf %127, %126 : vector<8x128xf32>
    %129 = arith.divf %127, %128 : vector<8x128xf32>
    %130 = vector.extract_strided_slice %117 {offsets = [0, 256], sizes = [8, 128], strides = [1, 1]} : vector<8x512xf32> to vector<8x128xf32>
    %131 = math.tanh %130 : vector<8x128xf32>
    %132 = vector.extract_strided_slice %117 {offsets = [0, 384], sizes = [8, 128], strides = [1, 1]} : vector<8x512xf32> to vector<8x128xf32>
    %133 = arith.negf %132 : vector<8x128xf32>
    %134 = math.exp %133 : vector<8x128xf32>
    %cst_42 = arith.constant 1.000000e+00 : f32
    %135 = vector.broadcast %cst_42 : f32 to vector<8x128xf32>
    %136 = arith.addf %135, %134 : vector<8x128xf32>
    %137 = arith.divf %135, %136 : vector<8x128xf32>
    %138 = arith.mulf %129, %106 : vector<8x128xf32>
    %139 = arith.mulf %123, %131 : vector<8x128xf32>
    %140 = arith.addf %138, %139 : vector<8x128xf32>
    %141 = math.tanh %140 : vector<8x128xf32>
    %142 = arith.mulf %137, %141 : vector<8x128xf32>
    %143 = arith.index_cast %112 : i32 to index
    %c0_43 = arith.constant 0 : index
    %144 = vector.load %arg8[%143, %c0_43] : memref<64x128xf32, #tpu.memory_space<vmem>>, vector<8x128xf32>
    tpu.vector_store %arg8[%143, %c0_43], %142 {strides = array<i32>} : memref<64x128xf32, #tpu.memory_space<vmem>>, vector<8x128xf32>,
    %c4_i32 = arith.constant 4 : i32
    %c8_i32_44 = arith.constant 8 : i32
    %145 = arith.muli %c4_i32, %c8_i32_44 : i32
    %146 = tpu.assume_multiple %145, 8 : i32
    %147 = arith.index_cast %146 : i32 to index
    %c0_45 = arith.constant 0 : index
    %148 = vector.load %arg7[%147, %c0_45] : memref<64x512xf32, #tpu.memory_space<vmem>>, vector<8x512xf32>
    %c0_46 = arith.constant 0 : index
    %c0_47 = arith.constant 0 : index
    %149 = vector.load %arg2[%c0_46, %c0_47] : memref<128x512xf32, #tpu.memory_space<vmem>>, vector<128x512xf32>
    %cst_48 = arith.constant dense<0.000000e+00> : vector<8x512xf32>
    %150 = tpu.matmul %142, %149, %cst_48 {dimension_numbers = #tpu.dot_dimension_numbers<[1], [0], [0], [1], [0, 0, 1, 1], [], []>} : vector<8x128xf32>, vector<128x512xf32>, vector<8x512xf32> -> vector<8x512xf32>
    %151 = arith.addf %148, %150 : vector<8x512xf32>
    %152 = vector.extract_strided_slice %151 {offsets = [0, 0], sizes = [8, 128], strides = [1, 1]} : vector<8x512xf32> to vector<8x128xf32>
    %153 = arith.negf %152 : vector<8x128xf32>
    %154 = math.exp %153 : vector<8x128xf32>
    %cst_49 = arith.constant 1.000000e+00 : f32
    %155 = vector.broadcast %cst_49 : f32 to vector<8x128xf32>
    %156 = arith.addf %155, %154 : vector<8x128xf32>
    %157 = arith.divf %155, %156 : vector<8x128xf32>
    %158 = vector.extract_strided_slice %151 {offsets = [0, 128], sizes = [8, 128], strides = [1, 1]} : vector<8x512xf32> to vector<8x128xf32>
    %159 = arith.negf %158 : vector<8x128xf32>
    %160 = math.exp %159 : vector<8x128xf32>
    %cst_50 = arith.constant 1.000000e+00 : f32
    %161 = vector.broadcast %cst_50 : f32 to vector<8x128xf32>
    %162 = arith.addf %161, %160 : vector<8x128xf32>
    %163 = arith.divf %161, %162 : vector<8x128xf32>
    %164 = vector.extract_strided_slice %151 {offsets = [0, 256], sizes = [8, 128], strides = [1, 1]} : vector<8x512xf32> to vector<8x128xf32>
    %165 = math.tanh %164 : vector<8x128xf32>
    %166 = vector.extract_strided_slice %151 {offsets = [0, 384], sizes = [8, 128], strides = [1, 1]} : vector<8x512xf32> to vector<8x128xf32>
    %167 = arith.negf %166 : vector<8x128xf32>
    %168 = math.exp %167 : vector<8x128xf32>
    %cst_51 = arith.constant 1.000000e+00 : f32
    %169 = vector.broadcast %cst_51 : f32 to vector<8x128xf32>
    %170 = arith.addf %169, %168 : vector<8x128xf32>
    %171 = arith.divf %169, %170 : vector<8x128xf32>
    %172 = arith.mulf %163, %140 : vector<8x128xf32>
    %173 = arith.mulf %157, %165 : vector<8x128xf32>
    %174 = arith.addf %172, %173 : vector<8x128xf32>
    %175 = math.tanh %174 : vector<8x128xf32>
    %176 = arith.mulf %171, %175 : vector<8x128xf32>
    %177 = arith.index_cast %146 : i32 to index
    %c0_52 = arith.constant 0 : index
    %178 = vector.load %arg8[%177, %c0_52] : memref<64x128xf32, #tpu.memory_space<vmem>>, vector<8x128xf32>
    tpu.vector_store %arg8[%177, %c0_52], %176 {strides = array<i32>} : memref<64x128xf32, #tpu.memory_space<vmem>>, vector<8x128xf32>,
    %c5_i32 = arith.constant 5 : i32
    %c8_i32_53 = arith.constant 8 : i32
    %179 = arith.muli %c5_i32, %c8_i32_53 : i32
    %180 = tpu.assume_multiple %179, 8 : i32
    %181 = arith.index_cast %180 : i32 to index
    %c0_54 = arith.constant 0 : index
    %182 = vector.load %arg7[%181, %c0_54] : memref<64x512xf32, #tpu.memory_space<vmem>>, vector<8x512xf32>
    %c0_55 = arith.constant 0 : index
    %c0_56 = arith.constant 0 : index
    %183 = vector.load %arg2[%c0_55, %c0_56] : memref<128x512xf32, #tpu.memory_space<vmem>>, vector<128x512xf32>
    %cst_57 = arith.constant dense<0.000000e+00> : vector<8x512xf32>
    %184 = tpu.matmul %176, %183, %cst_57 {dimension_numbers = #tpu.dot_dimension_numbers<[1], [0], [0], [1], [0, 0, 1, 1], [], []>} : vector<8x128xf32>, vector<128x512xf32>, vector<8x512xf32> -> vector<8x512xf32>
    %185 = arith.addf %182, %184 : vector<8x512xf32>
    %186 = vector.extract_strided_slice %185 {offsets = [0, 0], sizes = [8, 128], strides = [1, 1]} : vector<8x512xf32> to vector<8x128xf32>
    %187 = arith.negf %186 : vector<8x128xf32>
    %188 = math.exp %187 : vector<8x128xf32>
    %cst_58 = arith.constant 1.000000e+00 : f32
    %189 = vector.broadcast %cst_58 : f32 to vector<8x128xf32>
    %190 = arith.addf %189, %188 : vector<8x128xf32>
    %191 = arith.divf %189, %190 : vector<8x128xf32>
    %192 = vector.extract_strided_slice %185 {offsets = [0, 128], sizes = [8, 128], strides = [1, 1]} : vector<8x512xf32> to vector<8x128xf32>
    %193 = arith.negf %192 : vector<8x128xf32>
    %194 = math.exp %193 : vector<8x128xf32>
    %cst_59 = arith.constant 1.000000e+00 : f32
    %195 = vector.broadcast %cst_59 : f32 to vector<8x128xf32>
    %196 = arith.addf %195, %194 : vector<8x128xf32>
    %197 = arith.divf %195, %196 : vector<8x128xf32>
    %198 = vector.extract_strided_slice %185 {offsets = [0, 256], sizes = [8, 128], strides = [1, 1]} : vector<8x512xf32> to vector<8x128xf32>
    %199 = math.tanh %198 : vector<8x128xf32>
    %200 = vector.extract_strided_slice %185 {offsets = [0, 384], sizes = [8, 128], strides = [1, 1]} : vector<8x512xf32> to vector<8x128xf32>
    %201 = arith.negf %200 : vector<8x128xf32>
    %202 = math.exp %201 : vector<8x128xf32>
    %cst_60 = arith.constant 1.000000e+00 : f32
    %203 = vector.broadcast %cst_60 : f32 to vector<8x128xf32>
    %204 = arith.addf %203, %202 : vector<8x128xf32>
    %205 = arith.divf %203, %204 : vector<8x128xf32>
    %206 = arith.mulf %197, %174 : vector<8x128xf32>
    %207 = arith.mulf %191, %199 : vector<8x128xf32>
    %208 = arith.addf %206, %207 : vector<8x128xf32>
    %209 = math.tanh %208 : vector<8x128xf32>
    %210 = arith.mulf %205, %209 : vector<8x128xf32>
    %211 = arith.index_cast %180 : i32 to index
    %c0_61 = arith.constant 0 : index
    %212 = vector.load %arg8[%211, %c0_61] : memref<64x128xf32, #tpu.memory_space<vmem>>, vector<8x128xf32>
    tpu.vector_store %arg8[%211, %c0_61], %210 {strides = array<i32>} : memref<64x128xf32, #tpu.memory_space<vmem>>, vector<8x128xf32>,
    %c6_i32 = arith.constant 6 : i32
    %c8_i32_62 = arith.constant 8 : i32
    %213 = arith.muli %c6_i32, %c8_i32_62 : i32
    %214 = tpu.assume_multiple %213, 8 : i32
    %215 = arith.index_cast %214 : i32 to index
    %c0_63 = arith.constant 0 : index
    %216 = vector.load %arg7[%215, %c0_63] : memref<64x512xf32, #tpu.memory_space<vmem>>, vector<8x512xf32>
    %c0_64 = arith.constant 0 : index
    %c0_65 = arith.constant 0 : index
    %217 = vector.load %arg2[%c0_64, %c0_65] : memref<128x512xf32, #tpu.memory_space<vmem>>, vector<128x512xf32>
    %cst_66 = arith.constant dense<0.000000e+00> : vector<8x512xf32>
    %218 = tpu.matmul %210, %217, %cst_66 {dimension_numbers = #tpu.dot_dimension_numbers<[1], [0], [0], [1], [0, 0, 1, 1], [], []>} : vector<8x128xf32>, vector<128x512xf32>, vector<8x512xf32> -> vector<8x512xf32>
    %219 = arith.addf %216, %218 : vector<8x512xf32>
    %220 = vector.extract_strided_slice %219 {offsets = [0, 0], sizes = [8, 128], strides = [1, 1]} : vector<8x512xf32> to vector<8x128xf32>
    %221 = arith.negf %220 : vector<8x128xf32>
    %222 = math.exp %221 : vector<8x128xf32>
    %cst_67 = arith.constant 1.000000e+00 : f32
    %223 = vector.broadcast %cst_67 : f32 to vector<8x128xf32>
    %224 = arith.addf %223, %222 : vector<8x128xf32>
    %225 = arith.divf %223, %224 : vector<8x128xf32>
    %226 = vector.extract_strided_slice %219 {offsets = [0, 128], sizes = [8, 128], strides = [1, 1]} : vector<8x512xf32> to vector<8x128xf32>
    %227 = arith.negf %226 : vector<8x128xf32>
    %228 = math.exp %227 : vector<8x128xf32>
    %cst_68 = arith.constant 1.000000e+00 : f32
    %229 = vector.broadcast %cst_68 : f32 to vector<8x128xf32>
    %230 = arith.addf %229, %228 : vector<8x128xf32>
    %231 = arith.divf %229, %230 : vector<8x128xf32>
    %232 = vector.extract_strided_slice %219 {offsets = [0, 256], sizes = [8, 128], strides = [1, 1]} : vector<8x512xf32> to vector<8x128xf32>
    %233 = math.tanh %232 : vector<8x128xf32>
    %234 = vector.extract_strided_slice %219 {offsets = [0, 384], sizes = [8, 128], strides = [1, 1]} : vector<8x512xf32> to vector<8x128xf32>
    %235 = arith.negf %234 : vector<8x128xf32>
    %236 = math.exp %235 : vector<8x128xf32>
    %cst_69 = arith.constant 1.000000e+00 : f32
    %237 = vector.broadcast %cst_69 : f32 to vector<8x128xf32>
    %238 = arith.addf %237, %236 : vector<8x128xf32>
    %239 = arith.divf %237, %238 : vector<8x128xf32>
    %240 = arith.mulf %231, %208 : vector<8x128xf32>
    %241 = arith.mulf %225, %233 : vector<8x128xf32>
    %242 = arith.addf %240, %241 : vector<8x128xf32>
    %243 = math.tanh %242 : vector<8x128xf32>
    %244 = arith.mulf %239, %243 : vector<8x128xf32>
    %245 = arith.index_cast %214 : i32 to index
    %c0_70 = arith.constant 0 : index
    %246 = vector.load %arg8[%245, %c0_70] : memref<64x128xf32, #tpu.memory_space<vmem>>, vector<8x128xf32>
    tpu.vector_store %arg8[%245, %c0_70], %244 {strides = array<i32>} : memref<64x128xf32, #tpu.memory_space<vmem>>, vector<8x128xf32>,
    %c7_i32 = arith.constant 7 : i32
    %c8_i32_71 = arith.constant 8 : i32
    %247 = arith.muli %c7_i32, %c8_i32_71 : i32
    %248 = tpu.assume_multiple %247, 8 : i32
    %249 = arith.index_cast %248 : i32 to index
    %c0_72 = arith.constant 0 : index
    %250 = vector.load %arg7[%249, %c0_72] : memref<64x512xf32, #tpu.memory_space<vmem>>, vector<8x512xf32>
    %c0_73 = arith.constant 0 : index
    %c0_74 = arith.constant 0 : index
    %251 = vector.load %arg2[%c0_73, %c0_74] : memref<128x512xf32, #tpu.memory_space<vmem>>, vector<128x512xf32>
    %cst_75 = arith.constant dense<0.000000e+00> : vector<8x512xf32>
    %252 = tpu.matmul %244, %251, %cst_75 {dimension_numbers = #tpu.dot_dimension_numbers<[1], [0], [0], [1], [0, 0, 1, 1], [], []>} : vector<8x128xf32>, vector<128x512xf32>, vector<8x512xf32> -> vector<8x512xf32>
    %253 = arith.addf %250, %252 : vector<8x512xf32>
    %254 = vector.extract_strided_slice %253 {offsets = [0, 0], sizes = [8, 128], strides = [1, 1]} : vector<8x512xf32> to vector<8x128xf32>
    %255 = arith.negf %254 : vector<8x128xf32>
    %256 = math.exp %255 : vector<8x128xf32>
    %cst_76 = arith.constant 1.000000e+00 : f32
    %257 = vector.broadcast %cst_76 : f32 to vector<8x128xf32>
    %258 = arith.addf %257, %256 : vector<8x128xf32>
    %259 = arith.divf %257, %258 : vector<8x128xf32>
    %260 = vector.extract_strided_slice %253 {offsets = [0, 128], sizes = [8, 128], strides = [1, 1]} : vector<8x512xf32> to vector<8x128xf32>
    %261 = arith.negf %260 : vector<8x128xf32>
    %262 = math.exp %261 : vector<8x128xf32>
    %cst_77 = arith.constant 1.000000e+00 : f32
    %263 = vector.broadcast %cst_77 : f32 to vector<8x128xf32>
    %264 = arith.addf %263, %262 : vector<8x128xf32>
    %265 = arith.divf %263, %264 : vector<8x128xf32>
    %266 = vector.extract_strided_slice %253 {offsets = [0, 256], sizes = [8, 128], strides = [1, 1]} : vector<8x512xf32> to vector<8x128xf32>
    %267 = math.tanh %266 : vector<8x128xf32>
    %268 = vector.extract_strided_slice %253 {offsets = [0, 384], sizes = [8, 128], strides = [1, 1]} : vector<8x512xf32> to vector<8x128xf32>
    %269 = arith.negf %268 : vector<8x128xf32>
    %270 = math.exp %269 : vector<8x128xf32>
    %cst_78 = arith.constant 1.000000e+00 : f32
    %271 = vector.broadcast %cst_78 : f32 to vector<8x128xf32>
    %272 = arith.addf %271, %270 : vector<8x128xf32>
    %273 = arith.divf %271, %272 : vector<8x128xf32>
    %274 = arith.mulf %265, %242 : vector<8x128xf32>
    %275 = arith.mulf %259, %267 : vector<8x128xf32>
    %276 = arith.addf %274, %275 : vector<8x128xf32>
    %277 = math.tanh %276 : vector<8x128xf32>
    %278 = arith.mulf %273, %277 : vector<8x128xf32>
    %279 = arith.index_cast %248 : i32 to index
    %c0_79 = arith.constant 0 : index
    %280 = vector.load %arg8[%279, %c0_79] : memref<64x128xf32, #tpu.memory_space<vmem>>, vector<8x128xf32>
    tpu.vector_store %arg8[%279, %c0_79], %278 {strides = array<i32>} : memref<64x128xf32, #tpu.memory_space<vmem>>, vector<8x128xf32>,
    %c8_i32_80 = arith.constant 8 : i32
    %c0_81 = arith.constant 0 : index
    %c0_82 = arith.constant 0 : index
    %281 = vector.load %arg8[%c0_81, %c0_82] : memref<64x128xf32, #tpu.memory_space<vmem>>, vector<64x128xf32>
    %c0_83 = arith.constant 0 : index
    %c0_84 = arith.constant 0 : index
    %282 = vector.load %arg4[%c0_83, %c0_84] : memref<128x128xf32, #tpu.memory_space<vmem>>, vector<128x128xf32>
    %cst_85 = arith.constant dense<0.000000e+00> : vector<64x128xf32>
    %283 = tpu.matmul %281, %282, %cst_85 {dimension_numbers = #tpu.dot_dimension_numbers<[1], [0], [0], [1], [0, 0, 1, 1], [], []>} : vector<64x128xf32>, vector<128x128xf32>, vector<64x128xf32> -> vector<64x128xf32>
    %c0_86 = arith.constant 0 : index
    %c0_87 = arith.constant 0 : index
    %284 = vector.load %arg5[%c0_86, %c0_87] : memref<1x128xf32, #tpu.memory_space<vmem>>, vector<1x128xf32>
    %285 = vector.broadcast %284 : vector<1x128xf32> to vector<64x128xf32>
    %286 = arith.addf %283, %285 : vector<64x128xf32>
    %c0_88 = arith.constant 0 : index
    %c0_89 = arith.constant 0 : index
    %287 = vector.load %arg6[%c0_88, %c0_89] : memref<64x128xf32, #tpu.memory_space<vmem>>, vector<64x128xf32>
    tpu.vector_store %arg6[%c0_88, %c0_89], %286 {strides = array<i32>} : memref<64x128xf32, #tpu.memory_space<vmem>>, vector<64x128xf32>,
    return
  }
}

</mosaic_0001>

<llo_original>
// kernel: tpu_custom_call.1
$region0: #{tpu_custom_call.1}
  #allocation0 [shape = 'u32[]', space=smem, size = 0x4, offset = 0x4, fixed_abs, tag = 'smem constant byte address 0x4 - core index']
  #allocation1 [shape = 'u32[144,128]{1,0:T(1,128)}', space=vmem, size = 0x12000, scoped, tag = 'internal scratch']
  #allocation2 [shape = 'f32[64,512]{1,0:T(8,128)}', space=vmem, size = 0x20000, scoped, tag = 'scratch operand']
  #allocation3 [shape = 'f32[64,128]{1,0:T(8,128)}', space=vmem, size = 0x8000, scoped, tag = 'scratch operand']
  %s0 = inlined_call_operand.vmem [shape: f32[64,16], index: 0, kind: input, shape index: {}]
  %s1 = inlined_call_operand.vmem [shape: f32[16,512], index: 1, kind: input, shape index: {}]
  %s2 = inlined_call_operand.hbm [shape: f32[128,512], index: 2, kind: input, shape index: {}]
  %s3 = inlined_call_operand.vmem [shape: f32[1,512], index: 3, kind: input, shape index: {}]
  %s4 = inlined_call_operand.hbm [shape: f32[128,128], index: 4, kind: input, shape index: {}]
  %s5 = inlined_call_operand.vmem [shape: f32[1,128], index: 5, kind: input, shape index: {}]
  %s6 = inlined_call_operand.hbm [shape: f32[64,128], index: 6, kind: output, shape index: {}]
  %s7 = sld [smem:[#allocation0]]
  $region42: #{tpu_custom_call.1} parent=0
    _
  %s9 = ssub.s32 1, %s7
  %s10 = scalar_select 0, %s9, %s7
  $region1: #{tpu_custom_call.1} parent=0
    #allocation4 [shape = 'u8[262144]{0}', space=vmem, size = 0x40000, scoped, tag = 'input window, operand 2, single buffered']
    #allocation5 [shape = 's32[1]{0}', space=sflag, size = 0x4, scoped, tag = 'scoped memory for tpu_custom_call.1']
    #allocation6 [shape = 's32[1]{0}', space=sflag, size = 0x4, scoped, tag = 'scoped memory for tpu_custom_call.1']
    #allocation7 [shape = 'u8[65536]{0}', space=vmem, size = 0x10000, scoped, tag = 'input window, operand 4, single buffered']
    #allocation8 [shape = 's32[1]{0}', space=sflag, size = 0x4, scoped, tag = 'scoped memory for tpu_custom_call.1']
    #allocation9 [shape = 'u8[32768]{0}', space=vmem, size = 0x8000, scoped, tag = 'output window, operand 0, single buffered']
    %11 = vsyncpa [#allocation5], 0
    %12 = vsyncpa [#allocation8], 0
    %13 = vsyncpa [#allocation6], 0
    // Predicated region
    $region2: #{tpu_custom_call.1} parent=1 // pred_check
      _
    $region3: #{tpu_custom_call.1} parent=1 // pred_check_branch
      %15 = sbr.rel (0) target = $region5
    $region4: #{tpu_custom_call.1} parent=1 // pred_region
      _
    $region5: #{tpu_custom_call.1} parent=1 // pred_fallthru
      _
    // Predicated region
    $region6: #{tpu_custom_call.1} parent=1 // pred_check
      _
    $region7: #{tpu_custom_call.1} parent=1 // pred_check_branch
      %17 = sbr.rel (0) target = $region9
    $region8: #{tpu_custom_call.1} parent=1 // pred_region
      _
    $region9: #{tpu_custom_call.1} parent=1 // pred_fallthru
      _
    // Predicated region
    $region10: #{tpu_custom_call.1} parent=1 // pred_check
      _
    $region11: #{tpu_custom_call.1} parent=1 // pred_check_branch
      %19 = sbr.rel (0) target = $region13
    $region12: #{tpu_custom_call.1} parent=1 // pred_region
      %s21 = ssub.s32 8192, 8192
      %22 = vsyncadd [#allocation5], %s21
      %s23 = sshll.u32 [#allocation4], 4
      %s24 = int_to_ptr.vmem [resolvable:$true] %s23
      %29 = dma.hbm_to_vmem [thread:$0]  %s2, 8192, %s24, [#allocation5], 512, 512, 32
    $region13: #{tpu_custom_call.1} parent=1 // pred_fallthru
      _
    // Predicated region
    $region14: #{tpu_custom_call.1} parent=1 // pred_check
      _
    $region15: #{tpu_custom_call.1} parent=1 // pred_check_branch
      %31 = sbr.rel (0) target = $region17
    $region16: #{tpu_custom_call.1} parent=1 // pred_region
      _
    $region17: #{tpu_custom_call.1} parent=1 // pred_fallthru
      _
    // Predicated region
    $region18: #{tpu_custom_call.1} parent=1 // pred_check
      _
    $region19: #{tpu_custom_call.1} parent=1 // pred_check_branch
      %33 = sbr.rel (0) target = $region21
    $region20: #{tpu_custom_call.1} parent=1 // pred_region
      %s35 = ssub.s32 2048, 2048
      %36 = vsyncadd [#allocation8], %s35
      %s37 = sshll.u32 [#allocation7], 4
      %s38 = int_to_ptr.vmem [resolvable:$true] %s37
      %43 = dma.hbm_to_vmem [thread:$0]  %s4, 2048, %s38, [#allocation8], 128, 128, 8
    $region21: #{tpu_custom_call.1} parent=1 // pred_fallthru
      _
    // Predicated region
    $region22: #{tpu_custom_call.1} parent=1 // pred_check
      _
    $region23: #{tpu_custom_call.1} parent=1 // pred_check_branch
      %45 = sbr.rel (0) target = $region25
    $region24: #{tpu_custom_call.1} parent=1 // pred_region
      _
    $region25: #{tpu_custom_call.1} parent=1 // pred_fallthru
      _
    // Predicated region
    $region26: #{tpu_custom_call.1} parent=1 // pred_check
      _
    $region27: #{tpu_custom_call.1} parent=1 // pred_check_branch
      %47 = sbr.rel (0) target = $region29
    $region28: #{tpu_custom_call.1} parent=1 // pred_region
      %48 = dma.done [#allocation5], 8192
    $region29: #{tpu_custom_call.1} parent=1 // pred_fallthru
      _
    // Predicated region
    $region30: #{tpu_custom_call.1} parent=1 // pred_check
      _
    $region31: #{tpu_custom_call.1} parent=1 // pred_check_branch
      %50 = sbr.rel (0) target = $region33
    $region32: #{tpu_custom_call.1} parent=1 // pred_region
      %51 = dma.done [#allocation8], 2048
    $region33: #{tpu_custom_call.1} parent=1 // pred_fallthru
      _
    %v52 = vld [vmem:[%s0] sm:$0xff]
    %v53 = vld [vmem:[%s0 + $0x8] sm:$0xff]
    %v54 = vld [vmem:[%s0 + $0x10] sm:$0xff]
    %v55 = vld [vmem:[%s0 + $0x18] sm:$0xff]
    %v56 = vld [vmem:[%s0 + $0x20] sm:$0xff]
    %v57 = vld [vmem:[%s0 + $0x28] sm:$0xff]
    %v58 = vld [vmem:[%s0 + $0x30] sm:$0xff]
    %v59 = vld [vmem:[%s0 + $0x38] sm:$0xff]
    %v60 = vld [vmem:[%s1] sm:$0xff]
    %v61 = vld [vmem:[%s1 + $0x8] sm:$0xff]
    %v62 = vld [vmem:[%s1 + $0x10] sm:$0xff]
    %v63 = vld [vmem:[%s1 + $0x18] sm:$0xff]
    %v64 = vld [vmem:[%s1 + $0x20] sm:$0xff]
    %v65 = vld [vmem:[%s1 + $0x28] sm:$0xff]
    %v66 = vld [vmem:[%s1 + $0x30] sm:$0xff]
    %v67 = vld [vmem:[%s1 + $0x38] sm:$0xff]
    %v68 = vld [vmem:[%s3] sm:$0xf]
    %v70 = vlaneseq
    %v71 = vshrl.u32 %v70, 7
    %v72 = vsub.s32 0, %v71
    %v73 = vrot.slane %v68, %v72
    %v74 = vlaneseq
    %v75 = vshrl.u32 %v74, 7
    %v76 = vsub.s32 1, %v75
    %v77 = vrot.slane %v68, %v76
    %v78 = vlaneseq
    %v79 = vshrl.u32 %v78, 7
    %v80 = vsub.s32 2, %v79
    %v81 = vrot.slane %v68, %v80
    %v82 = vlaneseq
    %v83 = vshrl.u32 %v82, 7
    %v84 = vsub.s32 3, %v83
    %v85 = vrot.slane %v68, %v84
    %vm90 = vcmask 130048
    %v92 = vsel %vm90, %v52, 0
    %v95 = vsel %vm90, %v53, 0
    %v98 = vsel %vm90, %v54, 0
    %v101 = vsel %vm90, %v55, 0
    %v104 = vsel %vm90, %v56, 0
    %v107 = vsel %vm90, %v57, 0
    %v110 = vsel %vm90, %v58, 0
    %v113 = vsel %vm90, %v59, 0
    %115 = vmatprep.subr.mxu0 %v61
    %116 = vmatpush1.msra.mxu0 %v60
    %117 = vmatprep.subr.mxu0 %v65
    %118 = vmatpush1.msra.mxu0 %v64
    %119 = vmatprep.subr.mxu0 0.0
    %120 = vmatpush1.msra.mxu0 0.0
    %121 = vmatprep.subr.mxu0 0.0
    %122 = vmatpush1.msra.mxu0 0.0
    %123 = vmatprep.subr.mxu0 0.0
    %124 = vmatpush1.msra.mxu0 0.0
    %125 = vmatprep.subr.mxu0 0.0
    %126 = vmatpush1.msra.mxu0 0.0
    %127 = vmatprep.subr.mxu0 0.0
    %128 = vmatpush1.msra.mxu0 0.0
    %129 = vmatprep.subr.mxu0 0.0
    %130 = vmatpush1.msra.mxu0 0.0
    %131 = vmatprep.subr.mxu0 0.0
    %132 = vmatpush1.msra.mxu0 0.0
    %133 = vmatprep.subr.mxu0 0.0
    %134 = vmatpush1.msra.mxu0 0.0
    %135 = vmatprep.subr.mxu0 0.0
    %136 = vmatpush1.msra.mxu0 0.0
    %137 = vmatprep.subr.mxu0 0.0
    %138 = vmatpush1.msra.mxu0 0.0
    %139 = vmatprep.subr.mxu0 0.0
    %140 = vmatpush1.msra.mxu0 0.0
    %141 = vmatprep.subr.mxu0 0.0
    %142 = vmatpush1.msra.mxu0 0.0
    %143 = vmatprep.subr.mxu0 0.0
    %144 = vmatpush1.msra.mxu0 0.0
    %145 = vmatprep.subr.mxu0 0.0
    %146 = vmatpush1.msra.mxu0 0.0
    %147 = vmatprep.subr.mxu0 0.0
    %148 = vmatpush1.msra.mxu0 0.0
    %149 = vmatprep.subr.mxu0 0.0
    %150 = vmatpush1.msra.mxu0 0.0
    %151 = vmatprep.subr.mxu0 0.0
    %152 = vmatpush1.msra.mxu0 0.0
    %153 = vmatprep.subr.mxu0 0.0
    %154 = vmatpush1.msra.mxu0 0.0
    %155 = vmatprep.subr.mxu0 0.0
    %156 = vmatpush1.msra.mxu0 0.0
    %157 = vmatprep.subr.mxu0 0.0
    %158 = vmatpush1.msra.mxu0 0.0
    %159 = vmatprep.subr.mxu0 0.0
    %160 = vmatpush1.msra.mxu0 0.0
    %161 = vmatprep.subr.mxu0 0.0
    %162 = vmatpush1.msra.mxu0 0.0
    %163 = vmatprep.subr.mxu0 0.0
    %164 = vmatpush1.msra.mxu0 0.0
    %165 = vmatprep.subr.mxu0 0.0
    %166 = vmatpush1.msra.mxu0 0.0
    %167 = vmatprep.subr.mxu0 0.0
    %168 = vmatpush1.msra.mxu0 0.0
    %169 = vmatprep.subr.mxu0 0.0
    %170 = vmatpush1.msra.mxu0 0.0
    %171 = vmatprep.subr.mxu0 0.0
    %172 = vmatpush1.msra.mxu0 0.0
    %173 = vmatprep.subr.mxu0 0.0
    %174 = vmatpush1.msra.mxu0 0.0
    %175 = vmatprep.subr.mxu0 0.0
    %176 = vmatpush1.msra.mxu0 0.0
    %177 = vmatprep.subr.mxu0 0.0
    %178 = vmatpush1.msra.mxu0 0.0
    %179 = vmatprep.mubr.f32.mxu0 0.0
    %180 = vmatmul.mubr.f32.gmra.mrb[0].mxu0 %v92
    %v181 = vpop.f32.mrb[0].mxu0
    %v182 = vadd.f32 %v73, %v181
    %v183 = vpop.f32.mrb[0].mxu0
    %v184 = vadd.f32 %v77, %v183
    %185 = vmatprep.mubr.f32.mxu0 0.0
    %186 = vmatmul.mubr.f32.gmra.mrb[0].mxu0 %v95
    %v187 = vpop.f32.mrb[0].mxu0
    %v188 = vadd.f32 %v73, %v187
    %v189 = vpop.f32.mrb[0].mxu0
    %v190 = vadd.f32 %v77, %v189
    %191 = vmatprep.mubr.f32.mxu0 0.0
    %192 = vmatmul.mubr.f32.gmra.mrb[0].mxu0 %v98
    %v193 = vpop.f32.mrb[0].mxu0
    %v194 = vadd.f32 %v73, %v193
    %v195 = vpop.f32.mrb[0].mxu0
    %v196 = vadd.f32 %v77, %v195
    %197 = vmatprep.mubr.f32.mxu0 0.0
    %198 = vmatmul.mubr.f32.gmra.mrb[0].mxu0 %v101
    %v199 = vpop.f32.mrb[0].mxu0
    %v200 = vadd.f32 %v73, %v199
    %v201 = vpop.f32.mrb[0].mxu0
    %v202 = vadd.f32 %v77, %v201
    %203 = vmatprep.mubr.f32.mxu0 0.0
    %204 = vmatmul.mubr.f32.gmra.mrb[0].mxu0 %v104
    %v205 = vpop.f32.mrb[0].mxu0
    %v206 = vadd.f32 %v73, %v205
    %v207 = vpop.f32.mrb[0].mxu0
    %v208 = vadd.f32 %v77, %v207
    %209 = vmatprep.mubr.f32.mxu0 0.0
    %210 = vmatmul.mubr.f32.gmra.mrb[0].mxu0 %v107
    %v211 = vpop.f32.mrb[0].mxu0
    %v212 = vadd.f32 %v73, %v211
    %v213 = vpop.f32.mrb[0].mxu0
    %v214 = vadd.f32 %v77, %v213
    %215 = vmatprep.mubr.f32.mxu0 0.0
    %216 = vmatmul.mubr.f32.gmra.mrb[0].mxu0 %v110
    %v217 = vpop.f32.mrb[0].mxu0
    %v218 = vadd.f32 %v73, %v217
    %v219 = vpop.f32.mrb[0].mxu0
    %v220 = vadd.f32 %v77, %v219
    %221 = vmatprep.mubr.f32.mxu0 0.0
    %222 = vmatmul.mubr.f32.gmra.mrb[0].mxu0 %v113
    %v223 = vpop.f32.mrb[0].mxu0
    %v224 = vadd.f32 %v73, %v223
    %v225 = vpop.f32.mrb[0].mxu0
    %v226 = vadd.f32 %v77, %v225
    %227 = vdwg.mxu0
    %228 = vmatprep.subr.mxu0 %v63
    %229 = vmatpush1.msra.mxu0 %v62
    %230 = vmatprep.subr.mxu0 %v67
    %231 = vmatpush1.msra.mxu0 %v66
    %232 = vmatprep.subr.mxu0 0.0
    %233 = vmatpush1.msra.mxu0 0.0
    %234 = vmatprep.subr.mxu0 0.0
    %235 = vmatpush1.msra.mxu0 0.0
    %236 = vmatprep.subr.mxu0 0.0
    %237 = vmatpush1.msra.mxu0 0.0
    %238 = vmatprep.subr.mxu0 0.0
    %239 = vmatpush1.msra.mxu0 0.0
    %240 = vmatprep.subr.mxu0 0.0
    %241 = vmatpush1.msra.mxu0 0.0
    %242 = vmatprep.subr.mxu0 0.0
    %243 = vmatpush1.msra.mxu0 0.0
    %244 = vmatprep.subr.mxu0 0.0
    %245 = vmatpush1.msra.mxu0 0.0
    %246 = vmatprep.subr.mxu0 0.0
    %247 = vmatpush1.msra.mxu0 0.0
    %248 = vmatprep.subr.mxu0 0.0
    %249 = vmatpush1.msra.mxu0 0.0
    %250 = vmatprep.subr.mxu0 0.0
    %251 = vmatpush1.msra.mxu0 0.0
    %252 = vmatprep.subr.mxu0 0.0
    %253 = vmatpush1.msra.mxu0 0.0
    %254 = vmatprep.subr.mxu0 0.0
    %255 = vmatpush1.msra.mxu0 0.0
    %256 = vmatprep.subr.mxu0 0.0
    %257 = vmatpush1.msra.mxu0 0.0
    %258 = vmatprep.subr.mxu0 0.0
    %259 = vmatpush1.msra.mxu0 0.0
    %260 = vmatprep.subr.mxu0 0.0
    %261 = vmatpush1.msra.mxu0 0.0
    %262 = vmatprep.subr.mxu0 0.0
    %263 = vmatpush1.msra.mxu0 0.0
    %264 = vmatprep.subr.mxu0 0.0
    %265 = vmatpush1.msra.mxu0 0.0
    %266 = vmatprep.subr.mxu0 0.0
    %267 = vmatpush1.msra.mxu0 0.0
    %268 = vmatprep.subr.mxu0 0.0
    %269 = vmatpush1.msra.mxu0 0.0
    %270 = vmatprep.subr.mxu0 0.0
    %271 = vmatpush1.msra.mxu0 0.0
    %272 = vmatprep.subr.mxu0 0.0
    %273 = vmatpush1.msra.mxu0 0.0
    %274 = vmatprep.subr.mxu0 0.0
    %275 = vmatpush1.msra.mxu0 0.0
    %276 = vmatprep.subr.mxu0 0.0
    %277 = vmatpush1.msra.mxu0 0.0
    %278 = vmatprep.subr.mxu0 0.0
    %279 = vmatpush1.msra.mxu0 0.0
    %280 = vmatprep.subr.mxu0 0.0
    %281 = vmatpush1.msra.mxu0 0.0
    %282 = vmatprep.subr.mxu0 0.0
    %283 = vmatpush1.msra.mxu0 0.0
    %284 = vmatprep.subr.mxu0 0.0
    %285 = vmatpush1.msra.mxu0 0.0
    %286 = vmatprep.subr.mxu0 0.0
    %287 = vmatpush1.msra.mxu0 0.0
    %288 = vmatprep.subr.mxu0 0.0
    %289 = vmatpush1.msra.mxu0 0.0
    %290 = vmatprep.subr.mxu0 0.0
    %291 = vmatpush1.msra.mxu0 0.0
    %292 = vmatprep.mubr.f32.mxu0 0.0
    %293 = vmatmul.mubr.f32.gmra.mrb[0].mxu0 %v92
    %v294 = vpop.f32.mrb[0].mxu0
    %v295 = vadd.f32 %v81, %v294
    %v296 = vpop.f32.mrb[0].mxu0
    %v297 = vadd.f32 %v85, %v296
    %298 = vmatprep.mubr.f32.mxu0 0.0
    %299 = vmatmul.mubr.f32.gmra.mrb[0].mxu0 %v95
    %v300 = vpop.f32.mrb[0].mxu0
    %v301 = vadd.f32 %v81, %v300
    %v302 = vpop.f32.mrb[0].mxu0
    %v303 = vadd.f32 %v85, %v302
    %304 = vmatprep.mubr.f32.mxu0 0.0
    %305 = vmatmul.mubr.f32.gmra.mrb[0].mxu0 %v98
    %v306 = vpop.f32.mrb[0].mxu0
    %v307 = vadd.f32 %v81, %v306
    %v308 = vpop.f32.mrb[0].mxu0
    %v309 = vadd.f32 %v85, %v308
    %310 = vmatprep.mubr.f32.mxu0 0.0
    %311 = vmatmul.mubr.f32.gmra.mrb[0].mxu0 %v101
    %v312 = vpop.f32.mrb[0].mxu0
    %v313 = vadd.f32 %v81, %v312
    %v314 = vpop.f32.mrb[0].mxu0
    %v315 = vadd.f32 %v85, %v314
    %316 = vmatprep.mubr.f32.mxu0 0.0
    %317 = vmatmul.mubr.f32.gmra.mrb[0].mxu0 %v104
    %v318 = vpop.f32.mrb[0].mxu0
    %v319 = vadd.f32 %v81, %v318
    %v320 = vpop.f32.mrb[0].mxu0
    %v321 = vadd.f32 %v85, %v320
    %322 = vmatprep.mubr.f32.mxu0 0.0
    %323 = vmatmul.mubr.f32.gmra.mrb[0].mxu0 %v107
    %v324 = vpop.f32.mrb[0].mxu0
    %v325 = vadd.f32 %v81, %v324
    %v326 = vpop.f32.mrb[0].mxu0
    %v327 = vadd.f32 %v85, %v326
    %328 = vmatprep.mubr.f32.mxu0 0.0
    %329 = vmatmul.mubr.f32.gmra.mrb[0].mxu0 %v110
    %v330 = vpop.f32.mrb[0].mxu0
    %v331 = vadd.f32 %v81, %v330
    %v332 = vpop.f32.mrb[0].mxu0
    %v333 = vadd.f32 %v85, %v332
    %334 = vmatprep.mubr.f32.mxu0 0.0
    %335 = vmatmul.mubr.f32.gmra.mrb[0].mxu0 %v113
    %v336 = vpop.f32.mrb[0].mxu0
    %v337 = vadd.f32 %v81, %v336
    %v338 = vpop.f32.mrb[0].mxu0
    %v339 = vadd.f32 %v85, %v338
    %340 = vdwg.mxu0
    %341 = vst [vmem:[#allocation2] sm:$0xff] %v182
    %342 = vst [vmem:[#allocation2 + $0x8] sm:$0xff] %v184
    %343 = vst [vmem:[#allocation2 + $0x10] sm:$0xff] %v295
    %344 = vst [vmem:[#allocation2 + $0x18] sm:$0xff] %v297
    %345 = vst [vmem:[#allocation2 + $0x20] sm:$0xff] %v188
    %346 = vst [vmem:[#allocation2 + $0x28] sm:$0xff] %v190
    %347 = vst [vmem:[#allocation2 + $0x30] sm:$0xff] %v301
    %348 = vst [vmem:[#allocation2 + $0x38] sm:$0xff] %v303
    %349 = vst [vmem:[#allocation2 + $0x40] sm:$0xff] %v194
    %350 = vst [vmem:[#allocation2 + $0x48] sm:$0xff] %v196
    %351 = vst [vmem:[#allocation2 + $0x50] sm:$0xff] %v307
    %352 = vst [vmem:[#allocation2 + $0x58] sm:$0xff] %v309
    %353 = vst [vmem:[#allocation2 + $0x60] sm:$0xff] %v200
    %354 = vst [vmem:[#allocation2 + $0x68] sm:$0xff] %v202
    %355 = vst [vmem:[#allocation2 + $0x70] sm:$0xff] %v313
    %356 = vst [vmem:[#allocation2 + $0x78] sm:$0xff] %v315
    %357 = vst [vmem:[#allocation2 + $0x80] sm:$0xff] %v206
    %358 = vst [vmem:[#allocation2 + $0x88] sm:$0xff] %v208
    %359 = vst [vmem:[#allocation2 + $0x90] sm:$0xff] %v319
    %360 = vst [vmem:[#allocation2 + $0x98] sm:$0xff] %v321
    %361 = vst [vmem:[#allocation2 + $0xa0] sm:$0xff] %v212
    %362 = vst [vmem:[#allocation2 + $0xa8] sm:$0xff] %v214
    %363 = vst [vmem:[#allocation2 + $0xb0] sm:$0xff] %v325
    %364 = vst [vmem:[#allocation2 + $0xb8] sm:$0xff] %v327
    %365 = vst [vmem:[#allocation2 + $0xc0] sm:$0xff] %v218
    %366 = vst [vmem:[#allocation2 + $0xc8] sm:$0xff] %v220
    %367 = vst [vmem:[#allocation2 + $0xd0] sm:$0xff] %v331
    %368 = vst [vmem:[#allocation2 + $0xd8] sm:$0xff] %v333
    %369 = vst [vmem:[#allocation2 + $0xe0] sm:$0xff] %v224
    %370 = vst [vmem:[#allocation2 + $0xe8] sm:$0xff] %v226
    %371 = vst [vmem:[#allocation2 + $0xf0] sm:$0xff] %v337
    %372 = vst [vmem:[#allocation2 + $0xf8] sm:$0xff] %v339
    %s373 = smul.u32 0, 4
    %s374 = smul.addr %s373, 8
    %s375 = scalar_lea.vmem [#allocation2], %s374
    %v376 = vld [vmem:[%s375] sm:$0xff]
    %v377 = vld [vmem:[%s375 + $0x8] sm:$0xff]
    %v378 = vld [vmem:[%s375 + $0x10] sm:$0xff]
    %v379 = vld [vmem:[%s375 + $0x18] sm:$0xff]
    %v380 = vld [vmem:[#allocation4] sm:$0xff]
    %v381 = vld [vmem:[#allocation4 + $0x8] sm:$0xff]
    %v382 = vld [vmem:[#allocation4 + $0x10] sm:$0xff]
    %v383 = vld [vmem:[#allocation4 + $0x18] sm:$0xff]
    %v384 = vld [vmem:[#allocation4 + $0x20] sm:$0xff]
    %v385 = vld [vmem:[#allocation4 + $0x28] sm:$0xff]
    %v386 = vld [vmem:[#allocation4 + $0x30] sm:$0xff]
    %v387 = vld [vmem:[#allocation4 + $0x38] sm:$0xff]
    %v388 = vld [vmem:[#allocation4 + $0x40] sm:$0xff]
    %v389 = vld [vmem:[#allocation4 + $0x48] sm:$0xff]
    %v390 = vld [vmem:[#allocation4 + $0x50] sm:$0xff]
    %v391 = vld [vmem:[#allocation4 + $0x58] sm:$0xff]
    %v392 = vld [vmem:[#allocation4 + $0x60] sm:$0xff]
    %v393 = vld [vmem:[#allocation4 + $0x68] sm:$0xff]
    %v394 = vld [vmem:[#allocation4 + $0x70] sm:$0xff]
    %v395 = vld [vmem:[#allocation4 + $0x78] sm:$0xff]
    %v396 = vld [vmem:[#allocation4 + $0x80] sm:$0xff]
    %v397 = vld [vmem:[#allocation4 + $0x88] sm:$0xff]
    %v398 = vld [vmem:[#allocation4 + $0x90] sm:$0xff]
    %v399 = vld [vmem:[#allocation4 + $0x98] sm:$0xff]
    %v400 = vld [vmem:[#allocation4 + $0xa0] sm:$0xff]
    %v401 = vld [vmem:[#allocation4 + $0xa8] sm:$0xff]
    %v402 = vld [vmem:[#allocation4 + $0xb0] sm:$0xff]
    %v403 = vld [vmem:[#allocation4 + $0xb8] sm:$0xff]
    %v404 = vld [vmem:[#allocation4 + $0xc0] sm:$0xff]
    %v405 = vld [vmem:[#allocation4 + $0xc8] sm:$0xff]
    %v406 = vld [vmem:[#allocation4 + $0xd0] sm:$0xff]
    %v407 = vld [vmem:[#allocation4 + $0xd8] sm:$0xff]
    %v408 = vld [vmem:[#allocation4 + $0xe0] sm:$0xff]
    %v409 = vld [vmem:[#allocation4 + $0xe8] sm:$0xff]
    %v410 = vld [vmem:[#allocation4 + $0xf0] sm:$0xff]
    %v411 = vld [vmem:[#allocation4 + $0xf8] sm:$0xff]
    %v412 = vld [vmem:[#allocation4 + $0x100] sm:$0xff]
    %v413 = vld [vmem:[#allocation4 + $0x108] sm:$0xff]
    %v414 = vld [vmem:[#allocation4 + $0x110] sm:$0xff]
    %v415 = vld [vmem:[#allocation4 + $0x118] sm:$0xff]
    %v416 = vld [vmem:[#allocation4 + $0x120] sm:$0xff]
    %v417 = vld [vmem:[#allocation4 + $0x128] sm:$0xff]
    %v418 = vld [vmem:[#allocation4 + $0x130] sm:$0xff]
    %v419 = vld [vmem:[#allocation4 + $0x138] sm:$0xff]
    %v420 = vld [vmem:[#allocation4 + $0x140] sm:$0xff]
    %v421 = vld [vmem:[#allocation4 + $0x148] sm:$0xff]
    %v422 = vld [vmem:[#allocation4 + $0x150] sm:$0xff]
    %v423 = vld [vmem:[#allocation4 + $0x158] sm:$0xff]
    %v424 = vld [vmem:[#allocation4 + $0x160] sm:$0xff]
    %v425 = vld [vmem:[#allocation4 + $0x168] sm:$0xff]
    %v426 = vld [vmem:[#allocation4 + $0x170] sm:$0xff]
    %v427 = vld [vmem:[#allocation4 + $0x178] sm:$0xff]
    %v428 = vld [vmem:[#allocation4 + $0x180] sm:$0xff]
    %v429 = vld [vmem:[#allocation4 + $0x188] sm:$0xff]
    %v430 = vld [vmem:[#allocation4 + $0x190] sm:$0xff]
    %v431 = vld [vmem:[#allocation4 + $0x198] sm:$0xff]
    %v432 = vld [vmem:[#allocation4 + $0x1a0] sm:$0xff]
    %v433 = vld [vmem:[#allocation4 + $0x1a8] sm:$0xff]
    %v434 = vld [vmem:[#allocation4 + $0x1b0] sm:$0xff]
    %v435 = vld [vmem:[#allocation4 + $0x1b8] sm:$0xff]
    %v436 = vld [vmem:[#allocation4 + $0x1c0] sm:$0xff]
    %v437 = vld [vmem:[#allocation4 + $0x1c8] sm:$0xff]
    %v438 = vld [vmem:[#allocation4 + $0x1d0] sm:$0xff]
    %v439 = vld [vmem:[#allocation4 + $0x1d8] sm:$0xff]
    %v440 = vld [vmem:[#allocation4 + $0x1e0] sm:$0xff]
    %v441 = vld [vmem:[#allocation4 + $0x1e8] sm:$0xff]
    %v442 = vld [vmem:[#allocation4 + $0x1f0] sm:$0xff]
    %v443 = vld [vmem:[#allocation4 + $0x1f8] sm:$0xff]
    %444 = vmatprep.subr.mxu0 %v381
    %445 = vmatpush1.msra.mxu0 %v380
    %446 = vmatprep.subr.mxu0 %v385
    %447 = vmatpush1.msra.mxu0 %v384
    %448 = vmatprep.subr.mxu0 %v389
    %449 = vmatpush1.msra.mxu0 %v388
    %450 = vmatprep.subr.mxu0 %v393
    %451 = vmatpush1.msra.mxu0 %v392
    %452 = vmatprep.subr.mxu0 %v397
    %453 = vmatpush1.msra.mxu0 %v396
    %454 = vmatprep.subr.mxu0 %v401
    %455 = vmatpush1.msra.mxu0 %v400
    %456 = vmatprep.subr.mxu0 %v405
    %457 = vmatpush1.msra.mxu0 %v404
    %458 = vmatprep.subr.mxu0 %v409
    %459 = vmatpush1.msra.mxu0 %v408
    %460 = vmatprep.subr.mxu0 %v413
    %461 = vmatpush1.msra.mxu0 %v412
    %462 = vmatprep.subr.mxu0 %v417
    %463 = vmatpush1.msra.mxu0 %v416
    %464 = vmatprep.subr.mxu0 %v421
    %465 = vmatpush1.msra.mxu0 %v420
    %466 = vmatprep.subr.mxu0 %v425
    %467 = vmatpush1.msra.mxu0 %v424
    %468 = vmatprep.subr.mxu0 %v429
    %469 = vmatpush1.msra.mxu0 %v428
    %470 = vmatprep.subr.mxu0 %v433
    %471 = vmatpush1.msra.mxu0 %v432
    %472 = vmatprep.subr.mxu0 %v437
    %473 = vmatpush1.msra.mxu0 %v436
    %474 = vmatprep.subr.mxu0 %v441
    %475 = vmatpush1.msra.mxu0 %v440
    %476 = vmatprep.subr.mxu0 0.0
    %477 = vmatpush1.msra.mxu0 0.0
    %478 = vmatprep.subr.mxu0 0.0
    %479 = vmatpush1.msra.mxu0 0.0
    %480 = vmatprep.subr.mxu0 0.0
    %481 = vmatpush1.msra.mxu0 0.0
    %482 = vmatprep.subr.mxu0 0.0
    %483 = vmatpush1.msra.mxu0 0.0
    %484 = vmatprep.subr.mxu0 0.0
    %485 = vmatpush1.msra.mxu0 0.0
    %486 = vmatprep.subr.mxu0 0.0
    %487 = vmatpush1.msra.mxu0 0.0
    %488 = vmatprep.subr.mxu0 0.0
    %489 = vmatpush1.msra.mxu0 0.0
    %490 = vmatprep.subr.mxu0 0.0
    %491 = vmatpush1.msra.mxu0 0.0
    %492 = vmatprep.subr.mxu0 0.0
    %493 = vmatpush1.msra.mxu0 0.0
    %494 = vmatprep.subr.mxu0 0.0
    %495 = vmatpush1.msra.mxu0 0.0
    %496 = vmatprep.subr.mxu0 0.0
    %497 = vmatpush1.msra.mxu0 0.0
    %498 = vmatprep.subr.mxu0 0.0
    %499 = vmatpush1.msra.mxu0 0.0
    %500 = vmatprep.subr.mxu0 0.0
    %501 = vmatpush1.msra.mxu0 0.0
    %502 = vmatprep.subr.mxu0 0.0
    %503 = vmatpush1.msra.mxu0 0.0
    %504 = vmatprep.subr.mxu0 0.0
    %505 = vmatpush1.msra.mxu0 0.0
    %506 = vmatprep.subr.mxu0 0.0
    %507 = vmatpush1.msra.mxu0 0.0
    %508 = vmatprep.mubr.f32.mxu0 0.0
    %509 = vmatmul.mubr.f32.gmra.mrb[0].mxu0 0.0
    %v510 = vpop.f32.mrb[0].mxu0
    %v511 = vadd.f32 0.0, %v510
    %v512 = vpop.f32.mrb[0].mxu0
    %v513 = vadd.f32 0.0, %v512
    %514 = vdwg.mxu0
    %515 = vmatprep.subr.mxu0 %v383
    %516 = vmatpush1.msra.mxu0 %v382
    %517 = vmatprep.subr.mxu0 %v387
    %518 = vmatpush1.msra.mxu0 %v386
    %519 = vmatprep.subr.mxu0 %v391
    %520 = vmatpush1.msra.mxu0 %v390
    %521 = vmatprep.subr.mxu0 %v395
    %522 = vmatpush1.msra.mxu0 %v394
    %523 = vmatprep.subr.mxu0 %v399
    %524 = vmatpush1.msra.mxu0 %v398
    %525 = vmatprep.subr.mxu0 %v403
    %526 = vmatpush1.msra.mxu0 %v402
    %527 = vmatprep.subr.mxu0 %v407
    %528 = vmatpush1.msra.mxu0 %v406
    %529 = vmatprep.subr.mxu0 %v411
    %530 = vmatpush1.msra.mxu0 %v410
    %531 = vmatprep.subr.mxu0 %v415
    %532 = vmatpush1.msra.mxu0 %v414
    %533 = vmatprep.subr.mxu0 %v419
    %534 = vmatpush1.msra.mxu0 %v418
    %535 = vmatprep.subr.mxu0 %v423
    %536 = vmatpush1.msra.mxu0 %v422
    %537 = vmatprep.subr.mxu0 %v427
    %538 = vmatpush1.msra.mxu0 %v426
    %539 = vmatprep.subr.mxu0 %v431
    %540 = vmatpush1.msra.mxu0 %v430
    %541 = vmatprep.subr.mxu0 %v435
    %542 = vmatpush1.msra.mxu0 %v434
    %543 = vmatprep.subr.mxu0 %v439
    %544 = vmatpush1.msra.mxu0 %v438
    %545 = vmatprep.subr.mxu0 %v443
    %546 = vmatpush1.msra.mxu0 %v442
    %547 = vmatprep.subr.mxu0 0.0
    %548 = vmatpush1.msra.mxu0 0.0
    %549 = vmatprep.subr.mxu0 0.0
    %550 = vmatpush1.msra.mxu0 0.0
    %551 = vmatprep.subr.mxu0 0.0
    %552 = vmatpush1.msra.mxu0 0.0
    %553 = vmatprep.subr.mxu0 0.0
    %554 = vmatpush1.msra.mxu0 0.0
    %555 = vmatprep.subr.mxu0 0.0
    %556 = vmatpush1.msra.mxu0 0.0
    %557 = vmatprep.subr.mxu0 0.0
    %558 = vmatpush1.msra.mxu0 0.0
    %559 = vmatprep.subr.mxu0 0.0
    %560 = vmatpush1.msra.mxu0 0.0
    %561 = vmatprep.subr.mxu0 0.0
    %562 = vmatpush1.msra.mxu0 0.0
    %563 = vmatprep.subr.mxu0 0.0
    %564 = vmatpush1.msra.mxu0 0.0
    %565 = vmatprep.subr.mxu0 0.0
    %566 = vmatpush1.msra.mxu0 0.0
    %567 = vmatprep.subr.mxu0 0.0
    %568 = vmatpush1.msra.mxu0 0.0
    %569 = vmatprep.subr.mxu0 0.0
    %570 = vmatpush1.msra.mxu0 0.0
    %571 = vmatprep.subr.mxu0 0.0
    %572 = vmatpush1.msra.mxu0 0.0
    %573 = vmatprep.subr.mxu0 0.0
    %574 = vmatpush1.msra.mxu0 0.0
    %575 = vmatprep.subr.mxu0 0.0
    %576 = vmatpush1.msra.mxu0 0.0
    %577 = vmatprep.subr.mxu0 0.0
    %578 = vmatpush1.msra.mxu0 0.0
    %579 = vmatprep.mubr.f32.mxu0 0.0
    %580 = vmatmul.mubr.f32.gmra.mrb[0].mxu0 0.0
    %v581 = vpop.f32.mrb[0].mxu0
    %v582 = vadd.f32 0.0, %v581
    %v583 = vpop.f32.mrb[0].mxu0
    %v584 = vadd.f32 0.0, %v583
    %585 = vdwg.mxu0
    %v586 = vadd.f32 %v376, %v511
    %v587 = vadd.f32 %v377, %v513
    %v588 = vadd.f32 %v378, %v582
    %v589 = vadd.f32 %v379, %v584
    %v590 = vxor.u32 %v586, 2147483648
    %v591 = vmul.f32 %v590, 1.442695
    %v592 = vpow.pop %v591
    %v593 = vadd.f32 %v592, 1.0
    %v594 = vrcp.pop %v593
    %v595 = vmul.f32 1.0, %v594
    %v596 = vxor.u32 %v587, 2147483648
    %v597 = vmul.f32 %v596, 1.442695
    %v598 = vpow.pop %v597
    %v599 = vadd.f32 %v598, 1.0
    %v600 = vrcp.pop %v599
    %v601 = vmul.f32 1.0, %v600
    %v602 = vtanh.pop %v588
    %v603 = vxor.u32 %v589, 2147483648
    %v604 = vmul.f32 %v603, 1.442695
    %v605 = vpow.pop %v604
    %v606 = vadd.f32 %v605, 1.0
    %v607 = vrcp.pop %v606
    %v608 = vmul.f32 1.0, %v607
    %v609 = vmul.f32 %v601, 0.0
    %v610 = vmul.f32 %v595, %v602
    %v611 = vadd.f32 %v609, %v610
    %v612 = vtanh.pop %v611
    %v613 = vmul.f32 %v608, %v612
    %614 = vst [vmem:[#allocation3] sm:$0xff] %v613
    %s615 = smul.u32 1, 4
    %s616 = smul.addr %s615, 8
    %s617 = scalar_lea.vmem [#allocation2], %s616
    %v618 = vld [vmem:[%s617] sm:$0xff]
    %v619 = vld [vmem:[%s617 + $0x8] sm:$0xff]
    %v620 = vld [vmem:[%s617 + $0x10] sm:$0xff]
    %v621 = vld [vmem:[%s617 + $0x18] sm:$0xff]
    %v622 = vld [vmem:[#allocation4] sm:$0xff]
    %v623 = vld [vmem:[#allocation4 + $0x8] sm:$0xff]
    %v624 = vld [vmem:[#allocation4 + $0x10] sm:$0xff]
    %v625 = vld [vmem:[#allocation4 + $0x18] sm:$0xff]
    %v626 = vld [vmem:[#allocation4 + $0x20] sm:$0xff]
    %v627 = vld [vmem:[#allocation4 + $0x28] sm:$0xff]
    %v628 = vld [vmem:[#allocation4 + $0x30] sm:$0xff]
    %v629 = vld [vmem:[#allocation4 + $0x38] sm:$0xff]
    %v630 = vld [vmem:[#allocation4 + $0x40] sm:$0xff]
    %v631 = vld [vmem:[#allocation4 + $0x48] sm:$0xff]
    %v632 = vld [vmem:[#allocation4 + $0x50] sm:$0xff]
    %v633 = vld [vmem:[#allocation4 + $0x58] sm:$0xff]
    %v634 = vld [vmem:[#allocation4 + $0x60] sm:$0xff]
    %v635 = vld [vmem:[#allocation4 + $0x68] sm:$0xff]
    %v636 = vld [vmem:[#allocation4 + $0x70] sm:$0xff]
    %v637 = vld [vmem:[#allocation4 + $0x78] sm:$0xff]
    %v638 = vld [vmem:[#allocation4 + $0x80] sm:$0xff]
    %v639 = vld [vmem:[#allocation4 + $0x88] sm:$0xff]
    %v640 = vld [vmem:[#allocation4 + $0x90] sm:$0xff]
    %v641 = vld [vmem:[#allocation4 + $0x98] sm:$0xff]
    %v642 = vld [vmem:[#allocation4 + $0xa0] sm:$0xff]
    %v643 = vld [vmem:[#allocation4 + $0xa8] sm:$0xff]
    %v644 = vld [vmem:[#allocation4 + $0xb0] sm:$0xff]
    %v645 = vld [vmem:[#allocation4 + $0xb8] sm:$0xff]
    %v646 = vld [vmem:[#allocation4 + $0xc0] sm:$0xff]
    %v647 = vld [vmem:[#allocation4 + $0xc8] sm:$0xff]
    %v648 = vld [vmem:[#allocation4 + $0xd0] sm:$0xff]
    %v649 = vld [vmem:[#allocation4 + $0xd8] sm:$0xff]
    %v650 = vld [vmem:[#allocation4 + $0xe0] sm:$0xff]
    %v651 = vld [vmem:[#allocation4 + $0xe8] sm:$0xff]
    %v652 = vld [vmem:[#allocation4 + $0xf0] sm:$0xff]
    %v653 = vld [vmem:[#allocation4 + $0xf8] sm:$0xff]
    %v654 = vld [vmem:[#allocation4 + $0x100] sm:$0xff]
    %v655 = vld [vmem:[#allocation4 + $0x108] sm:$0xff]
    %v656 = vld [vmem:[#allocation4 + $0x110] sm:$0xff]
    %v657 = vld [vmem:[#allocation4 + $0x118] sm:$0xff]
    %v658 = vld [vmem:[#allocation4 + $0x120] sm:$0xff]
    %v659 = vld [vmem:[#allocation4 + $0x128] sm:$0xff]
    %v660 = vld [vmem:[#allocation4 + $0x130] sm:$0xff]
    %v661 = vld [vmem:[#allocation4 + $0x138] sm:$0xff]
    %v662 = vld [vmem:[#allocation4 + $0x140] sm:$0xff]
    %v663 = vld [vmem:[#allocation4 + $0x148] sm:$0xff]
    %v664 = vld [vmem:[#allocation4 + $0x150] sm:$0xff]
    %v665 = vld [vmem:[#allocation4 + $0x158] sm:$0xff]
    %v666 = vld [vmem:[#allocation4 + $0x160] sm:$0xff]
    %v667 = vld [vmem:[#allocation4 + $0x168] sm:$0xff]
    %v668 = vld [vmem:[#allocation4 + $0x170] sm:$0xff]
    %v669 = vld [vmem:[#allocation4 + $0x178] sm:$0xff]
    %v670 = vld [vmem:[#allocation4 + $0x180] sm:$0xff]
    %v671 = vld [vmem:[#allocation4 + $0x188] sm:$0xff]
    %v672 = vld [vmem:[#allocation4 + $0x190] sm:$0xff]
    %v673 = vld [vmem:[#allocation4 + $0x198] sm:$0xff]
    %v674 = vld [vmem:[#allocation4 + $0x1a0] sm:$0xff]
    %v675 = vld [vmem:[#allocation4 + $0x1a8] sm:$0xff]
    %v676 = vld [vmem:[#allocation4 + $0x1b0] sm:$0xff]
    %v677 = vld [vmem:[#allocation4 + $0x1b8] sm:$0xff]
    %v678 = vld [vmem:[#allocation4 + $0x1c0] sm:$0xff]
    %v679 = vld [vmem:[#allocation4 + $0x1c8] sm:$0xff]
    %v680 = vld [vmem:[#allocation4 + $0x1d0] sm:$0xff]
    %v681 = vld [vmem:[#allocation4 + $0x1d8] sm:$0xff]
    %v682 = vld [vmem:[#allocation4 + $0x1e0] sm:$0xff]
    %v683 = vld [vmem:[#allocation4 + $0x1e8] sm:$0xff]
    %v684 = vld [vmem:[#allocation4 + $0x1f0] sm:$0xff]
    %v685 = vld [vmem:[#allocation4 + $0x1f8] sm:$0xff]
    %686 = vmatprep.subr.mxu0 %v623
    %687 = vmatpush1.msra.mxu0 %v622
    %688 = vmatprep.subr.mxu0 %v627
    %689 = vmatpush1.msra.mxu0 %v626
    %690 = vmatprep.subr.mxu0 %v631
    %691 = vmatpush1.msra.mxu0 %v630
    %692 = vmatprep.subr.mxu0 %v635
    %693 = vmatpush1.msra.mxu0 %v634
    %694 = vmatprep.subr.mxu0 %v639
    %695 = vmatpush1.msra.mxu0 %v638
    %696 = vmatprep.subr.mxu0 %v643
    %697 = vmatpush1.msra.mxu0 %v642
    %698 = vmatprep.subr.mxu0 %v647
    %699 = vmatpush1.msra.mxu0 %v646
    %700 = vmatprep.subr.mxu0 %v651
    %701 = vmatpush1.msra.mxu0 %v650
    %702 = vmatprep.subr.mxu0 %v655
    %703 = vmatpush1.msra.mxu0 %v654
    %704 = vmatprep.subr.mxu0 %v659
    %705 = vmatpush1.msra.mxu0 %v658
    %706 = vmatprep.subr.mxu0 %v663
    %707 = vmatpush1.msra.mxu0 %v662
    %708 = vmatprep.subr.mxu0 %v667
    %709 = vmatpush1.msra.mxu0 %v666
    %710 = vmatprep.subr.mxu0 %v671
    %711 = vmatpush1.msra.mxu0 %v670
    %712 = vmatprep.subr.mxu0 %v675
    %713 = vmatpush1.msra.mxu0 %v674
    %714 = vmatprep.subr.mxu0 %v679
    %715 = vmatpush1.msra.mxu0 %v678
    %716 = vmatprep.subr.mxu0 %v683
    %717 = vmatpush1.msra.mxu0 %v682
    %718 = vmatprep.subr.mxu0 0.0
    %719 = vmatpush1.msra.mxu0 0.0
    %720 = vmatprep.subr.mxu0 0.0
    %721 = vmatpush1.msra.mxu0 0.0
    %722 = vmatprep.subr.mxu0 0.0
    %723 = vmatpush1.msra.mxu0 0.0
    %724 = vmatprep.subr.mxu0 0.0
    %725 = vmatpush1.msra.mxu0 0.0
    %726 = vmatprep.subr.mxu0 0.0
    %727 = vmatpush1.msra.mxu0 0.0
    %728 = vmatprep.subr.mxu0 0.0
    %729 = vmatpush1.msra.mxu0 0.0
    %730 = vmatprep.subr.mxu0 0.0
    %731 = vmatpush1.msra.mxu0 0.0
    %732 = vmatprep.subr.mxu0 0.0
    %733 = vmatpush1.msra.mxu0 0.0
    %734 = vmatprep.subr.mxu0 0.0
    %735 = vmatpush1.msra.mxu0 0.0
    %736 = vmatprep.subr.mxu0 0.0
    %737 = vmatpush1.msra.mxu0 0.0
    %738 = vmatprep.subr.mxu0 0.0
    %739 = vmatpush1.msra.mxu0 0.0
    %740 = vmatprep.subr.mxu0 0.0
    %741 = vmatpush1.msra.mxu0 0.0
    %742 = vmatprep.subr.mxu0 0.0
    %743 = vmatpush1.msra.mxu0 0.0
    %744 = vmatprep.subr.mxu0 0.0
    %745 = vmatpush1.msra.mxu0 0.0
    %746 = vmatprep.subr.mxu0 0.0
    %747 = vmatpush1.msra.mxu0 0.0
    %748 = vmatprep.subr.mxu0 0.0
    %749 = vmatpush1.msra.mxu0 0.0
    %750 = vmatprep.mubr.f32.mxu0 0.0
    %751 = vmatmul.mubr.f32.gmra.mrb[0].mxu0 %v613
    %v752 = vpop.f32.mrb[0].mxu0
    %v753 = vadd.f32 0.0, %v752
    %v754 = vpop.f32.mrb[0].mxu0
    %v755 = vadd.f32 0.0, %v754
    %756 = vdwg.mxu0
    %757 = vmatprep.subr.mxu0 %v625
    %758 = vmatpush1.msra.mxu0 %v624
    %759 = vmatprep.subr.mxu0 %v629
    %760 = vmatpush1.msra.mxu0 %v628
    %761 = vmatprep.subr.mxu0 %v633
    %762 = vmatpush1.msra.mxu0 %v632
    %763 = vmatprep.subr.mxu0 %v637
    %764 = vmatpush1.msra.mxu0 %v636
    %765 = vmatprep.subr.mxu0 %v641
    %766 = vmatpush1.msra.mxu0 %v640
    %767 = vmatprep.subr.mxu0 %v645
    %768 = vmatpush1.msra.mxu0 %v644
    %769 = vmatprep.subr.mxu0 %v649
    %770 = vmatpush1.msra.mxu0 %v648
    %771 = vmatprep.subr.mxu0 %v653
    %772 = vmatpush1.msra.mxu0 %v652
    %773 = vmatprep.subr.mxu0 %v657
    %774 = vmatpush1.msra.mxu0 %v656
    %775 = vmatprep.subr.mxu0 %v661
    %776 = vmatpush1.msra.mxu0 %v660
    %777 = vmatprep.subr.mxu0 %v665
    %778 = vmatpush1.msra.mxu0 %v664
    %779 = vmatprep.subr.mxu0 %v669
    %780 = vmatpush1.msra.mxu0 %v668
    %781 = vmatprep.subr.mxu0 %v673
    %782 = vmatpush1.msra.mxu0 %v672
    %783 = vmatprep.subr.mxu0 %v677
    %784 = vmatpush1.msra.mxu0 %v676
    %785 = vmatprep.subr.mxu0 %v681
    %786 = vmatpush1.msra.mxu0 %v680
    %787 = vmatprep.subr.mxu0 %v685
    %788 = vmatpush1.msra.mxu0 %v684
    %789 = vmatprep.subr.mxu0 0.0
    %790 = vmatpush1.msra.mxu0 0.0
    %791 = vmatprep.subr.mxu0 0.0
    %792 = vmatpush1.msra.mxu0 0.0
    %793 = vmatprep.subr.mxu0 0.0
    %794 = vmatpush1.msra.mxu0 0.0
    %795 = vmatprep.subr.mxu0 0.0
    %796 = vmatpush1.msra.mxu0 0.0
    %797 = vmatprep.subr.mxu0 0.0
    %798 = vmatpush1.msra.mxu0 0.0
    %799 = vmatprep.subr.mxu0 0.0
    %800 = vmatpush1.msra.mxu0 0.0
    %801 = vmatprep.subr.mxu0 0.0
    %802 = vmatpush1.msra.mxu0 0.0
    %803 = vmatprep.subr.mxu0 0.0
    %804 = vmatpush1.msra.mxu0 0.0
    %805 = vmatprep.subr.mxu0 0.0
    %806 = vmatpush1.msra.mxu0 0.0
    %807 = vmatprep.subr.mxu0 0.0
    %808 = vmatpush1.msra.mxu0 0.0
    %809 = vmatprep.subr.mxu0 0.0
    %810 = vmatpush1.msra.mxu0 0.0
    %811 = vmatprep.subr.mxu0 0.0
    %812 = vmatpush1.msra.mxu0 0.0
    %813 = vmatprep.subr.mxu0 0.0
    %814 = vmatpush1.msra.mxu0 0.0
    %815 = vmatprep.subr.mxu0 0.0
    %816 = vmatpush1.msra.mxu0 0.0
    %817 = vmatprep.subr.mxu0 0.0
    %818 = vmatpush1.msra.mxu0 0.0
    %819 = vmatprep.subr.mxu0 0.0
    %820 = vmatpush1.msra.mxu0 0.0
    %821 = vmatprep.mubr.f32.mxu0 0.0
    %822 = vmatmul.mubr.f32.gmra.mrb[0].mxu0 %v613
    %v823 = vpop.f32.mrb[0].mxu0
    %v824 = vadd.f32 0.0, %v823
    %v825 = vpop.f32.mrb[0].mxu0
    %v826 = vadd.f32 0.0, %v825
    %827 = vdwg.mxu0
    %v828 = vadd.f32 %v618, %v753
    %v829 = vadd.f32 %v619, %v755
    %v830 = vadd.f32 %v620, %v824
    %v831 = vadd.f32 %v621, %v826
    %v832 = vxor.u32 %v828, 2147483648
    %v833 = vmul.f32 %v832, 1.442695
    %v834 = vpow.pop %v833
    %v835 = vadd.f32 %v834, 1.0
    %v836 = vrcp.pop %v835
    %v837 = vmul.f32 1.0, %v836
    %v838 = vxor.u32 %v829, 2147483648
    %v839 = vmul.f32 %v838, 1.442695
    %v840 = vpow.pop %v839
    %v841 = vadd.f32 %v840, 1.0
    %v842 = vrcp.pop %v841
    %v843 = vmul.f32 1.0, %v842
    %v844 = vtanh.pop %v830
    %v845 = vxor.u32 %v831, 2147483648
    %v846 = vmul.f32 %v845, 1.442695
    %v847 = vpow.pop %v846
    %v848 = vadd.f32 %v847, 1.0
    %v849 = vrcp.pop %v848
    %v850 = vmul.f32 1.0, %v849
    %v851 = vmul.f32 %v843, %v611
    %v852 = vmul.f32 %v837, %v844
    %v853 = vadd.f32 %v851, %v852
    %v854 = vtanh.pop %v853
    %v855 = vmul.f32 %v850, %v854
    %s856 = scalar_lea.vmem [#allocation3], 8
    %857 = vst [vmem:[%s856] sm:$0xff] %v855
    %s858 = smul.u32 2, 4
    %s859 = smul.addr %s858, 8
    %s860 = scalar_lea.vmem [#allocation2], %s859
    %v861 = vld [vmem:[%s860] sm:$0xff]
    %v862 = vld [vmem:[%s860 + $0x8] sm:$0xff]
    %v863 = vld [vmem:[%s860 + $0x10] sm:$0xff]
    %v864 = vld [vmem:[%s860 + $0x18] sm:$0xff]
    %v865 = vld [vmem:[#allocation4] sm:$0xff]
    %v866 = vld [vmem:[#allocation4 + $0x8] sm:$0xff]
    %v867 = vld [vmem:[#allocation4 + $0x10] sm:$0xff]
    %v868 = vld [vmem:[#allocation4 + $0x18] sm:$0xff]
    %v869 = vld [vmem:[#allocation4 + $0x20] sm:$0xff]
    %v870 = vld [vmem:[#allocation4 + $0x28] sm:$0xff]
    %v871 = vld [vmem:[#allocation4 + $0x30] sm:$0xff]
    %v872 = vld [vmem:[#allocation4 + $0x38] sm:$0xff]
    %v873 = vld [vmem:[#allocation4 + $0x40] sm:$0xff]
    %v874 = vld [vmem:[#allocation4 + $0x48] sm:$0xff]
    %v875 = vld [vmem:[#allocation4 + $0x50] sm:$0xff]
    %v876 = vld [vmem:[#allocation4 + $0x58] sm:$0xff]
    %v877 = vld [vmem:[#allocation4 + $0x60] sm:$0xff]
    %v878 = vld [vmem:[#allocation4 + $0x68] sm:$0xff]
    %v879 = vld [vmem:[#allocation4 + $0x70] sm:$0xff]
    %v880 = vld [vmem:[#allocation4 + $0x78] sm:$0xff]
    %v881 = vld [vmem:[#allocation4 + $0x80] sm:$0xff]
    %v882 = vld [vmem:[#allocation4 + $0x88] sm:$0xff]
    %v883 = vld [vmem:[#allocation4 + $0x90] sm:$0xff]
    %v884 = vld [vmem:[#allocation4 + $0x98] sm:$0xff]
    %v885 = vld [vmem:[#allocation4 + $0xa0] sm:$0xff]
    %v886 = vld [vmem:[#allocation4 + $0xa8] sm:$0xff]
    %v887 = vld [vmem:[#allocation4 + $0xb0] sm:$0xff]
    %v888 = vld [vmem:[#allocation4 + $0xb8] sm:$0xff]
    %v889 = vld [vmem:[#allocation4 + $0xc0] sm:$0xff]
    %v890 = vld [vmem:[#allocation4 + $0xc8] sm:$0xff]
    %v891 = vld [vmem:[#allocation4 + $0xd0] sm:$0xff]
    %v892 = vld [vmem:[#allocation4 + $0xd8] sm:$0xff]
    %v893 = vld [vmem:[#allocation4 + $0xe0] sm:$0xff]
    %v894 = vld [vmem:[#allocation4 + $0xe8] sm:$0xff]
    %v895 = vld [vmem:[#allocation4 + $0xf0] sm:$0xff]
    %v896 = vld [vmem:[#allocation4 + $0xf8] sm:$0xff]
    %v897 = vld [vmem:[#allocation4 + $0x100] sm:$0xff]
    %v898 = vld [vmem:[#allocation4 + $0x108] sm:$0xff]
    %v899 = vld [vmem:[#allocation4 + $0x110] sm:$0xff]
    %v900 = vld [vmem:[#allocation4 + $0x118] sm:$0xff]
    %v901 = vld [vmem:[#allocation4 + $0x120] sm:$0xff]
    %v902 = vld [vmem:[#allocation4 + $0x128] sm:$0xff]
    %v903 = vld [vmem:[#allocation4 + $0x130] sm:$0xff]
    %v904 = vld [vmem:[#allocation4 + $0x138] sm:$0xff]
    %v905 = vld [vmem:[#allocation4 + $0x140] sm:$0xff]
    %v906 = vld [vmem:[#allocation4 + $0x148] sm:$0xff]
    %v907 = vld [vmem:[#allocation4 + $0x150] sm:$0xff]
    %v908 = vld [vmem:[#allocation4 + $0x158] sm:$0xff]
    %v909 = vld [vmem:[#allocation4 + $0x160] sm:$0xff]
    %v910 = vld [vmem:[#allocation4 + $0x168] sm:$0xff]
    %v911 = vld [vmem:[#allocation4 + $0x170] sm:$0xff]
    %v912 = vld [vmem:[#allocation4 + $0x178] sm:$0xff]
    %v913 = vld [vmem:[#allocation4 + $0x180] sm:$0xff]
    %v914 = vld [vmem:[#allocation4 + $0x188] sm:$0xff]
    %v915 = vld [vmem:[#allocation4 + $0x190] sm:$0xff]
    %v916 = vld [vmem:[#allocation4 + $0x198] sm:$0xff]
    %v917 = vld [vmem:[#allocation4 + $0x1a0] sm:$0xff]
    %v918 = vld [vmem:[#allocation4 + $0x1a8] sm:$0xff]
    %v919 = vld [vmem:[#allocation4 + $0x1b0] sm:$0xff]
    %v920 = vld [vmem:[#allocation4 + $0x1b8] sm:$0xff]
    %v921 = vld [vmem:[#allocation4 + $0x1c0] sm:$0xff]
    %v922 = vld [vmem:[#allocation4 + $0x1c8] sm:$0xff]
    %v923 = vld [vmem:[#allocation4 + $0x1d0] sm:$0xff]
    %v924 = vld [vmem:[#allocation4 + $0x1d8] sm:$0xff]
    %v925 = vld [vmem:[#allocation4 + $0x1e0] sm:$0xff]
    %v926 = vld [vmem:[#allocation4 + $0x1e8] sm:$0xff]
    %v927 = vld [vmem:[#allocation4 + $0x1f0] sm:$0xff]
    %v928 = vld [vmem:[#allocation4 + $0x1f8] sm:$0xff]
    %929 = vmatprep.subr.mxu0 %v866
    %930 = vmatpush1.msra.mxu0 %v865
    %931 = vmatprep.subr.mxu0 %v870
    %932 = vmatpush1.msra.mxu0 %v869
    %933 = vmatprep.subr.mxu0 %v874
    %934 = vmatpush1.msra.mxu0 %v873
    %935 = vmatprep.subr.mxu0 %v878
    %936 = vmatpush1.msra.mxu0 %v877
    %937 = vmatprep.subr.mxu0 %v882
    %938 = vmatpush1.msra.mxu0 %v881
    %939 = vmatprep.subr.mxu0 %v886
    %940 = vmatpush1.msra.mxu0 %v885
    %941 = vmatprep.subr.mxu0 %v890
    %942 = vmatpush1.msra.mxu0 %v889
    %943 = vmatprep.subr.mxu0 %v894
    %944 = vmatpush1.msra.mxu0 %v893
    %945 = vmatprep.subr.mxu0 %v898
    %946 = vmatpush1.msra.mxu0 %v897
    %947 = vmatprep.subr.mxu0 %v902
    %948 = vmatpush1.msra.mxu0 %v901
    %949 = vmatprep.subr.mxu0 %v906
    %950 = vmatpush1.msra.mxu0 %v905
    %951 = vmatprep.subr.mxu0 %v910
    %952 = vmatpush1.msra.mxu0 %v909
    %953 = vmatprep.subr.mxu0 %v914
    %954 = vmatpush1.msra.mxu0 %v913
    %955 = vmatprep.subr.mxu0 %v918
    %956 = vmatpush1.msra.mxu0 %v917
    %957 = vmatprep.subr.mxu0 %v922
    %958 = vmatpush1.msra.mxu0 %v921
    %959 = vmatprep.subr.mxu0 %v926
    %960 = vmatpush1.msra.mxu0 %v925
    %961 = vmatprep.subr.mxu0 0.0
    %962 = vmatpush1.msra.mxu0 0.0
    %963 = vmatprep.subr.mxu0 0.0
    %964 = vmatpush1.msra.mxu0 0.0
    %965 = vmatprep.subr.mxu0 0.0
    %966 = vmatpush1.msra.mxu0 0.0
    %967 = vmatprep.subr.mxu0 0.0
    %968 = vmatpush1.msra.mxu0 0.0
    %969 = vmatprep.subr.mxu0 0.0
    %970 = vmatpush1.msra.mxu0 0.0
    %971 = vmatprep.subr.mxu0 0.0
    %972 = vmatpush1.msra.mxu0 0.0
    %973 = vmatprep.subr.mxu0 0.0
    %974 = vmatpush1.msra.mxu0 0.0
    %975 = vmatprep.subr.mxu0 0.0
    %976 = vmatpush1.msra.mxu0 0.0
    %977 = vmatprep.subr.mxu0 0.0
    %978 = vmatpush1.msra.mxu0 0.0
    %979 = vmatprep.subr.mxu0 0.0
    %980 = vmatpush1.msra.mxu0 0.0
    %981 = vmatprep.subr.mxu0 0.0
    %982 = vmatpush1.msra.mxu0 0.0
    %983 = vmatprep.subr.mxu0 0.0
    %984 = vmatpush1.msra.mxu0 0.0
    %985 = vmatprep.subr.mxu0 0.0
    %986 = vmatpush1.msra.mxu0 0.0
    %987 = vmatprep.subr.mxu0 0.0
    %988 = vmatpush1.msra.mxu0 0.0
    %989 = vmatprep.subr.mxu0 0.0
    %990 = vmatpush1.msra.mxu0 0.0
    %991 = vmatprep.subr.mxu0 0.0
    %992 = vmatpush1.msra.mxu0 0.0
    %993 = vmatprep.mubr.f32.mxu0 0.0
    %994 = vmatmul.mubr.f32.gmra.mrb[0].mxu0 %v855
    %v995 = vpop.f32.mrb[0].mxu0
    %v996 = vadd.f32 0.0, %v995
    %v997 = vpop.f32.mrb[0].mxu0
    %v998 = vadd.f32 0.0, %v997
    %999 = vdwg.mxu0
    %1000 = vmatprep.subr.mxu0 %v868
    %1001 = vmatpush1.msra.mxu0 %v867
    %1002 = vmatprep.subr.mxu0 %v872
    %1003 = vmatpush1.msra.mxu0 %v871
    %1004 = vmatprep.subr.mxu0 %v876
    %1005 = vmatpush1.msra.mxu0 %v875
    %1006 = vmatprep.subr.mxu0 %v880
    %1007 = vmatpush1.msra.mxu0 %v879
    %1008 = vmatprep.subr.mxu0 %v884
    %1009 = vmatpush1.msra.mxu0 %v883
    %1010 = vmatprep.subr.mxu0 %v888
    %1011 = vmatpush1.msra.mxu0 %v887
    %1012 = vmatprep.subr.mxu0 %v892
    %1013 = vmatpush1.msra.mxu0 %v891
    %1014 = vmatprep.subr.mxu0 %v896
    %1015 = vmatpush1.msra.mxu0 %v895
    %1016 = vmatprep.subr.mxu0 %v900
    %1017 = vmatpush1.msra.mxu0 %v899
    %1018 = vmatprep.subr.mxu0 %v904
    %1019 = vmatpush1.msra.mxu0 %v903
    %1020 = vmatprep.subr.mxu0 %v908
    %1021 = vmatpush1.msra.mxu0 %v907
    %1022 = vmatprep.subr.mxu0 %v912
    %1023 = vmatpush1.msra.mxu0 %v911
    %1024 = vmatprep.subr.mxu0 %v916
    %1025 = vmatpush1.msra.mxu0 %v915
    %1026 = vmatprep.subr.mxu0 %v920
    %1027 = vmatpush1.msra.mxu0 %v919
    %1028 = vmatprep.subr.mxu0 %v924
    %1029 = vmatpush1.msra.mxu0 %v923
    %1030 = vmatprep.subr.mxu0 %v928
    %1031 = vmatpush1.msra.mxu0 %v927
    %1032 = vmatprep.subr.mxu0 0.0
    %1033 = vmatpush1.msra.mxu0 0.0
    %1034 = vmatprep.subr.mxu0 0.0
    %1035 = vmatpush1.msra.mxu0 0.0
    %1036 = vmatprep.subr.mxu0 0.0
    %1037 = vmatpush1.msra.mxu0 0.0
    %1038 = vmatprep.subr.mxu0 0.0
    %1039 = vmatpush1.msra.mxu0 0.0
    %1040 = vmatprep.subr.mxu0 0.0
    %1041 = vmatpush1.msra.mxu0 0.0
    %1042 = vmatprep.subr.mxu0 0.0
    %1043 = vmatpush1.msra.mxu0 0.0
    %1044 = vmatprep.subr.mxu0 0.0
    %1045 = vmatpush1.msra.mxu0 0.0
    %1046 = vmatprep.subr.mxu0 0.0
    %1047 = vmatpush1.msra.mxu0 0.0
    %1048 = vmatprep.subr.mxu0 0.0
    %1049 = vmatpush1.msra.mxu0 0.0
    %1050 = vmatprep.subr.mxu0 0.0
    %1051 = vmatpush1.msra.mxu0 0.0
    %1052 = vmatprep.subr.mxu0 0.0
    %1053 = vmatpush1.msra.mxu0 0.0
    %1054 = vmatprep.subr.mxu0 0.0
    %1055 = vmatpush1.msra.mxu0 0.0
    %1056 = vmatprep.subr.mxu0 0.0
    %1057 = vmatpush1.msra.mxu0 0.0
    %1058 = vmatprep.subr.mxu0 0.0
    %1059 = vmatpush1.msra.mxu0 0.0
    %1060 = vmatprep.subr.mxu0 0.0
    %1061 = vmatpush1.msra.mxu0 0.0
    %1062 = vmatprep.subr.mxu0 0.0
    %1063 = vmatpush1.msra.mxu0 0.0
    %1064 = vmatprep.mubr.f32.mxu0 0.0
    %1065 = vmatmul.mubr.f32.gmra.mrb[0].mxu0 %v855
    %v1066 = vpop.f32.mrb[0].mxu0
    %v1067 = vadd.f32 0.0, %v1066
    %v1068 = vpop.f32.mrb[0].mxu0
    %v1069 = vadd.f32 0.0, %v1068
    %1070 = vdwg.mxu0
    %v1071 = vadd.f32 %v861, %v996
    %v1072 = vadd.f32 %v862, %v998
    %v1073 = vadd.f32 %v863, %v1067
    %v1074 = vadd.f32 %v864, %v1069
    %v1075 = vxor.u32 %v1071, 2147483648
    %v1076 = vmul.f32 %v1075, 1.442695
    %v1077 = vpow.pop %v1076
    %v1078 = vadd.f32 %v1077, 1.0
    %v1079 = vrcp.pop %v1078
    %v1080 = vmul.f32 1.0, %v1079
    %v1081 = vxor.u32 %v1072, 2147483648
    %v1082 = vmul.f32 %v1081, 1.442695
    %v1083 = vpow.pop %v1082
    %v1084 = vadd.f32 %v1083, 1.0
    %v1085 = vrcp.pop %v1084
    %v1086 = vmul.f32 1.0, %v1085
    %v1087 = vtanh.pop %v1073
    %v1088 = vxor.u32 %v1074, 2147483648
    %v1089 = vmul.f32 %v1088, 1.442695
    %v1090 = vpow.pop %v1089
    %v1091 = vadd.f32 %v1090, 1.0
    %v1092 = vrcp.pop %v1091
    %v1093 = vmul.f32 1.0, %v1092
    %v1094 = vmul.f32 %v1086, %v853
    %v1095 = vmul.f32 %v1080, %v1087
    %v1096 = vadd.f32 %v1094, %v1095
    %v1097 = vtanh.pop %v1096
    %v1098 = vmul.f32 %v1093, %v1097
    %s1099 = scalar_lea.vmem [#allocation3], 16
    %1100 = vst [vmem:[%s1099] sm:$0xff] %v1098
    %s1101 = smul.u32 3, 4
    %s1102 = smul.addr %s1101, 8
    %s1103 = scalar_lea.vmem [#allocation2], %s1102
    %v1104 = vld [vmem:[%s1103] sm:$0xff]
    %v1105 = vld [vmem:[%s1103 + $0x8] sm:$0xff]
    %v1106 = vld [vmem:[%s1103 + $0x10] sm:$0xff]
    %v1107 = vld [vmem:[%s1103 + $0x18] sm:$0xff]
    %v1108 = vld [vmem:[#allocation4] sm:$0xff]
    %v1109 = vld [vmem:[#allocation4 + $0x8] sm:$0xff]
    %v1110 = vld [vmem:[#allocation4 + $0x10] sm:$0xff]
    %v1111 = vld [vmem:[#allocation4 + $0x18] sm:$0xff]
    %v1112 = vld [vmem:[#allocation4 + $0x20] sm:$0xff]
    %v1113 = vld [vmem:[#allocation4 + $0x28] sm:$0xff]
    %v1114 = vld [vmem:[#allocation4 + $0x30] sm:$0xff]
    %v1115 = vld [vmem:[#allocation4 + $0x38] sm:$0xff]
    %v1116 = vld [vmem:[#allocation4 + $0x40] sm:$0xff]
    %v1117 = vld [vmem:[#allocation4 + $0x48] sm:$0xff]
    %v1118 = vld [vmem:[#allocation4 + $0x50] sm:$0xff]
    %v1119 = vld [vmem:[#allocation4 + $0x58] sm:$0xff]
    %v1120 = vld [vmem:[#allocation4 + $0x60] sm:$0xff]
    %v1121 = vld [vmem:[#allocation4 + $0x68] sm:$0xff]
    %v1122 = vld [vmem:[#allocation4 + $0x70] sm:$0xff]
    %v1123 = vld [vmem:[#allocation4 + $0x78] sm:$0xff]
    %v1124 = vld [vmem:[#allocation4 + $0x80] sm:$0xff]
    %v1125 = vld [vmem:[#allocation4 + $0x88] sm:$0xff]
    %v1126 = vld [vmem:[#allocation4 + $0x90] sm:$0xff]
    %v1127 = vld [vmem:[#allocation4 + $0x98] sm:$0xff]
    %v1128 = vld [vmem:[#allocation4 + $0xa0] sm:$0xff]
    %v1129 = vld [vmem:[#allocation4 + $0xa8] sm:$0xff]
    %v1130 = vld [vmem:[#allocation4 + $0xb0] sm:$0xff]
    %v1131 = vld [vmem:[#allocation4 + $0xb8] sm:$0xff]
    %v1132 = vld [vmem:[#allocation4 + $0xc0] sm:$0xff]
    %v1133 = vld [vmem:[#allocation4 + $0xc8] sm:$0xff]
    %v1134 = vld [vmem:[#allocation4 + $0xd0] sm:$0xff]
    %v1135 = vld [vmem:[#allocation4 + $0xd8] sm:$0xff]
    %v1136 = vld [vmem:[#allocation4 + $0xe0] sm:$0xff]
    %v1137 = vld [vmem:[#allocation4 + $0xe8] sm:$0xff]
    %v1138 = vld [vmem:[#allocation4 + $0xf0] sm:$0xff]
    %v1139 = vld [vmem:[#allocation4 + $0xf8] sm:$0xff]
    %v1140 = vld [vmem:[#allocation4 + $0x100] sm:$0xff]
    %v1141 = vld [vmem:[#allocation4 + $0x108] sm:$0xff]
    %v1142 = vld [vmem:[#allocation4 + $0x110] sm:$0xff]
    %v1143 = vld [vmem:[#allocation4 + $0x118] sm:$0xff]
    %v1144 = vld [vmem:[#allocation4 + $0x120] sm:$0xff]
    %v1145 = vld [vmem:[#allocation4 + $0x128] sm:$0xff]
    %v1146 = vld [vmem:[#allocation4 + $0x130] sm:$0xff]
    %v1147 = vld [vmem:[#allocation4 + $0x138] sm:$0xff]
    %v1148 = vld [vmem:[#allocation4 + $0x140] sm:$0xff]
    %v1149 = vld [vmem:[#allocation4 + $0x148] sm:$0xff]
    %v1150 = vld [vmem:[#allocation4 + $0x150] sm:$0xff]
    %v1151 = vld [vmem:[#allocation4 + $0x158] sm:$0xff]
    %v1152 = vld [vmem:[#allocation4 + $0x160] sm:$0xff]
    %v1153 = vld [vmem:[#allocation4 + $0x168] sm:$0xff]
    %v1154 = vld [vmem:[#allocation4 + $0x170] sm:$0xff]
    %v1155 = vld [vmem:[#allocation4 + $0x178] sm:$0xff]
    %v1156 = vld [vmem:[#allocation4 + $0x180] sm:$0xff]
    %v1157 = vld [vmem:[#allocation4 + $0x188] sm:$0xff]
    %v1158 = vld [vmem:[#allocation4 + $0x190] sm:$0xff]
    %v1159 = vld [vmem:[#allocation4 + $0x198] sm:$0xff]
    %v1160 = vld [vmem:[#allocation4 + $0x1a0] sm:$0xff]
    %v1161 = vld [vmem:[#allocation4 + $0x1a8] sm:$0xff]
    %v1162 = vld [vmem:[#allocation4 + $0x1b0] sm:$0xff]
    %v1163 = vld [vmem:[#allocation4 + $0x1b8] sm:$0xff]
    %v1164 = vld [vmem:[#allocation4 + $0x1c0] sm:$0xff]
    %v1165 = vld [vmem:[#allocation4 + $0x1c8] sm:$0xff]
    %v1166 = vld [vmem:[#allocation4 + $0x1d0] sm:$0xff]
    %v1167 = vld [vmem:[#allocation4 + $0x1d8] sm:$0xff]
    %v1168 = vld [vmem:[#allocation4 + $0x1e0] sm:$0xff]
    %v1169 = vld [vmem:[#allocation4 + $0x1e8] sm:$0xff]
    %v1170 = vld [vmem:[#allocation4 + $0x1f0] sm:$0xff]
    %v1171 = vld [vmem:[#allocation4 + $0x1f8] sm:$0xff]
    %1172 = vmatprep.subr.mxu0 %v1109
    %1173 = vmatpush1.msra.mxu0 %v1108
    %1174 = vmatprep.subr.mxu0 %v1113
    %1175 = vmatpush1.msra.mxu0 %v1112
    %1176 = vmatprep.subr.mxu0 %v1117
    %1177 = vmatpush1.msra.mxu0 %v1116
    %1178 = vmatprep.subr.mxu0 %v1121
    %1179 = vmatpush1.msra.mxu0 %v1120
    %1180 = vmatprep.subr.mxu0 %v1125
    %1181 = vmatpush1.msra.mxu0 %v1124
    %1182 = vmatprep.subr.mxu0 %v1129
    %1183 = vmatpush1.msra.mxu0 %v1128
    %1184 = vmatprep.subr.mxu0 %v1133
    %1185 = vmatpush1.msra.mxu0 %v1132
    %1186 = vmatprep.subr.mxu0 %v1137
    %1187 = vmatpush1.msra.mxu0 %v1136
    %1188 = vmatprep.subr.mxu0 %v1141
    %1189 = vmatpush1.msra.mxu0 %v1140
    %1190 = vmatprep.subr.mxu0 %v1145
    %1191 = vmatpush1.msra.mxu0 %v1144
    %1192 = vmatprep.subr.mxu0 %v1149
    %1193 = vmatpush1.msra.mxu0 %v1148
    %1194 = vmatprep.subr.mxu0 %v1153
    %1195 = vmatpush1.msra.mxu0 %v1152
    %1196 = vmatprep.subr.mxu0 %v1157
    %1197 = vmatpush1.msra.mxu0 %v1156
    %1198 = vmatprep.subr.mxu0 %v1161
    %1199 = vmatpush1.msra.mxu0 %v1160
    %1200 = vmatprep.subr.mxu0 %v1165
    %1201 = vmatpush1.msra.mxu0 %v1164
    %1202 = vmatprep.subr.mxu0 %v1169
    %1203 = vmatpush1.msra.mxu0 %v1168
    %1204 = vmatprep.subr.mxu0 0.0
    %1205 = vmatpush1.msra.mxu0 0.0
    %1206 = vmatprep.subr.mxu0 0.0
    %1207 = vmatpush1.msra.mxu0 0.0
    %1208 = vmatprep.subr.mxu0 0.0
    %1209 = vmatpush1.msra.mxu0 0.0
    %1210 = vmatprep.subr.mxu0 0.0
    %1211 = vmatpush1.msra.mxu0 0.0
    %1212 = vmatprep.subr.mxu0 0.0
    %1213 = vmatpush1.msra.mxu0 0.0
    %1214 = vmatprep.subr.mxu0 0.0
    %1215 = vmatpush1.msra.mxu0 0.0
    %1216 = vmatprep.subr.mxu0 0.0
    %1217 = vmatpush1.msra.mxu0 0.0
    %1218 = vmatprep.subr.mxu0 0.0
    %1219 = vmatpush1.msra.mxu0 0.0
    %1220 = vmatprep.subr.mxu0 0.0
    %1221 = vmatpush1.msra.mxu0 0.0
    %1222 = vmatprep.subr.mxu0 0.0
    %1223 = vmatpush1.msra.mxu0 0.0
    %1224 = vmatprep.subr.mxu0 0.0
    %1225 = vmatpush1.msra.mxu0 0.0
    %1226 = vmatprep.subr.mxu0 0.0
    %1227 = vmatpush1.msra.mxu0 0.0
    %1228 = vmatprep.subr.mxu0 0.0
    %1229 = vmatpush1.msra.mxu0 0.0
    %1230 = vmatprep.subr.mxu0 0.0
    %1231 = vmatpush1.msra.mxu0 0.0
    %1232 = vmatprep.subr.mxu0 0.0
    %1233 = vmatpush1.msra.mxu0 0.0
    %1234 = vmatprep.subr.mxu0 0.0
    %1235 = vmatpush1.msra.mxu0 0.0
    %1236 = vmatprep.mubr.f32.mxu0 0.0
    %1237 = vmatmul.mubr.f32.gmra.mrb[0].mxu0 %v1098
    %v1238 = vpop.f32.mrb[0].mxu0
    %v1239 = vadd.f32 0.0, %v1238
    %v1240 = vpop.f32.mrb[0].mxu0
    %v1241 = vadd.f32 0.0, %v1240
    %1242 = vdwg.mxu0
    %1243 = vmatprep.subr.mxu0 %v1111
    %1244 = vmatpush1.msra.mxu0 %v1110
    %1245 = vmatprep.subr.mxu0 %v1115
    %1246 = vmatpush1.msra.mxu0 %v1114
    %1247 = vmatprep.subr.mxu0 %v1119
    %1248 = vmatpush1.msra.mxu0 %v1118
    %1249 = vmatprep.subr.mxu0 %v1123
    %1250 = vmatpush1.msra.mxu0 %v1122
    %1251 = vmatprep.subr.mxu0 %v1127
    %1252 = vmatpush1.msra.mxu0 %v1126
    %1253 = vmatprep.subr.mxu0 %v1131
    %1254 = vmatpush1.msra.mxu0 %v1130
    %1255 = vmatprep.subr.mxu0 %v1135
    %1256 = vmatpush1.msra.mxu0 %v1134
    %1257 = vmatprep.subr.mxu0 %v1139
    %1258 = vmatpush1.msra.mxu0 %v1138
    %1259 = vmatprep.subr.mxu0 %v1143
    %1260 = vmatpush1.msra.mxu0 %v1142
    %1261 = vmatprep.subr.mxu0 %v1147
    %1262 = vmatpush1.msra.mxu0 %v1146
    %1263 = vmatprep.subr.mxu0 %v1151
    %1264 = vmatpush1.msra.mxu0 %v1150
    %1265 = vmatprep.subr.mxu0 %v1155
    %1266 = vmatpush1.msra.mxu0 %v1154
    %1267 = vmatprep.subr.mxu0 %v1159
    %1268 = vmatpush1.msra.mxu0 %v1158
    %1269 = vmatprep.subr.mxu0 %v1163
    %1270 = vmatpush1.msra.mxu0 %v1162
    %1271 = vmatprep.subr.mxu0 %v1167
    %1272 = vmatpush1.msra.mxu0 %v1166
    %1273 = vmatprep.subr.mxu0 %v1171
    %1274 = vmatpush1.msra.mxu0 %v1170
    %1275 = vmatprep.subr.mxu0 0.0
    %1276 = vmatpush1.msra.mxu0 0.0
    %1277 = vmatprep.subr.mxu0 0.0
    %1278 = vmatpush1.msra.mxu0 0.0
    %1279 = vmatprep.subr.mxu0 0.0
    %1280 = vmatpush1.msra.mxu0 0.0
    %1281 = vmatprep.subr.mxu0 0.0
    %1282 = vmatpush1.msra.mxu0 0.0
    %1283 = vmatprep.subr.mxu0 0.0
    %1284 = vmatpush1.msra.mxu0 0.0
    %1285 = vmatprep.subr.mxu0 0.0
    %1286 = vmatpush1.msra.mxu0 0.0
    %1287 = vmatprep.subr.mxu0 0.0
    %1288 = vmatpush1.msra.mxu0 0.0
    %1289 = vmatprep.subr.mxu0 0.0
    %1290 = vmatpush1.msra.mxu0 0.0
    %1291 = vmatprep.subr.mxu0 0.0
    %1292 = vmatpush1.msra.mxu0 0.0
    %1293 = vmatprep.subr.mxu0 0.0
    %1294 = vmatpush1.msra.mxu0 0.0
    %1295 = vmatprep.subr.mxu0 0.0
    %1296 = vmatpush1.msra.mxu0 0.0
    %1297 = vmatprep.subr.mxu0 0.0
    %1298 = vmatpush1.msra.mxu0 0.0
    %1299 = vmatprep.subr.mxu0 0.0
    %1300 = vmatpush1.msra.mxu0 0.0
    %1301 = vmatprep.subr.mxu0 0.0
    %1302 = vmatpush1.msra.mxu0 0.0
    %1303 = vmatprep.subr.mxu0 0.0
    %1304 = vmatpush1.msra.mxu0 0.0
    %1305 = vmatprep.subr.mxu0 0.0
    %1306 = vmatpush1.msra.mxu0 0.0
    %1307 = vmatprep.mubr.f32.mxu0 0.0
    %1308 = vmatmul.mubr.f32.gmra.mrb[0].mxu0 %v1098
    %v1309 = vpop.f32.mrb[0].mxu0
    %v1310 = vadd.f32 0.0, %v1309
    %v1311 = vpop.f32.mrb[0].mxu0
    %v1312 = vadd.f32 0.0, %v1311
    %1313 = vdwg.mxu0
    %v1314 = vadd.f32 %v1104, %v1239
    %v1315 = vadd.f32 %v1105, %v1241
    %v1316 = vadd.f32 %v1106, %v1310
    %v1317 = vadd.f32 %v1107, %v1312
    %v1318 = vxor.u32 %v1314, 2147483648
    %v1319 = vmul.f32 %v1318, 1.442695
    %v1320 = vpow.pop %v1319
    %v1321 = vadd.f32 %v1320, 1.0
    %v1322 = vrcp.pop %v1321
    %v1323 = vmul.f32 1.0, %v1322
    %v1324 = vxor.u32 %v1315, 2147483648
    %v1325 = vmul.f32 %v1324, 1.442695
    %v1326 = vpow.pop %v1325
    %v1327 = vadd.f32 %v1326, 1.0
    %v1328 = vrcp.pop %v1327
    %v1329 = vmul.f32 1.0, %v1328
    %v1330 = vtanh.pop %v1316
    %v1331 = vxor.u32 %v1317, 2147483648
    %v1332 = vmul.f32 %v1331, 1.442695
    %v1333 = vpow.pop %v1332
    %v1334 = vadd.f32 %v1333, 1.0
    %v1335 = vrcp.pop %v1334
    %v1336 = vmul.f32 1.0, %v1335
    %v1337 = vmul.f32 %v1329, %v1096
    %v1338 = vmul.f32 %v1323, %v1330
    %v1339 = vadd.f32 %v1337, %v1338
    %v1340 = vtanh.pop %v1339
    %v1341 = vmul.f32 %v1336, %v1340
    %s1342 = scalar_lea.vmem [#allocation3], 24
    %1343 = vst [vmem:[%s1342] sm:$0xff] %v1341
    %s1344 = smul.u32 4, 4
    %s1345 = smul.addr %s1344, 8
    %s1346 = scalar_lea.vmem [#allocation2], %s1345
    %v1347 = vld [vmem:[%s1346] sm:$0xff]
    %v1348 = vld [vmem:[%s1346 + $0x8] sm:$0xff]
    %v1349 = vld [vmem:[%s1346 + $0x10] sm:$0xff]
    %v1350 = vld [vmem:[%s1346 + $0x18] sm:$0xff]
    %v1351 = vld [vmem:[#allocation4] sm:$0xff]
    %v1352 = vld [vmem:[#allocation4 + $0x8] sm:$0xff]
    %v1353 = vld [vmem:[#allocation4 + $0x10] sm:$0xff]
    %v1354 = vld [vmem:[#allocation4 + $0x18] sm:$0xff]
    %v1355 = vld [vmem:[#allocation4 + $0x20] sm:$0xff]
    %v1356 = vld [vmem:[#allocation4 + $0x28] sm:$0xff]
    %v1357 = vld [vmem:[#allocation4 + $0x30] sm:$0xff]
    %v1358 = vld [vmem:[#allocation4 + $0x38] sm:$0xff]
    %v1359 = vld [vmem:[#allocation4 + $0x40] sm:$0xff]
    %v1360 = vld [vmem:[#allocation4 + $0x48] sm:$0xff]
    %v1361 = vld [vmem:[#allocation4 + $0x50] sm:$0xff]
    %v1362 = vld [vmem:[#allocation4 + $0x58] sm:$0xff]
    %v1363 = vld [vmem:[#allocation4 + $0x60] sm:$0xff]
    %v1364 = vld [vmem:[#allocation4 + $0x68] sm:$0xff]
    %v1365 = vld [vmem:[#allocation4 + $0x70] sm:$0xff]
    %v1366 = vld [vmem:[#allocation4 + $0x78] sm:$0xff]
    %v1367 = vld [vmem:[#allocation4 + $0x80] sm:$0xff]
    %v1368 = vld [vmem:[#allocation4 + $0x88] sm:$0xff]
    %v1369 = vld [vmem:[#allocation4 + $0x90] sm:$0xff]
    %v1370 = vld [vmem:[#allocation4 + $0x98] sm:$0xff]
    %v1371 = vld [vmem:[#allocation4 + $0xa0] sm:$0xff]
    %v1372 = vld [vmem:[#allocation4 + $0xa8] sm:$0xff]
    %v1373 = vld [vmem:[#allocation4 + $0xb0] sm:$0xff]
    %v1374 = vld [vmem:[#allocation4 + $0xb8] sm:$0xff]
    %v1375 = vld [vmem:[#allocation4 + $0xc0] sm:$0xff]
    %v1376 = vld [vmem:[#allocation4 + $0xc8] sm:$0xff]
    %v1377 = vld [vmem:[#allocation4 + $0xd0] sm:$0xff]
    %v1378 = vld [vmem:[#allocation4 + $0xd8] sm:$0xff]
    %v1379 = vld [vmem:[#allocation4 + $0xe0] sm:$0xff]
    %v1380 = vld [vmem:[#allocation4 + $0xe8] sm:$0xff]
    %v1381 = vld [vmem:[#allocation4 + $0xf0] sm:$0xff]
    %v1382 = vld [vmem:[#allocation4 + $0xf8] sm:$0xff]
    %v1383 = vld [vmem:[#allocation4 + $0x100] sm:$0xff]
    %v1384 = vld [vmem:[#allocation4 + $0x108] sm:$0xff]
    %v1385 = vld [vmem:[#allocation4 + $0x110] sm:$0xff]
    %v1386 = vld [vmem:[#allocation4 + $0x118] sm:$0xff]
    %v1387 = vld [vmem:[#allocation4 + $0x120] sm:$0xff]
    %v1388 = vld [vmem:[#allocation4 + $0x128] sm:$0xff]
    %v1389 = vld [vmem:[#allocation4 + $0x130] sm:$0xff]
    %v1390 = vld [vmem:[#allocation4 + $0x138] sm:$0xff]
    %v1391 = vld [vmem:[#allocation4 + $0x140] sm:$0xff]
    %v1392 = vld [vmem:[#allocation4 + $0x148] sm:$0xff]
    %v1393 = vld [vmem:[#allocation4 + $0x150] sm:$0xff]
    %v1394 = vld [vmem:[#allocation4 + $0x158] sm:$0xff]
    %v1395 = vld [vmem:[#allocation4 + $0x160] sm:$0xff]
    %v1396 = vld [vmem:[#allocation4 + $0x168] sm:$0xff]
    %v1397 = vld [vmem:[#allocation4 + $0x170] sm:$0xff]
    %v1398 = vld [vmem:[#allocation4 + $0x178] sm:$0xff]
    %v1399 = vld [vmem:[#allocation4 + $0x180] sm:$0xff]
    %v1400 = vld [vmem:[#allocation4 + $0x188] sm:$0xff]
    %v1401 = vld [vmem:[#allocation4 + $0x190] sm:$0xff]
    %v1402 = vld [vmem:[#allocation4 + $0x198] sm:$0xff]
    %v1403 = vld [vmem:[#allocation4 + $0x1a0] sm:$0xff]
    %v1404 = vld [vmem:[#allocation4 + $0x1a8] sm:$0xff]
    %v1405 = vld [vmem:[#allocation4 + $0x1b0] sm:$0xff]
    %v1406 = vld [vmem:[#allocation4 + $0x1b8] sm:$0xff]
    %v1407 = vld [vmem:[#allocation4 + $0x1c0] sm:$0xff]
    %v1408 = vld [vmem:[#allocation4 + $0x1c8] sm:$0xff]
    %v1409 = vld [vmem:[#allocation4 + $0x1d0] sm:$0xff]
    %v1410 = vld [vmem:[#allocation4 + $0x1d8] sm:$0xff]
    %v1411 = vld [vmem:[#allocation4 + $0x1e0] sm:$0xff]
    %v1412 = vld [vmem:[#allocation4 + $0x1e8] sm:$0xff]
    %v1413 = vld [vmem:[#allocation4 + $0x1f0] sm:$0xff]
    %v1414 = vld [vmem:[#allocation4 + $0x1f8] sm:$0xff]
    %1415 = vmatprep.subr.mxu0 %v1352
    %1416 = vmatpush1.msra.mxu0 %v1351
    %1417 = vmatprep.subr.mxu0 %v1356
    %1418 = vmatpush1.msra.mxu0 %v1355
    %1419 = vmatprep.subr.mxu0 %v1360
    %1420 = vmatpush1.msra.mxu0 %v1359
    %1421 = vmatprep.subr.mxu0 %v1364
    %1422 = vmatpush1.msra.mxu0 %v1363
    %1423 = vmatprep.subr.mxu0 %v1368
    %1424 = vmatpush1.msra.mxu0 %v1367
    %1425 = vmatprep.subr.mxu0 %v1372
    %1426 = vmatpush1.msra.mxu0 %v1371
    %1427 = vmatprep.subr.mxu0 %v1376
    %1428 = vmatpush1.msra.mxu0 %v1375
    %1429 = vmatprep.subr.mxu0 %v1380
    %1430 = vmatpush1.msra.mxu0 %v1379
    %1431 = vmatprep.subr.mxu0 %v1384
    %1432 = vmatpush1.msra.mxu0 %v1383
    %1433 = vmatprep.subr.mxu0 %v1388
    %1434 = vmatpush1.msra.mxu0 %v1387
    %1435 = vmatprep.subr.mxu0 %v1392
    %1436 = vmatpush1.msra.mxu0 %v1391
    %1437 = vmatprep.subr.mxu0 %v1396
    %1438 = vmatpush1.msra.mxu0 %v1395
    %1439 = vmatprep.subr.mxu0 %v1400
    %1440 = vmatpush1.msra.mxu0 %v1399
    %1441 = vmatprep.subr.mxu0 %v1404
    %1442 = vmatpush1.msra.mxu0 %v1403
    %1443 = vmatprep.subr.mxu0 %v1408
    %1444 = vmatpush1.msra.mxu0 %v1407
    %1445 = vmatprep.subr.mxu0 %v1412
    %1446 = vmatpush1.msra.mxu0 %v1411
    %1447 = vmatprep.subr.mxu0 0.0
    %1448 = vmatpush1.msra.mxu0 0.0
    %1449 = vmatprep.subr.mxu0 0.0
    %1450 = vmatpush1.msra.mxu0 0.0
    %1451 = vmatprep.subr.mxu0 0.0
    %1452 = vmatpush1.msra.mxu0 0.0
    %1453 = vmatprep.subr.mxu0 0.0
    %1454 = vmatpush1.msra.mxu0 0.0
    %1455 = vmatprep.subr.mxu0 0.0
    %1456 = vmatpush1.msra.mxu0 0.0
    %1457 = vmatprep.subr.mxu0 0.0
    %1458 = vmatpush1.msra.mxu0 0.0
    %1459 = vmatprep.subr.mxu0 0.0
    %1460 = vmatpush1.msra.mxu0 0.0
    %1461 = vmatprep.subr.mxu0 0.0
    %1462 = vmatpush1.msra.mxu0 0.0
    %1463 = vmatprep.subr.mxu0 0.0
    %1464 = vmatpush1.msra.mxu0 0.0
    %1465 = vmatprep.subr.mxu0 0.0
    %1466 = vmatpush1.msra.mxu0 0.0
    %1467 = vmatprep.subr.mxu0 0.0
    %1468 = vmatpush1.msra.mxu0 0.0
    %1469 = vmatprep.subr.mxu0 0.0
    %1470 = vmatpush1.msra.mxu0 0.0
    %1471 = vmatprep.subr.mxu0 0.0
    %1472 = vmatpush1.msra.mxu0 0.0
    %1473 = vmatprep.subr.mxu0 0.0
    %1474 = vmatpush1.msra.mxu0 0.0
    %1475 = vmatprep.subr.mxu0 0.0
    %1476 = vmatpush1.msra.mxu0 0.0
    %1477 = vmatprep.subr.mxu0 0.0
    %1478 = vmatpush1.msra.mxu0 0.0
    %1479 = vmatprep.mubr.f32.mxu0 0.0
    %1480 = vmatmul.mubr.f32.gmra.mrb[0].mxu0 %v1341
    %v1481 = vpop.f32.mrb[0].mxu0
    %v1482 = vadd.f32 0.0, %v1481
    %v1483 = vpop.f32.mrb[0].mxu0
    %v1484 = vadd.f32 0.0, %v1483
    %1485 = vdwg.mxu0
    %1486 = vmatprep.subr.mxu0 %v1354
    %1487 = vmatpush1.msra.mxu0 %v1353
    %1488 = vmatprep.subr.mxu0 %v1358
    %1489 = vmatpush1.msra.mxu0 %v1357
    %1490 = vmatprep.subr.mxu0 %v1362
    %1491 = vmatpush1.msra.mxu0 %v1361
    %1492 = vmatprep.subr.mxu0 %v1366
    %1493 = vmatpush1.msra.mxu0 %v1365
    %1494 = vmatprep.subr.mxu0 %v1370
    %1495 = vmatpush1.msra.mxu0 %v1369
    %1496 = vmatprep.subr.mxu0 %v1374
    %1497 = vmatpush1.msra.mxu0 %v1373
    %1498 = vmatprep.subr.mxu0 %v1378
    %1499 = vmatpush1.msra.mxu0 %v1377
    %1500 = vmatprep.subr.mxu0 %v1382
    %1501 = vmatpush1.msra.mxu0 %v1381
    %1502 = vmatprep.subr.mxu0 %v1386
    %1503 = vmatpush1.msra.mxu0 %v1385
    %1504 = vmatprep.subr.mxu0 %v1390
    %1505 = vmatpush1.msra.mxu0 %v1389
    %1506 = vmatprep.subr.mxu0 %v1394
    %1507 = vmatpush1.msra.mxu0 %v1393
    %1508 = vmatprep.subr.mxu0 %v1398
    %1509 = vmatpush1.msra.mxu0 %v1397
    %1510 = vmatprep.subr.mxu0 %v1402
    %1511 = vmatpush1.msra.mxu0 %v1401
    %1512 = vmatprep.subr.mxu0 %v1406
    %1513 = vmatpush1.msra.mxu0 %v1405
    %1514 = vmatprep.subr.mxu0 %v1410
    %1515 = vmatpush1.msra.mxu0 %v1409
    %1516 = vmatprep.subr.mxu0 %v1414
    %1517 = vmatpush1.msra.mxu0 %v1413
    %1518 = vmatprep.subr.mxu0 0.0
    %1519 = vmatpush1.msra.mxu0 0.0
    %1520 = vmatprep.subr.mxu0 0.0
    %1521 = vmatpush1.msra.mxu0 0.0
    %1522 = vmatprep.subr.mxu0 0.0
    %1523 = vmatpush1.msra.mxu0 0.0
    %1524 = vmatprep.subr.mxu0 0.0
    %1525 = vmatpush1.msra.mxu0 0.0
    %1526 = vmatprep.subr.mxu0 0.0
    %1527 = vmatpush1.msra.mxu0 0.0
    %1528 = vmatprep.subr.mxu0 0.0
    %1529 = vmatpush1.msra.mxu0 0.0
    %1530 = vmatprep.subr.mxu0 0.0
    %1531 = vmatpush1.msra.mxu0 0.0
    %1532 = vmatprep.subr.mxu0 0.0
    %1533 = vmatpush1.msra.mxu0 0.0
    %1534 = vmatprep.subr.mxu0 0.0
    %1535 = vmatpush1.msra.mxu0 0.0
    %1536 = vmatprep.subr.mxu0 0.0
    %1537 = vmatpush1.msra.mxu0 0.0
    %1538 = vmatprep.subr.mxu0 0.0
    %1539 = vmatpush1.msra.mxu0 0.0
    %1540 = vmatprep.subr.mxu0 0.0
    %1541 = vmatpush1.msra.mxu0 0.0
    %1542 = vmatprep.subr.mxu0 0.0
    %1543 = vmatpush1.msra.mxu0 0.0
    %1544 = vmatprep.subr.mxu0 0.0
    %1545 = vmatpush1.msra.mxu0 0.0
    %1546 = vmatprep.subr.mxu0 0.0
    %1547 = vmatpush1.msra.mxu0 0.0
    %1548 = vmatprep.subr.mxu0 0.0
    %1549 = vmatpush1.msra.mxu0 0.0
    %1550 = vmatprep.mubr.f32.mxu0 0.0
    %1551 = vmatmul.mubr.f32.gmra.mrb[0].mxu0 %v1341
    %v1552 = vpop.f32.mrb[0].mxu0
    %v1553 = vadd.f32 0.0, %v1552
    %v1554 = vpop.f32.mrb[0].mxu0
    %v1555 = vadd.f32 0.0, %v1554
    %1556 = vdwg.mxu0
    %v1557 = vadd.f32 %v1347, %v1482
    %v1558 = vadd.f32 %v1348, %v1484
    %v1559 = vadd.f32 %v1349, %v1553
    %v1560 = vadd.f32 %v1350, %v1555
    %v1561 = vxor.u32 %v1557, 2147483648
    %v1562 = vmul.f32 %v1561, 1.442695
    %v1563 = vpow.pop %v1562
    %v1564 = vadd.f32 %v1563, 1.0
    %v1565 = vrcp.pop %v1564
    %v1566 = vmul.f32 1.0, %v1565
    %v1567 = vxor.u32 %v1558, 2147483648
    %v1568 = vmul.f32 %v1567, 1.442695
    %v1569 = vpow.pop %v1568
    %v1570 = vadd.f32 %v1569, 1.0
    %v1571 = vrcp.pop %v1570
    %v1572 = vmul.f32 1.0, %v1571
    %v1573 = vtanh.pop %v1559
    %v1574 = vxor.u32 %v1560, 2147483648
    %v1575 = vmul.f32 %v1574, 1.442695
    %v1576 = vpow.pop %v1575
    %v1577 = vadd.f32 %v1576, 1.0
    %v1578 = vrcp.pop %v1577
    %v1579 = vmul.f32 1.0, %v1578
    %v1580 = vmul.f32 %v1572, %v1339
    %v1581 = vmul.f32 %v1566, %v1573
    %v1582 = vadd.f32 %v1580, %v1581
    %v1583 = vtanh.pop %v1582
    %v1584 = vmul.f32 %v1579, %v1583
    %s1585 = scalar_lea.vmem [#allocation3], 32
    %1586 = vst [vmem:[%s1585] sm:$0xff] %v1584
    %s1587 = smul.u32 5, 4
    %s1588 = smul.addr %s1587, 8
    %s1589 = scalar_lea.vmem [#allocation2], %s1588
    %v1590 = vld [vmem:[%s1589] sm:$0xff]
    %v1591 = vld [vmem:[%s1589 + $0x8] sm:$0xff]
    %v1592 = vld [vmem:[%s1589 + $0x10] sm:$0xff]
    %v1593 = vld [vmem:[%s1589 + $0x18] sm:$0xff]
    %v1594 = vld [vmem:[#allocation4] sm:$0xff]
    %v1595 = vld [vmem:[#allocation4 + $0x8] sm:$0xff]
    %v1596 = vld [vmem:[#allocation4 + $0x10] sm:$0xff]
    %v1597 = vld [vmem:[#allocation4 + $0x18] sm:$0xff]
    %v1598 = vld [vmem:[#allocation4 + $0x20] sm:$0xff]
    %v1599 = vld [vmem:[#allocation4 + $0x28] sm:$0xff]
    %v1600 = vld [vmem:[#allocation4 + $0x30] sm:$0xff]
    %v1601 = vld [vmem:[#allocation4 + $0x38] sm:$0xff]
    %v1602 = vld [vmem:[#allocation4 + $0x40] sm:$0xff]
    %v1603 = vld [vmem:[#allocation4 + $0x48] sm:$0xff]
    %v1604 = vld [vmem:[#allocation4 + $0x50] sm:$0xff]
    %v1605 = vld [vmem:[#allocation4 + $0x58] sm:$0xff]
    %v1606 = vld [vmem:[#allocation4 + $0x60] sm:$0xff]
    %v1607 = vld [vmem:[#allocation4 + $0x68] sm:$0xff]
    %v1608 = vld [vmem:[#allocation4 + $0x70] sm:$0xff]
    %v1609 = vld [vmem:[#allocation4 + $0x78] sm:$0xff]
    %v1610 = vld [vmem:[#allocation4 + $0x80] sm:$0xff]
    %v1611 = vld [vmem:[#allocation4 + $0x88] sm:$0xff]
    %v1612 = vld [vmem:[#allocation4 + $0x90] sm:$0xff]
    %v1613 = vld [vmem:[#allocation4 + $0x98] sm:$0xff]
    %v1614 = vld [vmem:[#allocation4 + $0xa0] sm:$0xff]
    %v1615 = vld [vmem:[#allocation4 + $0xa8] sm:$0xff]
    %v1616 = vld [vmem:[#allocation4 + $0xb0] sm:$0xff]
    %v1617 = vld [vmem:[#allocation4 + $0xb8] sm:$0xff]
    %v1618 = vld [vmem:[#allocation4 + $0xc0] sm:$0xff]
    %v1619 = vld [vmem:[#allocation4 + $0xc8] sm:$0xff]
    %v1620 = vld [vmem:[#allocation4 + $0xd0] sm:$0xff]
    %v1621 = vld [vmem:[#allocation4 + $0xd8] sm:$0xff]
    %v1622 = vld [vmem:[#allocation4 + $0xe0] sm:$0xff]
    %v1623 = vld [vmem:[#allocation4 + $0xe8] sm:$0xff]
    %v1624 = vld [vmem:[#allocation4 + $0xf0] sm:$0xff]
    %v1625 = vld [vmem:[#allocation4 + $0xf8] sm:$0xff]
    %v1626 = vld [vmem:[#allocation4 + $0x100] sm:$0xff]
    %v1627 = vld [vmem:[#allocation4 + $0x108] sm:$0xff]
    %v1628 = vld [vmem:[#allocation4 + $0x110] sm:$0xff]
    %v1629 = vld [vmem:[#allocation4 + $0x118] sm:$0xff]
    %v1630 = vld [vmem:[#allocation4 + $0x120] sm:$0xff]
    %v1631 = vld [vmem:[#allocation4 + $0x128] sm:$0xff]
    %v1632 = vld [vmem:[#allocation4 + $0x130] sm:$0xff]
    %v1633 = vld [vmem:[#allocation4 + $0x138] sm:$0xff]
    %v1634 = vld [vmem:[#allocation4 + $0x140] sm:$0xff]
    %v1635 = vld [vmem:[#allocation4 + $0x148] sm:$0xff]
    %v1636 = vld [vmem:[#allocation4 + $0x150] sm:$0xff]
    %v1637 = vld [vmem:[#allocation4 + $0x158] sm:$0xff]
    %v1638 = vld [vmem:[#allocation4 + $0x160] sm:$0xff]
    %v1639 = vld [vmem:[#allocation4 + $0x168] sm:$0xff]
    %v1640 = vld [vmem:[#allocation4 + $0x170] sm:$0xff]
    %v1641 = vld [vmem:[#allocation4 + $0x178] sm:$0xff]
    %v1642 = vld [vmem:[#allocation4 + $0x180] sm:$0xff]
    %v1643 = vld [vmem:[#allocation4 + $0x188] sm:$0xff]
    %v1644 = vld [vmem:[#allocation4 + $0x190] sm:$0xff]
    %v1645 = vld [vmem:[#allocation4 + $0x198] sm:$0xff]
    %v1646 = vld [vmem:[#allocation4 + $0x1a0] sm:$0xff]
    %v1647 = vld [vmem:[#allocation4 + $0x1a8] sm:$0xff]
    %v1648 = vld [vmem:[#allocation4 + $0x1b0] sm:$0xff]
    %v1649 = vld [vmem:[#allocation4 + $0x1b8] sm:$0xff]
    %v1650 = vld [vmem:[#allocation4 + $0x1c0] sm:$0xff]
    %v1651 = vld [vmem:[#allocation4 + $0x1c8] sm:$0xff]
    %v1652 = vld [vmem:[#allocation4 + $0x1d0] sm:$0xff]
    %v1653 = vld [vmem:[#allocation4 + $0x1d8] sm:$0xff]
    %v1654 = vld [vmem:[#allocation4 + $0x1e0] sm:$0xff]
    %v1655 = vld [vmem:[#allocation4 + $0x1e8] sm:$0xff]
    %v1656 = vld [vmem:[#allocation4 + $0x1f0] sm:$0xff]
    %v1657 = vld [vmem:[#allocation4 + $0x1f8] sm:$0xff]
    %1658 = vmatprep.subr.mxu0 %v1595
    %1659 = vmatpush1.msra.mxu0 %v1594
    %1660 = vmatprep.subr.mxu0 %v1599
    %1661 = vmatpush1.msra.mxu0 %v1598
    %1662 = vmatprep.subr.mxu0 %v1603
    %1663 = vmatpush1.msra.mxu0 %v1602
    %1664 = vmatprep.subr.mxu0 %v1607
    %1665 = vmatpush1.msra.mxu0 %v1606
    %1666 = vmatprep.subr.mxu0 %v1611
    %1667 = vmatpush1.msra.mxu0 %v1610
    %1668 = vmatprep.subr.mxu0 %v1615
    %1669 = vmatpush1.msra.mxu0 %v1614
    %1670 = vmatprep.subr.mxu0 %v1619
    %1671 = vmatpush1.msra.mxu0 %v1618
    %1672 = vmatprep.subr.mxu0 %v1623
    %1673 = vmatpush1.msra.mxu0 %v1622
    %1674 = vmatprep.subr.mxu0 %v1627
    %1675 = vmatpush1.msra.mxu0 %v1626
    %1676 = vmatprep.subr.mxu0 %v1631
    %1677 = vmatpush1.msra.mxu0 %v1630
    %1678 = vmatprep.subr.mxu0 %v1635
    %1679 = vmatpush1.msra.mxu0 %v1634
    %1680 = vmatprep.subr.mxu0 %v1639
    %1681 = vmatpush1.msra.mxu0 %v1638
    %1682 = vmatprep.subr.mxu0 %v1643
    %1683 = vmatpush1.msra.mxu0 %v1642
    %1684 = vmatprep.subr.mxu0 %v1647
    %1685 = vmatpush1.msra.mxu0 %v1646
    %1686 = vmatprep.subr.mxu0 %v1651
    %1687 = vmatpush1.msra.mxu0 %v1650
    %1688 = vmatprep.subr.mxu0 %v1655
    %1689 = vmatpush1.msra.mxu0 %v1654
    %1690 = vmatprep.subr.mxu0 0.0
    %1691 = vmatpush1.msra.mxu0 0.0
    %1692 = vmatprep.subr.mxu0 0.0
    %1693 = vmatpush1.msra.mxu0 0.0
    %1694 = vmatprep.subr.mxu0 0.0
    %1695 = vmatpush1.msra.mxu0 0.0
    %1696 = vmatprep.subr.mxu0 0.0
    %1697 = vmatpush1.msra.mxu0 0.0
    %1698 = vmatprep.subr.mxu0 0.0
    %1699 = vmatpush1.msra.mxu0 0.0
    %1700 = vmatprep.subr.mxu0 0.0
    %1701 = vmatpush1.msra.mxu0 0.0
    %1702 = vmatprep.subr.mxu0 0.0
    %1703 = vmatpush1.msra.mxu0 0.0
    %1704 = vmatprep.subr.mxu0 0.0
    %1705 = vmatpush1.msra.mxu0 0.0
    %1706 = vmatprep.subr.mxu0 0.0
    %1707 = vmatpush1.msra.mxu0 0.0
    %1708 = vmatprep.subr.mxu0 0.0
    %1709 = vmatpush1.msra.mxu0 0.0
    %1710 = vmatprep.subr.mxu0 0.0
    %1711 = vmatpush1.msra.mxu0 0.0
    %1712 = vmatprep.subr.mxu0 0.0
    %1713 = vmatpush1.msra.mxu0 0.0
    %1714 = vmatprep.subr.mxu0 0.0
    %1715 = vmatpush1.msra.mxu0 0.0
    %1716 = vmatprep.subr.mxu0 0.0
    %1717 = vmatpush1.msra.mxu0 0.0
    %1718 = vmatprep.subr.mxu0 0.0
    %1719 = vmatpush1.msra.mxu0 0.0
    %1720 = vmatprep.subr.mxu0 0.0
    %1721 = vmatpush1.msra.mxu0 0.0
    %1722 = vmatprep.mubr.f32.mxu0 0.0
    %1723 = vmatmul.mubr.f32.gmra.mrb[0].mxu0 %v1584
    %v1724 = vpop.f32.mrb[0].mxu0
    %v1725 = vadd.f32 0.0, %v1724
    %v1726 = vpop.f32.mrb[0].mxu0
    %v1727 = vadd.f32 0.0, %v1726
    %1728 = vdwg.mxu0
    %1729 = vmatprep.subr.mxu0 %v1597
    %1730 = vmatpush1.msra.mxu0 %v1596
    %1731 = vmatprep.subr.mxu0 %v1601
    %1732 = vmatpush1.msra.mxu0 %v1600
    %1733 = vmatprep.subr.mxu0 %v1605
    %1734 = vmatpush1.msra.mxu0 %v1604
    %1735 = vmatprep.subr.mxu0 %v1609
    %1736 = vmatpush1.msra.mxu0 %v1608
    %1737 = vmatprep.subr.mxu0 %v1613
    %1738 = vmatpush1.msra.mxu0 %v1612
    %1739 = vmatprep.subr.mxu0 %v1617
    %1740 = vmatpush1.msra.mxu0 %v1616
    %1741 = vmatprep.subr.mxu0 %v1621
    %1742 = vmatpush1.msra.mxu0 %v1620
    %1743 = vmatprep.subr.mxu0 %v1625
    %1744 = vmatpush1.msra.mxu0 %v1624
    %1745 = vmatprep.subr.mxu0 %v1629
    %1746 = vmatpush1.msra.mxu0 %v1628
    %1747 = vmatprep.subr.mxu0 %v1633
    %1748 = vmatpush1.msra.mxu0 %v1632
    %1749 = vmatprep.subr.mxu0 %v1637
    %1750 = vmatpush1.msra.mxu0 %v1636
    %1751 = vmatprep.subr.mxu0 %v1641
    %1752 = vmatpush1.msra.mxu0 %v1640
    %1753 = vmatprep.subr.mxu0 %v1645
    %1754 = vmatpush1.msra.mxu0 %v1644
    %1755 = vmatprep.subr.mxu0 %v1649
    %1756 = vmatpush1.msra.mxu0 %v1648
    %1757 = vmatprep.subr.mxu0 %v1653
    %1758 = vmatpush1.msra.mxu0 %v1652
    %1759 = vmatprep.subr.mxu0 %v1657
    %1760 = vmatpush1.msra.mxu0 %v1656
    %1761 = vmatprep.subr.mxu0 0.0
    %1762 = vmatpush1.msra.mxu0 0.0
    %1763 = vmatprep.subr.mxu0 0.0
    %1764 = vmatpush1.msra.mxu0 0.0
    %1765 = vmatprep.subr.mxu0 0.0
    %1766 = vmatpush1.msra.mxu0 0.0
    %1767 = vmatprep.subr.mxu0 0.0
    %1768 = vmatpush1.msra.mxu0 0.0
    %1769 = vmatprep.subr.mxu0 0.0
    %1770 = vmatpush1.msra.mxu0 0.0
    %1771 = vmatprep.subr.mxu0 0.0
    %1772 = vmatpush1.msra.mxu0 0.0
    %1773 = vmatprep.subr.mxu0 0.0
    %1774 = vmatpush1.msra.mxu0 0.0
    %1775 = vmatprep.subr.mxu0 0.0
    %1776 = vmatpush1.msra.mxu0 0.0
    %1777 = vmatprep.subr.mxu0 0.0
    %1778 = vmatpush1.msra.mxu0 0.0
    %1779 = vmatprep.subr.mxu0 0.0
    %1780 = vmatpush1.msra.mxu0 0.0
    %1781 = vmatprep.subr.mxu0 0.0
    %1782 = vmatpush1.msra.mxu0 0.0
    %1783 = vmatprep.subr.mxu0 0.0
    %1784 = vmatpush1.msra.mxu0 0.0
    %1785 = vmatprep.subr.mxu0 0.0
    %1786 = vmatpush1.msra.mxu0 0.0
    %1787 = vmatprep.subr.mxu0 0.0
    %1788 = vmatpush1.msra.mxu0 0.0
    %1789 = vmatprep.subr.mxu0 0.0
    %1790 = vmatpush1.msra.mxu0 0.0
    %1791 = vmatprep.subr.mxu0 0.0
    %1792 = vmatpush1.msra.mxu0 0.0
    %1793 = vmatprep.mubr.f32.mxu0 0.0
    %1794 = vmatmul.mubr.f32.gmra.mrb[0].mxu0 %v1584
    %v1795 = vpop.f32.mrb[0].mxu0
    %v1796 = vadd.f32 0.0, %v1795
    %v1797 = vpop.f32.mrb[0].mxu0
    %v1798 = vadd.f32 0.0, %v1797
    %1799 = vdwg.mxu0
    %v1800 = vadd.f32 %v1590, %v1725
    %v1801 = vadd.f32 %v1591, %v1727
    %v1802 = vadd.f32 %v1592, %v1796
    %v1803 = vadd.f32 %v1593, %v1798
    %v1804 = vxor.u32 %v1800, 2147483648
    %v1805 = vmul.f32 %v1804, 1.442695
    %v1806 = vpow.pop %v1805
    %v1807 = vadd.f32 %v1806, 1.0
    %v1808 = vrcp.pop %v1807
    %v1809 = vmul.f32 1.0, %v1808
    %v1810 = vxor.u32 %v1801, 2147483648
    %v1811 = vmul.f32 %v1810, 1.442695
    %v1812 = vpow.pop %v1811
    %v1813 = vadd.f32 %v1812, 1.0
    %v1814 = vrcp.pop %v1813
    %v1815 = vmul.f32 1.0, %v1814
    %v1816 = vtanh.pop %v1802
    %v1817 = vxor.u32 %v1803, 2147483648
    %v1818 = vmul.f32 %v1817, 1.442695
    %v1819 = vpow.pop %v1818
    %v1820 = vadd.f32 %v1819, 1.0
    %v1821 = vrcp.pop %v1820
    %v1822 = vmul.f32 1.0, %v1821
    %v1823 = vmul.f32 %v1815, %v1582
    %v1824 = vmul.f32 %v1809, %v1816
    %v1825 = vadd.f32 %v1823, %v1824
    %v1826 = vtanh.pop %v1825
    %v1827 = vmul.f32 %v1822, %v1826
    %s1828 = scalar_lea.vmem [#allocation3], 40
    %1829 = vst [vmem:[%s1828] sm:$0xff] %v1827
    %s1830 = smul.u32 6, 4
    %s1831 = smul.addr %s1830, 8
    %s1832 = scalar_lea.vmem [#allocation2], %s1831
    %v1833 = vld [vmem:[%s1832] sm:$0xff]
    %v1834 = vld [vmem:[%s1832 + $0x8] sm:$0xff]
    %v1835 = vld [vmem:[%s1832 + $0x10] sm:$0xff]
    %v1836 = vld [vmem:[%s1832 + $0x18] sm:$0xff]
    %v1837 = vld [vmem:[#allocation4] sm:$0xff]
    %v1838 = vld [vmem:[#allocation4 + $0x8] sm:$0xff]
    %v1839 = vld [vmem:[#allocation4 + $0x10] sm:$0xff]
    %v1840 = vld [vmem:[#allocation4 + $0x18] sm:$0xff]
    %v1841 = vld [vmem:[#allocation4 + $0x20] sm:$0xff]
    %v1842 = vld [vmem:[#allocation4 + $0x28] sm:$0xff]
    %v1843 = vld [vmem:[#allocation4 + $0x30] sm:$0xff]
    %v1844 = vld [vmem:[#allocation4 + $0x38] sm:$0xff]
    %v1845 = vld [vmem:[#allocation4 + $0x40] sm:$0xff]
    %v1846 = vld [vmem:[#allocation4 + $0x48] sm:$0xff]
    %v1847 = vld [vmem:[#allocation4 + $0x50] sm:$0xff]
    %v1848 = vld [vmem:[#allocation4 + $0x58] sm:$0xff]
    %v1849 = vld [vmem:[#allocation4 + $0x60] sm:$0xff]
    %v1850 = vld [vmem:[#allocation4 + $0x68] sm:$0xff]
    %v1851 = vld [vmem:[#allocation4 + $0x70] sm:$0xff]
    %v1852 = vld [vmem:[#allocation4 + $0x78] sm:$0xff]
    %v1853 = vld [vmem:[#allocation4 + $0x80] sm:$0xff]
    %v1854 = vld [vmem:[#allocation4 + $0x88] sm:$0xff]
    %v1855 = vld [vmem:[#allocation4 + $0x90] sm:$0xff]
    %v1856 = vld [vmem:[#allocation4 + $0x98] sm:$0xff]
    %v1857 = vld [vmem:[#allocation4 + $0xa0] sm:$0xff]
    %v1858 = vld [vmem:[#allocation4 + $0xa8] sm:$0xff]
    %v1859 = vld [vmem:[#allocation4 + $0xb0] sm:$0xff]
    %v1860 = vld [vmem:[#allocation4 + $0xb8] sm:$0xff]
    %v1861 = vld [vmem:[#allocation4 + $0xc0] sm:$0xff]
    %v1862 = vld [vmem:[#allocation4 + $0xc8] sm:$0xff]
    %v1863 = vld [vmem:[#allocation4 + $0xd0] sm:$0xff]
    %v1864 = vld [vmem:[#allocation4 + $0xd8] sm:$0xff]
    %v1865 = vld [vmem:[#allocation4 + $0xe0] sm:$0xff]
    %v1866 = vld [vmem:[#allocation4 + $0xe8] sm:$0xff]
    %v1867 = vld [vmem:[#allocation4 + $0xf0] sm:$0xff]
    %v1868 = vld [vmem:[#allocation4 + $0xf8] sm:$0xff]
    %v1869 = vld [vmem:[#allocation4 + $0x100] sm:$0xff]
    %v1870 = vld [vmem:[#allocation4 + $0x108] sm:$0xff]
    %v1871 = vld [vmem:[#allocation4 + $0x110] sm:$0xff]
    %v1872 = vld [vmem:[#allocation4 + $0x118] sm:$0xff]
    %v1873 = vld [vmem:[#allocation4 + $0x120] sm:$0xff]
    %v1874 = vld [vmem:[#allocation4 + $0x128] sm:$0xff]
    %v1875 = vld [vmem:[#allocation4 + $0x130] sm:$0xff]
    %v1876 = vld [vmem:[#allocation4 + $0x138] sm:$0xff]
    %v1877 = vld [vmem:[#allocation4 + $0x140] sm:$0xff]
    %v1878 = vld [vmem:[#allocation4 + $0x148] sm:$0xff]
    %v1879 = vld [vmem:[#allocation4 + $0x150] sm:$0xff]
    %v1880 = vld [vmem:[#allocation4 + $0x158] sm:$0xff]
    %v1881 = vld [vmem:[#allocation4 + $0x160] sm:$0xff]
    %v1882 = vld [vmem:[#allocation4 + $0x168] sm:$0xff]
    %v1883 = vld [vmem:[#allocation4 + $0x170] sm:$0xff]
    %v1884 = vld [vmem:[#allocation4 + $0x178] sm:$0xff]
    %v1885 = vld [vmem:[#allocation4 + $0x180] sm:$0xff]
    %v1886 = vld [vmem:[#allocation4 + $0x188] sm:$0xff]
    %v1887 = vld [vmem:[#allocation4 + $0x190] sm:$0xff]
    %v1888 = vld [vmem:[#allocation4 + $0x198] sm:$0xff]
    %v1889 = vld [vmem:[#allocation4 + $0x1a0] sm:$0xff]
    %v1890 = vld [vmem:[#allocation4 + $0x1a8] sm:$0xff]
    %v1891 = vld [vmem:[#allocation4 + $0x1b0] sm:$0xff]
    %v1892 = vld [vmem:[#allocation4 + $0x1b8] sm:$0xff]
    %v1893 = vld [vmem:[#allocation4 + $0x1c0] sm:$0xff]
    %v1894 = vld [vmem:[#allocation4 + $0x1c8] sm:$0xff]
    %v1895 = vld [vmem:[#allocation4 + $0x1d0] sm:$0xff]
    %v1896 = vld [vmem:[#allocation4 + $0x1d8] sm:$0xff]
    %v1897 = vld [vmem:[#allocation4 + $0x1e0] sm:$0xff]
    %v1898 = vld [vmem:[#allocation4 + $0x1e8] sm:$0xff]
    %v1899 = vld [vmem:[#allocation4 + $0x1f0] sm:$0xff]
    %v1900 = vld [vmem:[#allocation4 + $0x1f8] sm:$0xff]
    %1901 = vmatprep.subr.mxu0 %v1838
    %1902 = vmatpush1.msra.mxu0 %v1837
    %1903 = vmatprep.subr.mxu0 %v1842
    %1904 = vmatpush1.msra.mxu0 %v1841
    %1905 = vmatprep.subr.mxu0 %v1846
    %1906 = vmatpush1.msra.mxu0 %v1845
    %1907 = vmatprep.subr.mxu0 %v1850
    %1908 = vmatpush1.msra.mxu0 %v1849
    %1909 = vmatprep.subr.mxu0 %v1854
    %1910 = vmatpush1.msra.mxu0 %v1853
    %1911 = vmatprep.subr.mxu0 %v1858
    %1912 = vmatpush1.msra.mxu0 %v1857
    %1913 = vmatprep.subr.mxu0 %v1862
    %1914 = vmatpush1.msra.mxu0 %v1861
    %1915 = vmatprep.subr.mxu0 %v1866
    %1916 = vmatpush1.msra.mxu0 %v1865
    %1917 = vmatprep.subr.mxu0 %v1870
    %1918 = vmatpush1.msra.mxu0 %v1869
    %1919 = vmatprep.subr.mxu0 %v1874
    %1920 = vmatpush1.msra.mxu0 %v1873
    %1921 = vmatprep.subr.mxu0 %v1878
    %1922 = vmatpush1.msra.mxu0 %v1877
    %1923 = vmatprep.subr.mxu0 %v1882
    %1924 = vmatpush1.msra.mxu0 %v1881
    %1925 = vmatprep.subr.mxu0 %v1886
    %1926 = vmatpush1.msra.mxu0 %v1885
    %1927 = vmatprep.subr.mxu0 %v1890
    %1928 = vmatpush1.msra.mxu0 %v1889
    %1929 = vmatprep.subr.mxu0 %v1894
    %1930 = vmatpush1.msra.mxu0 %v1893
    %1931 = vmatprep.subr.mxu0 %v1898
    %1932 = vmatpush1.msra.mxu0 %v1897
    %1933 = vmatprep.subr.mxu0 0.0
    %1934 = vmatpush1.msra.mxu0 0.0
    %1935 = vmatprep.subr.mxu0 0.0
    %1936 = vmatpush1.msra.mxu0 0.0
    %1937 = vmatprep.subr.mxu0 0.0
    %1938 = vmatpush1.msra.mxu0 0.0
    %1939 = vmatprep.subr.mxu0 0.0
    %1940 = vmatpush1.msra.mxu0 0.0
    %1941 = vmatprep.subr.mxu0 0.0
    %1942 = vmatpush1.msra.mxu0 0.0
    %1943 = vmatprep.subr.mxu0 0.0
    %1944 = vmatpush1.msra.mxu0 0.0
    %1945 = vmatprep.subr.mxu0 0.0
    %1946 = vmatpush1.msra.mxu0 0.0
    %1947 = vmatprep.subr.mxu0 0.0
    %1948 = vmatpush1.msra.mxu0 0.0
    %1949 = vmatprep.subr.mxu0 0.0
    %1950 = vmatpush1.msra.mxu0 0.0
    %1951 = vmatprep.subr.mxu0 0.0
    %1952 = vmatpush1.msra.mxu0 0.0
    %1953 = vmatprep.subr.mxu0 0.0
    %1954 = vmatpush1.msra.mxu0 0.0
    %1955 = vmatprep.subr.mxu0 0.0
    %1956 = vmatpush1.msra.mxu0 0.0
    %1957 = vmatprep.subr.mxu0 0.0
    %1958 = vmatpush1.msra.mxu0 0.0
    %1959 = vmatprep.subr.mxu0 0.0
    %1960 = vmatpush1.msra.mxu0 0.0
    %1961 = vmatprep.subr.mxu0 0.0
    %1962 = vmatpush1.msra.mxu0 0.0
    %1963 = vmatprep.subr.mxu0 0.0
    %1964 = vmatpush1.msra.mxu0 0.0
    %1965 = vmatprep.mubr.f32.mxu0 0.0
    %1966 = vmatmul.mubr.f32.gmra.mrb[0].mxu0 %v1827
    %v1967 = vpop.f32.mrb[0].mxu0
    %v1968 = vadd.f32 0.0, %v1967
    %v1969 = vpop.f32.mrb[0].mxu0
    %v1970 = vadd.f32 0.0, %v1969
    %1971 = vdwg.mxu0
    %1972 = vmatprep.subr.mxu0 %v1840
    %1973 = vmatpush1.msra.mxu0 %v1839
    %1974 = vmatprep.subr.mxu0 %v1844
    %1975 = vmatpush1.msra.mxu0 %v1843
    %1976 = vmatprep.subr.mxu0 %v1848
    %1977 = vmatpush1.msra.mxu0 %v1847
    %1978 = vmatprep.subr.mxu0 %v1852
    %1979 = vmatpush1.msra.mxu0 %v1851
    %1980 = vmatprep.subr.mxu0 %v1856
    %1981 = vmatpush1.msra.mxu0 %v1855
    %1982 = vmatprep.subr.mxu0 %v1860
    %1983 = vmatpush1.msra.mxu0 %v1859
    %1984 = vmatprep.subr.mxu0 %v1864
    %1985 = vmatpush1.msra.mxu0 %v1863
    %1986 = vmatprep.subr.mxu0 %v1868
    %1987 = vmatpush1.msra.mxu0 %v1867
    %1988 = vmatprep.subr.mxu0 %v1872
    %1989 = vmatpush1.msra.mxu0 %v1871
    %1990 = vmatprep.subr.mxu0 %v1876
    %1991 = vmatpush1.msra.mxu0 %v1875
    %1992 = vmatprep.subr.mxu0 %v1880
    %1993 = vmatpush1.msra.mxu0 %v1879
    %1994 = vmatprep.subr.mxu0 %v1884
    %1995 = vmatpush1.msra.mxu0 %v1883
    %1996 = vmatprep.subr.mxu0 %v1888
    %1997 = vmatpush1.msra.mxu0 %v1887
    %1998 = vmatprep.subr.mxu0 %v1892
    %1999 = vmatpush1.msra.mxu0 %v1891
    %2000 = vmatprep.subr.mxu0 %v1896
    %2001 = vmatpush1.msra.mxu0 %v1895
    %2002 = vmatprep.subr.mxu0 %v1900
    %2003 = vmatpush1.msra.mxu0 %v1899
    %2004 = vmatprep.subr.mxu0 0.0
    %2005 = vmatpush1.msra.mxu0 0.0
    %2006 = vmatprep.subr.mxu0 0.0
    %2007 = vmatpush1.msra.mxu0 0.0
    %2008 = vmatprep.subr.mxu0 0.0
    %2009 = vmatpush1.msra.mxu0 0.0
    %2010 = vmatprep.subr.mxu0 0.0
    %2011 = vmatpush1.msra.mxu0 0.0
    %2012 = vmatprep.subr.mxu0 0.0
    %2013 = vmatpush1.msra.mxu0 0.0
    %2014 = vmatprep.subr.mxu0 0.0
    %2015 = vmatpush1.msra.mxu0 0.0
    %2016 = vmatprep.subr.mxu0 0.0
    %2017 = vmatpush1.msra.mxu0 0.0
    %2018 = vmatprep.subr.mxu0 0.0
    %2019 = vmatpush1.msra.mxu0 0.0
    %2020 = vmatprep.subr.mxu0 0.0
    %2021 = vmatpush1.msra.mxu0 0.0
    %2022 = vmatprep.subr.mxu0 0.0
    %2023 = vmatpush1.msra.mxu0 0.0
    %2024 = vmatprep.subr.mxu0 0.0
    %2025 = vmatpush1.msra.mxu0 0.0
    %2026 = vmatprep.subr.mxu0 0.0
    %2027 = vmatpush1.msra.mxu0 0.0
    %2028 = vmatprep.subr.mxu0 0.0
    %2029 = vmatpush1.msra.mxu0 0.0
    %2030 = vmatprep.subr.mxu0 0.0
    %2031 = vmatpush1.msra.mxu0 0.0
    %2032 = vmatprep.subr.mxu0 0.0
    %2033 = vmatpush1.msra.mxu0 0.0
    %2034 = vmatprep.subr.mxu0 0.0
    %2035 = vmatpush1.msra.mxu0 0.0
    %2036 = vmatprep.mubr.f32.mxu0 0.0
    %2037 = vmatmul.mubr.f32.gmra.mrb[0].mxu0 %v1827
    %v2038 = vpop.f32.mrb[0].mxu0
    %v2039 = vadd.f32 0.0, %v2038
    %v2040 = vpop.f32.mrb[0].mxu0
    %v2041 = vadd.f32 0.0, %v2040
    %2042 = vdwg.mxu0
    %v2043 = vadd.f32 %v1833, %v1968
    %v2044 = vadd.f32 %v1834, %v1970
    %v2045 = vadd.f32 %v1835, %v2039
    %v2046 = vadd.f32 %v1836, %v2041
    %v2047 = vxor.u32 %v2043, 2147483648
    %v2048 = vmul.f32 %v2047, 1.442695
    %v2049 = vpow.pop %v2048
    %v2050 = vadd.f32 %v2049, 1.0
    %v2051 = vrcp.pop %v2050
    %v2052 = vmul.f32 1.0, %v2051
    %v2053 = vxor.u32 %v2044, 2147483648
    %v2054 = vmul.f32 %v2053, 1.442695
    %v2055 = vpow.pop %v2054
    %v2056 = vadd.f32 %v2055, 1.0
    %v2057 = vrcp.pop %v2056
    %v2058 = vmul.f32 1.0, %v2057
    %v2059 = vtanh.pop %v2045
    %v2060 = vxor.u32 %v2046, 2147483648
    %v2061 = vmul.f32 %v2060, 1.442695
    %v2062 = vpow.pop %v2061
    %v2063 = vadd.f32 %v2062, 1.0
    %v2064 = vrcp.pop %v2063
    %v2065 = vmul.f32 1.0, %v2064
    %v2066 = vmul.f32 %v2058, %v1825
    %v2067 = vmul.f32 %v2052, %v2059
    %v2068 = vadd.f32 %v2066, %v2067
    %v2069 = vtanh.pop %v2068
    %v2070 = vmul.f32 %v2065, %v2069
    %s2071 = scalar_lea.vmem [#allocation3], 48
    %2072 = vst [vmem:[%s2071] sm:$0xff] %v2070
    %s2073 = smul.u32 7, 4
    %s2074 = smul.addr %s2073, 8
    %s2075 = scalar_lea.vmem [#allocation2], %s2074
    %v2076 = vld [vmem:[%s2075] sm:$0xff]
    %v2077 = vld [vmem:[%s2075 + $0x8] sm:$0xff]
    %v2078 = vld [vmem:[%s2075 + $0x10] sm:$0xff]
    %v2079 = vld [vmem:[%s2075 + $0x18] sm:$0xff]
    %v2080 = vld [vmem:[#allocation4] sm:$0xff]
    %v2081 = vld [vmem:[#allocation4 + $0x8] sm:$0xff]
    %v2082 = vld [vmem:[#allocation4 + $0x10] sm:$0xff]
    %v2083 = vld [vmem:[#allocation4 + $0x18] sm:$0xff]
    %v2084 = vld [vmem:[#allocation4 + $0x20] sm:$0xff]
    %v2085 = vld [vmem:[#allocation4 + $0x28] sm:$0xff]
    %v2086 = vld [vmem:[#allocation4 + $0x30] sm:$0xff]
    %v2087 = vld [vmem:[#allocation4 + $0x38] sm:$0xff]
    %v2088 = vld [vmem:[#allocation4 + $0x40] sm:$0xff]
    %v2089 = vld [vmem:[#allocation4 + $0x48] sm:$0xff]
    %v2090 = vld [vmem:[#allocation4 + $0x50] sm:$0xff]
    %v2091 = vld [vmem:[#allocation4 + $0x58] sm:$0xff]
    %v2092 = vld [vmem:[#allocation4 + $0x60] sm:$0xff]
    %v2093 = vld [vmem:[#allocation4 + $0x68] sm:$0xff]
    %v2094 = vld [vmem:[#allocation4 + $0x70] sm:$0xff]
    %v2095 = vld [vmem:[#allocation4 + $0x78] sm:$0xff]
    %v2096 = vld [vmem:[#allocation4 + $0x80] sm:$0xff]
    %v2097 = vld [vmem:[#allocation4 + $0x88] sm:$0xff]
    %v2098 = vld [vmem:[#allocation4 + $0x90] sm:$0xff]
    %v2099 = vld [vmem:[#allocation4 + $0x98] sm:$0xff]
    %v2100 = vld [vmem:[#allocation4 + $0xa0] sm:$0xff]
    %v2101 = vld [vmem:[#allocation4 + $0xa8] sm:$0xff]
    %v2102 = vld [vmem:[#allocation4 + $0xb0] sm:$0xff]
    %v2103 = vld [vmem:[#allocation4 + $0xb8] sm:$0xff]
    %v2104 = vld [vmem:[#allocation4 + $0xc0] sm:$0xff]
    %v2105 = vld [vmem:[#allocation4 + $0xc8] sm:$0xff]
    %v2106 = vld [vmem:[#allocation4 + $0xd0] sm:$0xff]
    %v2107 = vld [vmem:[#allocation4 + $0xd8] sm:$0xff]
    %v2108 = vld [vmem:[#allocation4 + $0xe0] sm:$0xff]
    %v2109 = vld [vmem:[#allocation4 + $0xe8] sm:$0xff]
    %v2110 = vld [vmem:[#allocation4 + $0xf0] sm:$0xff]
    %v2111 = vld [vmem:[#allocation4 + $0xf8] sm:$0xff]
    %v2112 = vld [vmem:[#allocation4 + $0x100] sm:$0xff]
    %v2113 = vld [vmem:[#allocation4 + $0x108] sm:$0xff]
    %v2114 = vld [vmem:[#allocation4 + $0x110] sm:$0xff]
    %v2115 = vld [vmem:[#allocation4 + $0x118] sm:$0xff]
    %v2116 = vld [vmem:[#allocation4 + $0x120] sm:$0xff]
    %v2117 = vld [vmem:[#allocation4 + $0x128] sm:$0xff]
    %v2118 = vld [vmem:[#allocation4 + $0x130] sm:$0xff]
    %v2119 = vld [vmem:[#allocation4 + $0x138] sm:$0xff]
    %v2120 = vld [vmem:[#allocation4 + $0x140] sm:$0xff]
    %v2121 = vld [vmem:[#allocation4 + $0x148] sm:$0xff]
    %v2122 = vld [vmem:[#allocation4 + $0x150] sm:$0xff]
    %v2123 = vld [vmem:[#allocation4 + $0x158] sm:$0xff]
    %v2124 = vld [vmem:[#allocation4 + $0x160] sm:$0xff]
    %v2125 = vld [vmem:[#allocation4 + $0x168] sm:$0xff]
    %v2126 = vld [vmem:[#allocation4 + $0x170] sm:$0xff]
    %v2127 = vld [vmem:[#allocation4 + $0x178] sm:$0xff]
    %v2128 = vld [vmem:[#allocation4 + $0x180] sm:$0xff]
    %v2129 = vld [vmem:[#allocation4 + $0x188] sm:$0xff]
    %v2130 = vld [vmem:[#allocation4 + $0x190] sm:$0xff]
    %v2131 = vld [vmem:[#allocation4 + $0x198] sm:$0xff]
    %v2132 = vld [vmem:[#allocation4 + $0x1a0] sm:$0xff]
    %v2133 = vld [vmem:[#allocation4 + $0x1a8] sm:$0xff]
    %v2134 = vld [vmem:[#allocation4 + $0x1b0] sm:$0xff]
    %v2135 = vld [vmem:[#allocation4 + $0x1b8] sm:$0xff]
    %v2136 = vld [vmem:[#allocation4 + $0x1c0] sm:$0xff]
    %v2137 = vld [vmem:[#allocation4 + $0x1c8] sm:$0xff]
    %v2138 = vld [vmem:[#allocation4 + $0x1d0] sm:$0xff]
    %v2139 = vld [vmem:[#allocation4 + $0x1d8] sm:$0xff]
    %v2140 = vld [vmem:[#allocation4 + $0x1e0] sm:$0xff]
    %v2141 = vld [vmem:[#allocation4 + $0x1e8] sm:$0xff]
    %v2142 = vld [vmem:[#allocation4 + $0x1f0] sm:$0xff]
    %v2143 = vld [vmem:[#allocation4 + $0x1f8] sm:$0xff]
    %2144 = vmatprep.subr.mxu0 %v2081
    %2145 = vmatpush1.msra.mxu0 %v2080
    %2146 = vmatprep.subr.mxu0 %v2085
    %2147 = vmatpush1.msra.mxu0 %v2084
    %2148 = vmatprep.subr.mxu0 %v2089
    %2149 = vmatpush1.msra.mxu0 %v2088
    %2150 = vmatprep.subr.mxu0 %v2093
    %2151 = vmatpush1.msra.mxu0 %v2092
    %2152 = vmatprep.subr.mxu0 %v2097
    %2153 = vmatpush1.msra.mxu0 %v2096
    %2154 = vmatprep.subr.mxu0 %v2101
    %2155 = vmatpush1.msra.mxu0 %v2100
    %2156 = vmatprep.subr.mxu0 %v2105
    %2157 = vmatpush1.msra.mxu0 %v2104
    %2158 = vmatprep.subr.mxu0 %v2109
    %2159 = vmatpush1.msra.mxu0 %v2108
    %2160 = vmatprep.subr.mxu0 %v2113
    %2161 = vmatpush1.msra.mxu0 %v2112
    %2162 = vmatprep.subr.mxu0 %v2117
    %2163 = vmatpush1.msra.mxu0 %v2116
    %2164 = vmatprep.subr.mxu0 %v2121
    %2165 = vmatpush1.msra.mxu0 %v2120
    %2166 = vmatprep.subr.mxu0 %v2125
    %2167 = vmatpush1.msra.mxu0 %v2124
    %2168 = vmatprep.subr.mxu0 %v2129
    %2169 = vmatpush1.msra.mxu0 %v2128
    %2170 = vmatprep.subr.mxu0 %v2133
    %2171 = vmatpush1.msra.mxu0 %v2132
    %2172 = vmatprep.subr.mxu0 %v2137
    %2173 = vmatpush1.msra.mxu0 %v2136
    %2174 = vmatprep.subr.mxu0 %v2141
    %2175 = vmatpush1.msra.mxu0 %v2140
    %2176 = vmatprep.subr.mxu0 0.0
    %2177 = vmatpush1.msra.mxu0 0.0
    %2178 = vmatprep.subr.mxu0 0.0
    %2179 = vmatpush1.msra.mxu0 0.0
    %2180 = vmatprep.subr.mxu0 0.0
    %2181 = vmatpush1.msra.mxu0 0.0
    %2182 = vmatprep.subr.mxu0 0.0
    %2183 = vmatpush1.msra.mxu0 0.0
    %2184 = vmatprep.subr.mxu0 0.0
    %2185 = vmatpush1.msra.mxu0 0.0
    %2186 = vmatprep.subr.mxu0 0.0
    %2187 = vmatpush1.msra.mxu0 0.0
    %2188 = vmatprep.subr.mxu0 0.0
    %2189 = vmatpush1.msra.mxu0 0.0
    %2190 = vmatprep.subr.mxu0 0.0
    %2191 = vmatpush1.msra.mxu0 0.0
    %2192 = vmatprep.subr.mxu0 0.0
    %2193 = vmatpush1.msra.mxu0 0.0
    %2194 = vmatprep.subr.mxu0 0.0
    %2195 = vmatpush1.msra.mxu0 0.0
    %2196 = vmatprep.subr.mxu0 0.0
    %2197 = vmatpush1.msra.mxu0 0.0
    %2198 = vmatprep.subr.mxu0 0.0
    %2199 = vmatpush1.msra.mxu0 0.0
    %2200 = vmatprep.subr.mxu0 0.0
    %2201 = vmatpush1.msra.mxu0 0.0
    %2202 = vmatprep.subr.mxu0 0.0
    %2203 = vmatpush1.msra.mxu0 0.0
    %2204 = vmatprep.subr.mxu0 0.0
    %2205 = vmatpush1.msra.mxu0 0.0
    %2206 = vmatprep.subr.mxu0 0.0
    %2207 = vmatpush1.msra.mxu0 0.0
    %2208 = vmatprep.mubr.f32.mxu0 0.0
    %2209 = vmatmul.mubr.f32.gmra.mrb[0].mxu0 %v2070
    %v2210 = vpop.f32.mrb[0].mxu0
    %v2211 = vadd.f32 0.0, %v2210
    %v2212 = vpop.f32.mrb[0].mxu0
    %v2213 = vadd.f32 0.0, %v2212
    %2214 = vdwg.mxu0
    %2215 = vmatprep.subr.mxu0 %v2083
    %2216 = vmatpush1.msra.mxu0 %v2082
    %2217 = vmatprep.subr.mxu0 %v2087
    %2218 = vmatpush1.msra.mxu0 %v2086
    %2219 = vmatprep.subr.mxu0 %v2091
    %2220 = vmatpush1.msra.mxu0 %v2090
    %2221 = vmatprep.subr.mxu0 %v2095
    %2222 = vmatpush1.msra.mxu0 %v2094
    %2223 = vmatprep.subr.mxu0 %v2099
    %2224 = vmatpush1.msra.mxu0 %v2098
    %2225 = vmatprep.subr.mxu0 %v2103
    %2226 = vmatpush1.msra.mxu0 %v2102
    %2227 = vmatprep.subr.mxu0 %v2107
    %2228 = vmatpush1.msra.mxu0 %v2106
    %2229 = vmatprep.subr.mxu0 %v2111
    %2230 = vmatpush1.msra.mxu0 %v2110
    %2231 = vmatprep.subr.mxu0 %v2115
    %2232 = vmatpush1.msra.mxu0 %v2114
    %2233 = vmatprep.subr.mxu0 %v2119
    %2234 = vmatpush1.msra.mxu0 %v2118
    %2235 = vmatprep.subr.mxu0 %v2123
    %2236 = vmatpush1.msra.mxu0 %v2122
    %2237 = vmatprep.subr.mxu0 %v2127
    %2238 = vmatpush1.msra.mxu0 %v2126
    %2239 = vmatprep.subr.mxu0 %v2131
    %2240 = vmatpush1.msra.mxu0 %v2130
    %2241 = vmatprep.subr.mxu0 %v2135
    %2242 = vmatpush1.msra.mxu0 %v2134
    %2243 = vmatprep.subr.mxu0 %v2139
    %2244 = vmatpush1.msra.mxu0 %v2138
    %2245 = vmatprep.subr.mxu0 %v2143
    %2246 = vmatpush1.msra.mxu0 %v2142
    %2247 = vmatprep.subr.mxu0 0.0
    %2248 = vmatpush1.msra.mxu0 0.0
    %2249 = vmatprep.subr.mxu0 0.0
    %2250 = vmatpush1.msra.mxu0 0.0
    %2251 = vmatprep.subr.mxu0 0.0
    %2252 = vmatpush1.msra.mxu0 0.0
    %2253 = vmatprep.subr.mxu0 0.0
    %2254 = vmatpush1.msra.mxu0 0.0
    %2255 = vmatprep.subr.mxu0 0.0
    %2256 = vmatpush1.msra.mxu0 0.0
    %2257 = vmatprep.subr.mxu0 0.0
    %2258 = vmatpush1.msra.mxu0 0.0
    %2259 = vmatprep.subr.mxu0 0.0
    %2260 = vmatpush1.msra.mxu0 0.0
    %2261 = vmatprep.subr.mxu0 0.0
    %2262 = vmatpush1.msra.mxu0 0.0
    %2263 = vmatprep.subr.mxu0 0.0
    %2264 = vmatpush1.msra.mxu0 0.0
    %2265 = vmatprep.subr.mxu0 0.0
    %2266 = vmatpush1.msra.mxu0 0.0
    %2267 = vmatprep.subr.mxu0 0.0
    %2268 = vmatpush1.msra.mxu0 0.0
    %2269 = vmatprep.subr.mxu0 0.0
    %2270 = vmatpush1.msra.mxu0 0.0
    %2271 = vmatprep.subr.mxu0 0.0
    %2272 = vmatpush1.msra.mxu0 0.0
    %2273 = vmatprep.subr.mxu0 0.0
    %2274 = vmatpush1.msra.mxu0 0.0
    %2275 = vmatprep.subr.mxu0 0.0
    %2276 = vmatpush1.msra.mxu0 0.0
    %2277 = vmatprep.subr.mxu0 0.0
    %2278 = vmatpush1.msra.mxu0 0.0
    %2279 = vmatprep.mubr.f32.mxu0 0.0
    %2280 = vmatmul.mubr.f32.gmra.mrb[0].mxu0 %v2070
    %v2281 = vpop.f32.mrb[0].mxu0
    %v2282 = vadd.f32 0.0, %v2281
    %v2283 = vpop.f32.mrb[0].mxu0
    %v2284 = vadd.f32 0.0, %v2283
    %2285 = vdwg.mxu0
    %v2286 = vadd.f32 %v2076, %v2211
    %v2287 = vadd.f32 %v2077, %v2213
    %v2288 = vadd.f32 %v2078, %v2282
    %v2289 = vadd.f32 %v2079, %v2284
    %v2290 = vxor.u32 %v2286, 2147483648
    %v2291 = vmul.f32 %v2290, 1.442695
    %v2292 = vpow.pop %v2291
    %v2293 = vadd.f32 %v2292, 1.0
    %v2294 = vrcp.pop %v2293
    %v2295 = vmul.f32 1.0, %v2294
    %v2296 = vxor.u32 %v2287, 2147483648
    %v2297 = vmul.f32 %v2296, 1.442695
    %v2298 = vpow.pop %v2297
    %v2299 = vadd.f32 %v2298, 1.0
    %v2300 = vrcp.pop %v2299
    %v2301 = vmul.f32 1.0, %v2300
    %v2302 = vtanh.pop %v2288
    %v2303 = vxor.u32 %v2289, 2147483648
    %v2304 = vmul.f32 %v2303, 1.442695
    %v2305 = vpow.pop %v2304
    %v2306 = vadd.f32 %v2305, 1.0
    %v2307 = vrcp.pop %v2306
    %v2308 = vmul.f32 1.0, %v2307
    %v2309 = vmul.f32 %v2301, %v2068
    %v2310 = vmul.f32 %v2295, %v2302
    %v2311 = vadd.f32 %v2309, %v2310
    %v2312 = vtanh.pop %v2311
    %v2313 = vmul.f32 %v2308, %v2312
    %s2314 = scalar_lea.vmem [#allocation3], 56
    %2315 = vst [vmem:[%s2314] sm:$0xff] %v2313
    %v2316 = vld [vmem:[#allocation3] sm:$0xff]
    %v2317 = vld [vmem:[#allocation3 + $0x8] sm:$0xff]
    %v2318 = vld [vmem:[#allocation3 + $0x10] sm:$0xff]
    %v2319 = vld [vmem:[#allocation3 + $0x18] sm:$0xff]
    %v2320 = vld [vmem:[#allocation3 + $0x20] sm:$0xff]
    %v2321 = vld [vmem:[#allocation3 + $0x28] sm:$0xff]
    %v2322 = vld [vmem:[#allocation3 + $0x30] sm:$0xff]
    %v2323 = vld [vmem:[#allocation3 + $0x38] sm:$0xff]
    %v2324 = vld [vmem:[#allocation7] sm:$0xff]
    %v2325 = vld [vmem:[#allocation7 + $0x8] sm:$0xff]
    %v2326 = vld [vmem:[#allocation7 + $0x10] sm:$0xff]
    %v2327 = vld [vmem:[#allocation7 + $0x18] sm:$0xff]
    %v2328 = vld [vmem:[#allocation7 + $0x20] sm:$0xff]
    %v2329 = vld [vmem:[#allocation7 + $0x28] sm:$0xff]
    %v2330 = vld [vmem:[#allocation7 + $0x30] sm:$0xff]
    %v2331 = vld [vmem:[#allocation7 + $0x38] sm:$0xff]
    %v2332 = vld [vmem:[#allocation7 + $0x40] sm:$0xff]
    %v2333 = vld [vmem:[#allocation7 + $0x48] sm:$0xff]
    %v2334 = vld [vmem:[#allocation7 + $0x50] sm:$0xff]
    %v2335 = vld [vmem:[#allocation7 + $0x58] sm:$0xff]
    %v2336 = vld [vmem:[#allocation7 + $0x60] sm:$0xff]
    %v2337 = vld [vmem:[#allocation7 + $0x68] sm:$0xff]
    %v2338 = vld [vmem:[#allocation7 + $0x70] sm:$0xff]
    %v2339 = vld [vmem:[#allocation7 + $0x78] sm:$0xff]
    %v2340 = vld [vmem:[%s5] sm:$0x1]
    %v2342 = vlaneseq
    %v2343 = vshrl.u32 %v2342, 7
    %v2344 = vsub.s32 0, %v2343
    %v2345 = vrot.slane %v2340, %v2344
    %2347 = vmatprep.subr.mxu0 0.0
    %2348 = vmatpush1.msra.mxu0 %v2324
    %2349 = vmatprep.subr.mxu0 0.0
    %2350 = vmatpush1.msra.mxu0 %v2325
    %2351 = vmatprep.subr.mxu0 0.0
    %2352 = vmatpush1.msra.mxu0 %v2326
    %2353 = vmatprep.subr.mxu0 0.0
    %2354 = vmatpush1.msra.mxu0 %v2327
    %2355 = vmatprep.subr.mxu0 0.0
    %2356 = vmatpush1.msra.mxu0 %v2328
    %2357 = vmatprep.subr.mxu0 0.0
    %2358 = vmatpush1.msra.mxu0 %v2329
    %2359 = vmatprep.subr.mxu0 0.0
    %2360 = vmatpush1.msra.mxu0 %v2330
    %2361 = vmatprep.subr.mxu0 0.0
    %2362 = vmatpush1.msra.mxu0 %v2331
    %2363 = vmatprep.subr.mxu0 0.0
    %2364 = vmatpush1.msra.mxu0 %v2332
    %2365 = vmatprep.subr.mxu0 0.0
    %2366 = vmatpush1.msra.mxu0 %v2333
    %2367 = vmatprep.subr.mxu0 0.0
    %2368 = vmatpush1.msra.mxu0 %v2334
    %2369 = vmatprep.subr.mxu0 0.0
    %2370 = vmatpush1.msra.mxu0 %v2335
    %2371 = vmatprep.subr.mxu0 0.0
    %2372 = vmatpush1.msra.mxu0 %v2336
    %2373 = vmatprep.subr.mxu0 0.0
    %2374 = vmatpush1.msra.mxu0 %v2337
    %2375 = vmatprep.subr.mxu0 0.0
    %2376 = vmatpush1.msra.mxu0 %v2338
    %2377 = vmatprep.subr.mxu0 0.0
    %2378 = vmatpush1.msra.mxu0 %v2339
    %2379 = vmatprep.subr.mxu0 0.0
    %2380 = vmatpush1.msra.mxu0 0.0
    %2381 = vmatprep.subr.mxu0 0.0
    %2382 = vmatpush1.msra.mxu0 0.0
    %2383 = vmatprep.subr.mxu0 0.0
    %2384 = vmatpush1.msra.mxu0 0.0
    %2385 = vmatprep.subr.mxu0 0.0
    %2386 = vmatpush1.msra.mxu0 0.0
    %2387 = vmatprep.subr.mxu0 0.0
    %2388 = vmatpush1.msra.mxu0 0.0
    %2389 = vmatprep.subr.mxu0 0.0
    %2390 = vmatpush1.msra.mxu0 0.0
    %2391 = vmatprep.subr.mxu0 0.0
    %2392 = vmatpush1.msra.mxu0 0.0
    %2393 = vmatprep.subr.mxu0 0.0
    %2394 = vmatpush1.msra.mxu0 0.0
    %2395 = vmatprep.subr.mxu0 0.0
    %2396 = vmatpush1.msra.mxu0 0.0
    %2397 = vmatprep.subr.mxu0 0.0
    %2398 = vmatpush1.msra.mxu0 0.0
    %2399 = vmatprep.subr.mxu0 0.0
    %2400 = vmatpush1.msra.mxu0 0.0
    %2401 = vmatprep.subr.mxu0 0.0
    %2402 = vmatpush1.msra.mxu0 0.0
    %2403 = vmatprep.subr.mxu0 0.0
    %2404 = vmatpush1.msra.mxu0 0.0
    %2405 = vmatprep.subr.mxu0 0.0
    %2406 = vmatpush1.msra.mxu0 0.0
    %2407 = vmatprep.subr.mxu0 0.0
    %2408 = vmatpush1.msra.mxu0 0.0
    %2409 = vmatprep.subr.mxu0 0.0
    %2410 = vmatpush1.msra.mxu0 0.0
    %2411 = vmatprep.mubr.f32.mxu0 0.0
    %2412 = vmatmul.mubr.f32.gmra.mrb[0].mxu0 %v2316
    %v2413 = vpop.f32.mrb[0].mxu0
    %v2414 = vadd.f32 %v2345, %v2413
    %v2415 = vpop.f32.mrb[0].mxu0
    %2416 = vmatprep.mubr.f32.mxu0 0.0
    %2417 = vmatmul.mubr.f32.gmra.mrb[0].mxu0 %v2317
    %v2418 = vpop.f32.mrb[0].mxu0
    %v2419 = vadd.f32 %v2345, %v2418
    %v2420 = vpop.f32.mrb[0].mxu0
    %2421 = vmatprep.mubr.f32.mxu0 0.0
    %2422 = vmatmul.mubr.f32.gmra.mrb[0].mxu0 %v2318
    %v2423 = vpop.f32.mrb[0].mxu0
    %v2424 = vadd.f32 %v2345, %v2423
    %v2425 = vpop.f32.mrb[0].mxu0
    %2426 = vmatprep.mubr.f32.mxu0 0.0
    %2427 = vmatmul.mubr.f32.gmra.mrb[0].mxu0 %v2319
    %v2428 = vpop.f32.mrb[0].mxu0
    %v2429 = vadd.f32 %v2345, %v2428
    %v2430 = vpop.f32.mrb[0].mxu0
    %2431 = vmatprep.mubr.f32.mxu0 0.0
    %2432 = vmatmul.mubr.f32.gmra.mrb[0].mxu0 %v2320
    %v2433 = vpop.f32.mrb[0].mxu0
    %v2434 = vadd.f32 %v2345, %v2433
    %v2435 = vpop.f32.mrb[0].mxu0
    %2436 = vmatprep.mubr.f32.mxu0 0.0
    %2437 = vmatmul.mubr.f32.gmra.mrb[0].mxu0 %v2321
    %v2438 = vpop.f32.mrb[0].mxu0
    %v2439 = vadd.f32 %v2345, %v2438
    %v2440 = vpop.f32.mrb[0].mxu0
    %2441 = vmatprep.mubr.f32.mxu0 0.0
    %2442 = vmatmul.mubr.f32.gmra.mrb[0].mxu0 %v2322
    %v2443 = vpop.f32.mrb[0].mxu0
    %v2444 = vadd.f32 %v2345, %v2443
    %v2445 = vpop.f32.mrb[0].mxu0
    %2446 = vmatprep.mubr.f32.mxu0 0.0
    %2447 = vmatmul.mubr.f32.gmra.mrb[0].mxu0 %v2323
    %v2448 = vpop.f32.mrb[0].mxu0
    %v2449 = vadd.f32 %v2345, %v2448
    %v2450 = vpop.f32.mrb[0].mxu0
    %2451 = vdwg.mxu0
    %2452 = vst [vmem:[#allocation9] sm:$0xff] %v2414
    %2453 = vst [vmem:[#allocation9 + $0x8] sm:$0xff] %v2419
    %2454 = vst [vmem:[#allocation9 + $0x10] sm:$0xff] %v2424
    %2455 = vst [vmem:[#allocation9 + $0x18] sm:$0xff] %v2429
    %2456 = vst [vmem:[#allocation9 + $0x20] sm:$0xff] %v2434
    %2457 = vst [vmem:[#allocation9 + $0x28] sm:$0xff] %v2439
    %2458 = vst [vmem:[#allocation9 + $0x30] sm:$0xff] %v2444
    %2459 = vst [vmem:[#allocation9 + $0x38] sm:$0xff] %v2449
    // Predicated region
    $region34: #{tpu_custom_call.1} parent=1 // pred_check
      _
    $region35: #{tpu_custom_call.1} parent=1 // pred_check_branch
      %2461 = sbr.rel (0) target = $region37
    $region36: #{tpu_custom_call.1} parent=1 // pred_region
      %s2463 = ssub.s32 1024, 1024
      %2464 = vsyncadd [#allocation6], %s2463
      %s2465 = sshll.u32 [#allocation9], 4
      %s2466 = int_to_ptr.vmem [resolvable:$true] %s2465
      %2471 = dma.vmem_to_hbm [thread:$0]  %s2466, 1024, %s6, [#allocation6], 128, 128, 8
    $region37: #{tpu_custom_call.1} parent=1 // pred_fallthru
      _
    // Predicated region
    $region38: #{tpu_custom_call.1} parent=1 // pred_check
      _
    $region39: #{tpu_custom_call.1} parent=1 // pred_check_branch
      %2473 = sbr.rel (0) target = $region41
    $region40: #{tpu_custom_call.1} parent=1 // pred_region
      %2474 = dma.done [#allocation6], 1024
    $region41: #{tpu_custom_call.1} parent=1 // pred_fallthru
      _
    %2475 = vsyncpa [#allocation5], 1
    %2476 = vsyncpa [#allocation8], 1
    %2477 = vsyncpa [#allocation6], 1

</llo_original>
